<compile_context>
chip_gen: v7x
topology: tpu7x:2x2x1
jax: 0.10.0
libtpu: 0.0.40
codegen_flags: <defaults>
</compile_context>

<pallas_src>
import jax
import jax.numpy as jnp
from jax import lax
from jax.experimental import pallas as pl
from jax.experimental.pallas import tpu as pltpu

import math


POSE_DIM = 7


# ----------------------------------------------------------------------------
# Pallas kernel
# ----------------------------------------------------------------------------
def refine_gru_kernel(pose_ref, imu_ref, rx_ref, rh0_ref, rh1_ref,
                      wih1_ref, w1_ref, b1_ref, w2_ref, b2_ref,
                      out_ref, xbuf, h1buf):
    """pose_ref: (B, T, 7), imu_ref: (B, T-1, d_model)  — raw module inputs.

    rx : (7+d+1, 8H)  hoisted x-projection + ALL gate biases (via ones column)
         columns: [rz0 | n0_x | n0_h(bias) | rz1_h(bias) | n1_h(bias) | b_ih1_n]
    rh0: (H, 8H)  layer-0 hidden weights placed in the same column layout
    rh1: (H, 8H)  layer-1 hidden weights placed in the same column layout
    wih1: (H, 3H) layer-1 input weights (r|z|n), no bias (folded into rx)
    """
    B, T, PD = pose_ref.shape
    _, M, DM = imu_ref.shape
    H = rh0_ref.shape[0]

    # --------- in-kernel input assembly (time-major rows, review #1) --------
    # row (t*B + b) = [pose[b, t, :] | imu[b, t-1, :] (zeros at t == 0) | 1.0]
    xbuf[...] = jnp.zeros(xbuf.shape, jnp.float32)
    xbuf[:, PD + DM:] = jnp.ones((T * B, 1), jnp.float32)
    for b in range(B):                              # B, T static -> unrolled
        pose_b = pose_ref[b]                        # (T, PD)  leading-axis load
        imu_b = imu_ref[b]                          # (M, DM)
        for t in range(T):
            row = t * B + b
            xbuf[row:row + 1, 0:PD] = pose_b[t:t + 1, :]
            if t >= 1:
                xbuf[row:row + 1, PD:PD + DM] = imu_b[t - 1:t, :]

    # --------- hoisted x-projection: one matmul, biases ride the ones column
    xg = jnp.dot(xbuf[...], rx_ref[...],
                 preferred_element_type=jnp.float32)            # (T*B, 8H)

    rh0 = rh0_ref[...]
    rh1 = rh1_ref[...]
    wih1 = wih1_ref[...]

    h0 = jnp.zeros((B, H), jnp.float32)
    h1 = jnp.zeros((B, H), jnp.float32)

    # --------- fully unrolled recurrence (T static & tiny) ------------------
    # Per step: 3 tiny h-dependent MXU pushes + 2 fused-gate sigmoid calls +
    # 2 tanh calls sit on the serial critical path; everything else is folded.
    for t in range(T):
        g = (xg[t * B:(t + 1) * B, :]
             + jnp.dot(h0, rh0, preferred_element_type=jnp.float32)
             + jnp.dot(h1, rh1, preferred_element_type=jnp.float32))

        # layer 0:  r,z fused in one sigmoid; b_hh0_n already inside g[:,3H:4H]
        rz0 = jax.nn.sigmoid(g[:, 0:2 * H])
        n0 = jnp.tanh(g[:, 2 * H:3 * H] + rz0[:, 0:H] * g[:, 3 * H:4 * H])
        h0 = n0 + rz0[:, H:2 * H] * (h0 - n0)       # == (1-z)*n + z*h_prev

        # layer 1
        gi1 = jnp.dot(h0, wih1, preferred_element_type=jnp.float32)
        rz1 = jax.nn.sigmoid(gi1[:, 0:2 * H] + g[:, 4 * H:6 * H])
        n1 = jnp.tanh(gi1[:, 2 * H:3 * H] + g[:, 7 * H:8 * H]
                      + rz1[:, 0:H] * g[:, 6 * H:7 * H])
        h1 = n1 + rz1[:, H:2 * H] * (h1 - n1)

        h1buf[t * B:(t + 1) * B, :] = h1            # off critical path

    # --------- hoisted MLP head (fc1 + ReLU + fc2), single bulk store -------
    h1_all = h1buf[...]                                          # (T*B, H)
    hid = jnp.maximum(
        jnp.dot(h1_all, w1_ref[...], preferred_element_type=jnp.float32)
        + b1_ref[...], 0.0)
    out_ref[...] = (jnp.dot(hid, w2_ref[...], preferred_element_type=jnp.float32)
                    + b2_ref[...]).astype(out_ref.dtype)


# ----------------------------------------------------------------------------
# Parameters (raw PyTorch-style) and kernel-layout preparation
# ----------------------------------------------------------------------------
def init_params(key, d_model):
    """Raw PyTorch-style parameters (gate-stacked r,z,n; already x@W layout)."""
    H = 2 * d_model
    din0 = d_model + POSE_DIM
    kg = 1.0 / math.sqrt(H)
    k1 = 1.0 / math.sqrt(H)
    k2 = 1.0 / math.sqrt(d_model)
    ks = jax.random.split(key, 12)

    def u(k_, shape, bound):
        return jax.random.uniform(k_, shape, jnp.float32, -bound, bound)

    return dict(
        wih0=u(ks[0], (3, din0, H), kg),
        whh0=u(ks[1], (3, H, H), kg),
        bih0=u(ks[2], (3, H), kg),
        bhh0=u(ks[3], (3, H), kg),
        wih1=u(ks[4], (3, H, H), kg),
        whh1=u(ks[5], (3, H, H), kg),
        bih1=u(ks[6], (3, H), kg),
        bhh1=u(ks[7], (3, H), kg),
        w1=u(ks[8], (H, d_model), k1),
        b1=u(ks[9], (1, d_model), k1),
        w2=u(ks[10], (d_model, POSE_DIM), k2),
        b2=u(ks[11], (1, POSE_DIM), k2),
    )


def prepare_kernel_params(p):
    """Pack gate weights/biases into the fused column layout used by the kernel."""
    wih0, whh0 = p["wih0"], p["whh0"]
    wih1, whh1 = p["wih1"], p["whh1"]
    bih0, bhh0 = p["bih0"], p["bhh0"]
    bih1, bhh1 = p["bih1"], p["bhh1"]

    H = whh0.shape[-1]
    PD = POSE_DIM
    DM = wih0.shape[1] - PD
    W = 8 * H                     # fused column width (128 for d_model=8)

    c_rz0, c_xn0, c_hn0 = 0, 2 * H, 3 * H
    c_rz1, c_hn1, c_bn1 = 4 * H, 6 * H, 7 * H
    ones_row = PD + DM

    rx = jnp.zeros((PD + DM + 1, W), jnp.float32)
    rx = rx.at[0:PD, c_rz0:c_rz0 + 2 * H].set(
        jnp.concatenate([wih0[0][:PD], wih0[1][:PD]], axis=1))
    rx = rx.at[0:PD, c_xn0:c_xn0 + H].set(wih0[2][:PD])
    rx = rx.at[PD:PD + DM, c_rz0:c_rz0 + 2 * H].set(
        jnp.concatenate([wih0[0][PD:], wih0[1][PD:]], axis=1))
    rx = rx.at[PD:PD + DM, c_xn0:c_xn0 + H].set(wih0[2][PD:])
    # ones row carries every gate bias:
    rx = rx.at[ones_row, c_rz0:c_rz0 + 2 * H].set(
        jnp.concatenate([bih0[0] + bhh0[0], bih0[1] + bhh0[1]]))
    rx = rx.at[ones_row, c_xn0:c_xn0 + H].set(bih0[2])
    rx = rx.at[ones_row, c_hn0:c_hn0 + H].set(bhh0[2])
    rx = rx.at[ones_row, c_rz1:c_rz1 + 2 * H].set(
        jnp.concatenate([bih1[0] + bhh1[0], bih1[1] + bhh1[1]]))
    rx = rx.at[ones_row, c_hn1:c_hn1 + H].set(bhh1[2])
    rx = rx.at[ones_row, c_bn1:c_bn1 + H].set(bih1[2])

    rh0 = jnp.zeros((H, W), jnp.float32)
    rh0 = rh0.at[:, c_rz0:c_rz0 + 2 * H].set(
        jnp.concatenate([whh0[0], whh0[1]], axis=1))
    rh0 = rh0.at[:, c_hn0:c_hn0 + H].set(whh0[2])

    rh1 = jnp.zeros((H, W), jnp.float32)
    rh1 = rh1.at[:, c_rz1:c_rz1 + 2 * H].set(
        jnp.concatenate([whh1[0], whh1[1]], axis=1))
    rh1 = rh1.at[:, c_hn1:c_hn1 + H].set(whh1[2])

    wih1_f = jnp.concatenate([wih1[0], wih1[1], wih1[2]], axis=1)   # (H, 3H)

    return dict(rx=rx, rh0=rh0, rh1=rh1, wih1=wih1_f,
                w1=p["w1"], b1=p["b1"], w2=p["w2"], b2=p["b2"])


# ----------------------------------------------------------------------------
# Wrapper
# ----------------------------------------------------------------------------
@jax.jit
def refine_gru_forward(pose_encodings, imu_encodings, kparams):
    if pose_encodings.ndim == 2:
        pose_encodings = pose_encodings[None]
    pose = pose_encodings.astype(jnp.float32)        # no-op when already f32
    imu = imu_encodings.astype(jnp.float32)

    B, T, PD = pose.shape
    _, M, DM = imu.shape
    assert T == M + 1 and PD == POSE_DIM
    H = kparams["rh0"].shape[0]
    OUT = kparams["w2"].shape[1]

    vmem = pl.BlockSpec(memory_space=pltpu.MemorySpace.VMEM)

    out_flat = pl.pallas_call(
        refine_gru_kernel,
        out_shape=jax.ShapeDtypeStruct((T * B, OUT), jnp.float32),
        in_specs=[vmem] * 10,
        out_specs=vmem,
        scratch_shapes=[
            pltpu.VMEM((T * B, PD + DM + 1), jnp.float32),   # x assembly buffer
            pltpu.VMEM((T * B, H), jnp.float32),             # per-step h1 for head
        ],
    )(pose, imu,
      kparams["rx"], kparams["rh0"], kparams["rh1"], kparams["wih1"],
      kparams["w1"], kparams["b1"], kparams["w2"], kparams["b2"])

    out = jnp.transpose(out_flat.reshape(T, B, OUT), (1, 0, 2))   # (B, T, 7)
    return jnp.squeeze(out)                                       # matches torch .squeeze()


# ----------------------------------------------------------------------------
# Pure-JAX reference (raw PyTorch-style params) for correctness checking
# ----------------------------------------------------------------------------
def _build_combined(pose_encodings, imu_encodings):
    if pose_encodings.ndim == 2:
        pose_encodings = pose_encodings[None]
    B, M, D = imu_encodings.shape
    zero_pad = jnp.zeros((B, 1, D), pose_encodings.dtype)
    padded_imu = jnp.concatenate([zero_pad, imu_encodings], axis=-2)
    combined = jnp.concatenate([pose_encodings, padded_imu], axis=-1)
    return combined.astype(jnp.float32)


def _gru_cell_ref(x, h, w_ih, w_hh, b_ih, b_hh):
    gi_r = jnp.dot(x, w_ih[0]) + b_ih[0]
    gi_z = jnp.dot(x, w_ih[1]) + b_ih[1]
    gi_n = jnp.dot(x, w_ih[2]) + b_ih[2]
    gh_r = jnp.dot(h, w_hh[0]) + b_hh[0]
    gh_z = jnp.dot(h, w_hh[1]) + b_hh[1]
    gh_n = jnp.dot(h, w_hh[2]) + b_hh[2]
    r = jax.nn.sigmoid(gi_r + gh_r)
    z = jax.nn.sigmoid(gi_z + gh_z)
    n = jnp.tanh(gi_n + r * gh_n)
    return (1.0 - z) * n + z * h


def refine_gru_reference(pose_encodings, imu_encodings, params):
    combined = _build_combined(pose_encodings, imu_encodings)    # (B, T, Din)
    x = jnp.transpose(combined, (1, 0, 2))                       # (T, B, Din)
    B = x.shape[1]
    H = params["whh0"].shape[-1]

    def run_layer(x_seq, w_ih, w_hh, b_ih, b_hh):
        def cell(h, x_t):
            h_new = _gru_cell_ref(x_t, h, w_ih, w_hh, b_ih, b_hh)
            return h_new, h_new
        h0 = jnp.zeros((B, H), jnp.float32)
        _, ys = lax.scan(cell, h0, x_seq)
        return ys

    y0 = run_layer(x, params["wih0"], params["whh0"], params["bih0"], params["bhh0"])
    y1 = run_layer(y0, params["wih1"], params["whh1"], params["bih1"], params["bhh1"])
    hid = jnp.maximum(jnp.dot(y1, params["w1"]) + params["b1"], 0.0)
    o = jnp.dot(hid, params["w2"]) + params["b2"]                # (T, B, 7)
    return jnp.squeeze(jnp.transpose(o, (1, 0, 2)))


if __name__ == "__main__":
    d_model = 8
    B, M = 2, 8            # pose: (B, M+1, 7), imu: (B, M, d_model), T = M+1 = 9

    key = jax.random.PRNGKey(0)
    k_pose, k_imu, k_param = jax.random.split(key, 3)
    pose_encodings = jax.random.normal(k_pose, (B, M + 1, POSE_DIM), jnp.float32)
    imu_encodings = jax.random.normal(k_imu, (B, M, d_model), jnp.float32)

    raw_params = init_params(k_param, d_model)
    kparams = prepare_kernel_params(raw_params)

    out = jax.block_until_ready(
        refine_gru_forward(pose_encodings, imu_encodings, kparams))
    ref = jax.block_until_ready(
        refine_gru_reference(pose_encodings, imu_encodings, raw_params))

    assert out.shape == (B, M + 1, POSE_DIM), out.shape
    assert jnp.allclose(out, ref, atol=2e-3, rtol=2e-3), (
        float(jnp.max(jnp.abs(out - ref))))

    print("KERNEL_OK")
</pallas_src>

<mosaic_0001>
module attributes {stable_mosaic.version = 11 : i64} {
  func.func @refine_gru_kernel(%arg0: memref<2x9x7xf32, #tpu.memory_space<vmem>>, %arg1: memref<2x8x8xf32, #tpu.memory_space<vmem>>, %arg2: memref<16x128xf32, #tpu.memory_space<vmem>>, %arg3: memref<16x128xf32, #tpu.memory_space<vmem>>, %arg4: memref<16x128xf32, #tpu.memory_space<vmem>>, %arg5: memref<16x48xf32, #tpu.memory_space<vmem>>, %arg6: memref<16x8xf32, #tpu.memory_space<vmem>>, %arg7: memref<1x8xf32, #tpu.memory_space<vmem>>, %arg8: memref<8x7xf32, #tpu.memory_space<vmem>>, %arg9: memref<1x7xf32, #tpu.memory_space<vmem>>, %arg10: memref<18x7xf32, #tpu.memory_space<vmem>>, %arg11: memref<18x16xf32, #tpu.memory_space<vmem>>, %arg12: memref<18x16xf32, #tpu.memory_space<vmem>>) attributes {dimension_semantics = [], scalar_prefetch = 0 : i64, scratch_operands = 2 : i64, tpu.core_type = #tpu.core_type<tc>} {
    %cst = arith.constant 0.000000e+00 : f32
    %0 = vector.broadcast %cst : f32 to vector<18x16xf32>
    %c0 = arith.constant 0 : index
    %c0_0 = arith.constant 0 : index
    %1 = vector.load %arg11[%c0, %c0_0] : memref<18x16xf32, #tpu.memory_space<vmem>>, vector<18x16xf32>
    tpu.vector_store %arg11[%c0, %c0_0], %0 {strides = array<i32>} : memref<18x16xf32, #tpu.memory_space<vmem>>, vector<18x16xf32>,
    %cst_1 = arith.constant 1.000000e+00 : f32
    %2 = vector.broadcast %cst_1 : f32 to vector<18x1xf32>
    %c0_2 = arith.constant 0 : index
    %c15 = arith.constant 15 : index
    %3 = vector.load %arg11[%c0_2, %c15] : memref<18x16xf32, #tpu.memory_space<vmem>>, vector<18x1xf32>
    tpu.vector_store %arg11[%c0_2, %c15], %2 {strides = array<i32>} : memref<18x16xf32, #tpu.memory_space<vmem>>, vector<18x1xf32>,
    %c0_3 = arith.constant 0 : index
    %c0_4 = arith.constant 0 : index
    %c0_5 = arith.constant 0 : index
    %4 = vector.load %arg0[%c0_3, %c0_4, %c0_5] : memref<2x9x7xf32, #tpu.memory_space<vmem>>, vector<1x9x7xf32>
    %5 = vector.shape_cast %4 : vector<1x9x7xf32> to vector<9x7xf32>
    %c0_6 = arith.constant 0 : index
    %c0_7 = arith.constant 0 : index
    %c0_8 = arith.constant 0 : index
    %6 = vector.load %arg1[%c0_6, %c0_7, %c0_8] : memref<2x8x8xf32, #tpu.memory_space<vmem>>, vector<1x8x8xf32>
    %7 = vector.shape_cast %6 : vector<1x8x8xf32> to vector<8x8xf32>
    %8 = vector.extract_strided_slice %5 {offsets = [0, 0], sizes = [1, 7], strides = [1, 1]} : vector<9x7xf32> to vector<1x7xf32>
    %c0_9 = arith.constant 0 : index
    %c0_10 = arith.constant 0 : index
    %9 = vector.load %arg11[%c0_9, %c0_10] : memref<18x16xf32, #tpu.memory_space<vmem>>, vector<1x7xf32>
    tpu.vector_store %arg11[%c0_9, %c0_10], %8 {strides = array<i32>} : memref<18x16xf32, #tpu.memory_space<vmem>>, vector<1x7xf32>,
    %10 = vector.extract_strided_slice %5 {offsets = [1, 0], sizes = [1, 7], strides = [1, 1]} : vector<9x7xf32> to vector<1x7xf32>
    %c2 = arith.constant 2 : index
    %c0_11 = arith.constant 0 : index
    %11 = vector.load %arg11[%c2, %c0_11] : memref<18x16xf32, #tpu.memory_space<vmem>>, vector<1x7xf32>
    tpu.vector_store %arg11[%c2, %c0_11], %10 {strides = array<i32>} : memref<18x16xf32, #tpu.memory_space<vmem>>, vector<1x7xf32>,
    %12 = vector.extract_strided_slice %7 {offsets = [0, 0], sizes = [1, 8], strides = [1, 1]} : vector<8x8xf32> to vector<1x8xf32>
    %c2_12 = arith.constant 2 : index
    %c7 = arith.constant 7 : index
    %13 = vector.load %arg11[%c2_12, %c7] : memref<18x16xf32, #tpu.memory_space<vmem>>, vector<1x8xf32>
    tpu.vector_store %arg11[%c2_12, %c7], %12 {strides = array<i32>} : memref<18x16xf32, #tpu.memory_space<vmem>>, vector<1x8xf32>,
    %14 = vector.extract_strided_slice %5 {offsets = [2, 0], sizes = [1, 7], strides = [1, 1]} : vector<9x7xf32> to vector<1x7xf32>
    %c4 = arith.constant 4 : index
    %c0_13 = arith.constant 0 : index
    %15 = vector.load %arg11[%c4, %c0_13] : memref<18x16xf32, #tpu.memory_space<vmem>>, vector<1x7xf32>
    tpu.vector_store %arg11[%c4, %c0_13], %14 {strides = array<i32>} : memref<18x16xf32, #tpu.memory_space<vmem>>, vector<1x7xf32>,
    %16 = vector.extract_strided_slice %7 {offsets = [1, 0], sizes = [1, 8], strides = [1, 1]} : vector<8x8xf32> to vector<1x8xf32>
    %c4_14 = arith.constant 4 : index
    %c7_15 = arith.constant 7 : index
    %17 = vector.load %arg11[%c4_14, %c7_15] : memref<18x16xf32, #tpu.memory_space<vmem>>, vector<1x8xf32>
    tpu.vector_store %arg11[%c4_14, %c7_15], %16 {strides = array<i32>} : memref<18x16xf32, #tpu.memory_space<vmem>>, vector<1x8xf32>,
    %18 = vector.extract_strided_slice %5 {offsets = [3, 0], sizes = [1, 7], strides = [1, 1]} : vector<9x7xf32> to vector<1x7xf32>
    %c6 = arith.constant 6 : index
    %c0_16 = arith.constant 0 : index
    %19 = vector.load %arg11[%c6, %c0_16] : memref<18x16xf32, #tpu.memory_space<vmem>>, vector<1x7xf32>
    tpu.vector_store %arg11[%c6, %c0_16], %18 {strides = array<i32>} : memref<18x16xf32, #tpu.memory_space<vmem>>, vector<1x7xf32>,
    %20 = vector.extract_strided_slice %7 {offsets = [2, 0], sizes = [1, 8], strides = [1, 1]} : vector<8x8xf32> to vector<1x8xf32>
    %c6_17 = arith.constant 6 : index
    %c7_18 = arith.constant 7 : index
    %21 = vector.load %arg11[%c6_17, %c7_18] : memref<18x16xf32, #tpu.memory_space<vmem>>, vector<1x8xf32>
    tpu.vector_store %arg11[%c6_17, %c7_18], %20 {strides = array<i32>} : memref<18x16xf32, #tpu.memory_space<vmem>>, vector<1x8xf32>,
    %22 = vector.extract_strided_slice %5 {offsets = [4, 0], sizes = [1, 7], strides = [1, 1]} : vector<9x7xf32> to vector<1x7xf32>
    %c8 = arith.constant 8 : index
    %c0_19 = arith.constant 0 : index
    %23 = vector.load %arg11[%c8, %c0_19] : memref<18x16xf32, #tpu.memory_space<vmem>>, vector<1x7xf32>
    tpu.vector_store %arg11[%c8, %c0_19], %22 {strides = array<i32>} : memref<18x16xf32, #tpu.memory_space<vmem>>, vector<1x7xf32>,
    %24 = vector.extract_strided_slice %7 {offsets = [3, 0], sizes = [1, 8], strides = [1, 1]} : vector<8x8xf32> to vector<1x8xf32>
    %c8_20 = arith.constant 8 : index
    %c7_21 = arith.constant 7 : index
    %25 = vector.load %arg11[%c8_20, %c7_21] : memref<18x16xf32, #tpu.memory_space<vmem>>, vector<1x8xf32>
    tpu.vector_store %arg11[%c8_20, %c7_21], %24 {strides = array<i32>} : memref<18x16xf32, #tpu.memory_space<vmem>>, vector<1x8xf32>,
    %26 = vector.extract_strided_slice %5 {offsets = [5, 0], sizes = [1, 7], strides = [1, 1]} : vector<9x7xf32> to vector<1x7xf32>
    %c10 = arith.constant 10 : index
    %c0_22 = arith.constant 0 : index
    %27 = vector.load %arg11[%c10, %c0_22] : memref<18x16xf32, #tpu.memory_space<vmem>>, vector<1x7xf32>
    tpu.vector_store %arg11[%c10, %c0_22], %26 {strides = array<i32>} : memref<18x16xf32, #tpu.memory_space<vmem>>, vector<1x7xf32>,
    %28 = vector.extract_strided_slice %7 {offsets = [4, 0], sizes = [1, 8], strides = [1, 1]} : vector<8x8xf32> to vector<1x8xf32>
    %c10_23 = arith.constant 10 : index
    %c7_24 = arith.constant 7 : index
    %29 = vector.load %arg11[%c10_23, %c7_24] : memref<18x16xf32, #tpu.memory_space<vmem>>, vector<1x8xf32>
    tpu.vector_store %arg11[%c10_23, %c7_24], %28 {strides = array<i32>} : memref<18x16xf32, #tpu.memory_space<vmem>>, vector<1x8xf32>,
    %30 = vector.extract_strided_slice %5 {offsets = [6, 0], sizes = [1, 7], strides = [1, 1]} : vector<9x7xf32> to vector<1x7xf32>
    %c12 = arith.constant 12 : index
    %c0_25 = arith.constant 0 : index
    %31 = vector.load %arg11[%c12, %c0_25] : memref<18x16xf32, #tpu.memory_space<vmem>>, vector<1x7xf32>
    tpu.vector_store %arg11[%c12, %c0_25], %30 {strides = array<i32>} : memref<18x16xf32, #tpu.memory_space<vmem>>, vector<1x7xf32>,
    %32 = vector.extract_strided_slice %7 {offsets = [5, 0], sizes = [1, 8], strides = [1, 1]} : vector<8x8xf32> to vector<1x8xf32>
    %c12_26 = arith.constant 12 : index
    %c7_27 = arith.constant 7 : index
    %33 = vector.load %arg11[%c12_26, %c7_27] : memref<18x16xf32, #tpu.memory_space<vmem>>, vector<1x8xf32>
    tpu.vector_store %arg11[%c12_26, %c7_27], %32 {strides = array<i32>} : memref<18x16xf32, #tpu.memory_space<vmem>>, vector<1x8xf32>,
    %34 = vector.extract_strided_slice %5 {offsets = [7, 0], sizes = [1, 7], strides = [1, 1]} : vector<9x7xf32> to vector<1x7xf32>
    %c14 = arith.constant 14 : index
    %c0_28 = arith.constant 0 : index
    %35 = vector.load %arg11[%c14, %c0_28] : memref<18x16xf32, #tpu.memory_space<vmem>>, vector<1x7xf32>
    tpu.vector_store %arg11[%c14, %c0_28], %34 {strides = array<i32>} : memref<18x16xf32, #tpu.memory_space<vmem>>, vector<1x7xf32>,
    %36 = vector.extract_strided_slice %7 {offsets = [6, 0], sizes = [1, 8], strides = [1, 1]} : vector<8x8xf32> to vector<1x8xf32>
    %c14_29 = arith.constant 14 : index
    %c7_30 = arith.constant 7 : index
    %37 = vector.load %arg11[%c14_29, %c7_30] : memref<18x16xf32, #tpu.memory_space<vmem>>, vector<1x8xf32>
    tpu.vector_store %arg11[%c14_29, %c7_30], %36 {strides = array<i32>} : memref<18x16xf32, #tpu.memory_space<vmem>>, vector<1x8xf32>,
    %38 = vector.extract_strided_slice %5 {offsets = [8, 0], sizes = [1, 7], strides = [1, 1]} : vector<9x7xf32> to vector<1x7xf32>
    %c16 = arith.constant 16 : index
    %c0_31 = arith.constant 0 : index
    %39 = vector.load %arg11[%c16, %c0_31] : memref<18x16xf32, #tpu.memory_space<vmem>>, vector<1x7xf32>
    tpu.vector_store %arg11[%c16, %c0_31], %38 {strides = array<i32>} : memref<18x16xf32, #tpu.memory_space<vmem>>, vector<1x7xf32>,
    %40 = vector.extract_strided_slice %7 {offsets = [7, 0], sizes = [1, 8], strides = [1, 1]} : vector<8x8xf32> to vector<1x8xf32>
    %c16_32 = arith.constant 16 : index
    %c7_33 = arith.constant 7 : index
    %41 = vector.load %arg11[%c16_32, %c7_33] : memref<18x16xf32, #tpu.memory_space<vmem>>, vector<1x8xf32>
    tpu.vector_store %arg11[%c16_32, %c7_33], %40 {strides = array<i32>} : memref<18x16xf32, #tpu.memory_space<vmem>>, vector<1x8xf32>,
    %c1 = arith.constant 1 : index
    %c0_34 = arith.constant 0 : index
    %c0_35 = arith.constant 0 : index
    %42 = vector.load %arg0[%c1, %c0_34, %c0_35] : memref<2x9x7xf32, #tpu.memory_space<vmem>>, vector<1x9x7xf32>
    %43 = vector.shape_cast %42 : vector<1x9x7xf32> to vector<9x7xf32>
    %c1_36 = arith.constant 1 : index
    %c0_37 = arith.constant 0 : index
    %c0_38 = arith.constant 0 : index
    %44 = vector.load %arg1[%c1_36, %c0_37, %c0_38] : memref<2x8x8xf32, #tpu.memory_space<vmem>>, vector<1x8x8xf32>
    %45 = vector.shape_cast %44 : vector<1x8x8xf32> to vector<8x8xf32>
    %46 = vector.extract_strided_slice %43 {offsets = [0, 0], sizes = [1, 7], strides = [1, 1]} : vector<9x7xf32> to vector<1x7xf32>
    %c1_39 = arith.constant 1 : index
    %c0_40 = arith.constant 0 : index
    %47 = vector.load %arg11[%c1_39, %c0_40] : memref<18x16xf32, #tpu.memory_space<vmem>>, vector<1x7xf32>
    tpu.vector_store %arg11[%c1_39, %c0_40], %46 {strides = array<i32>} : memref<18x16xf32, #tpu.memory_space<vmem>>, vector<1x7xf32>,
    %48 = vector.extract_strided_slice %43 {offsets = [1, 0], sizes = [1, 7], strides = [1, 1]} : vector<9x7xf32> to vector<1x7xf32>
    %c3 = arith.constant 3 : index
    %c0_41 = arith.constant 0 : index
    %49 = vector.load %arg11[%c3, %c0_41] : memref<18x16xf32, #tpu.memory_space<vmem>>, vector<1x7xf32>
    tpu.vector_store %arg11[%c3, %c0_41], %48 {strides = array<i32>} : memref<18x16xf32, #tpu.memory_space<vmem>>, vector<1x7xf32>,
    %50 = vector.extract_strided_slice %45 {offsets = [0, 0], sizes = [1, 8], strides = [1, 1]} : vector<8x8xf32> to vector<1x8xf32>
    %c3_42 = arith.constant 3 : index
    %c7_43 = arith.constant 7 : index
    %51 = vector.load %arg11[%c3_42, %c7_43] : memref<18x16xf32, #tpu.memory_space<vmem>>, vector<1x8xf32>
    tpu.vector_store %arg11[%c3_42, %c7_43], %50 {strides = array<i32>} : memref<18x16xf32, #tpu.memory_space<vmem>>, vector<1x8xf32>,
    %52 = vector.extract_strided_slice %43 {offsets = [2, 0], sizes = [1, 7], strides = [1, 1]} : vector<9x7xf32> to vector<1x7xf32>
    %c5 = arith.constant 5 : index
    %c0_44 = arith.constant 0 : index
    %53 = vector.load %arg11[%c5, %c0_44] : memref<18x16xf32, #tpu.memory_space<vmem>>, vector<1x7xf32>
    tpu.vector_store %arg11[%c5, %c0_44], %52 {strides = array<i32>} : memref<18x16xf32, #tpu.memory_space<vmem>>, vector<1x7xf32>,
    %54 = vector.extract_strided_slice %45 {offsets = [1, 0], sizes = [1, 8], strides = [1, 1]} : vector<8x8xf32> to vector<1x8xf32>
    %c5_45 = arith.constant 5 : index
    %c7_46 = arith.constant 7 : index
    %55 = vector.load %arg11[%c5_45, %c7_46] : memref<18x16xf32, #tpu.memory_space<vmem>>, vector<1x8xf32>
    tpu.vector_store %arg11[%c5_45, %c7_46], %54 {strides = array<i32>} : memref<18x16xf32, #tpu.memory_space<vmem>>, vector<1x8xf32>,
    %56 = vector.extract_strided_slice %43 {offsets = [3, 0], sizes = [1, 7], strides = [1, 1]} : vector<9x7xf32> to vector<1x7xf32>
    %c7_47 = arith.constant 7 : index
    %c0_48 = arith.constant 0 : index
    %57 = vector.load %arg11[%c7_47, %c0_48] : memref<18x16xf32, #tpu.memory_space<vmem>>, vector<1x7xf32>
    tpu.vector_store %arg11[%c7_47, %c0_48], %56 {strides = array<i32>} : memref<18x16xf32, #tpu.memory_space<vmem>>, vector<1x7xf32>,
    %58 = vector.extract_strided_slice %45 {offsets = [2, 0], sizes = [1, 8], strides = [1, 1]} : vector<8x8xf32> to vector<1x8xf32>
    %c7_49 = arith.constant 7 : index
    %c7_50 = arith.constant 7 : index
    %59 = vector.load %arg11[%c7_49, %c7_50] : memref<18x16xf32, #tpu.memory_space<vmem>>, vector<1x8xf32>
    tpu.vector_store %arg11[%c7_49, %c7_50], %58 {strides = array<i32>} : memref<18x16xf32, #tpu.memory_space<vmem>>, vector<1x8xf32>,
    %60 = vector.extract_strided_slice %43 {offsets = [4, 0], sizes = [1, 7], strides = [1, 1]} : vector<9x7xf32> to vector<1x7xf32>
    %c9 = arith.constant 9 : index
    %c0_51 = arith.constant 0 : index
    %61 = vector.load %arg11[%c9, %c0_51] : memref<18x16xf32, #tpu.memory_space<vmem>>, vector<1x7xf32>
    tpu.vector_store %arg11[%c9, %c0_51], %60 {strides = array<i32>} : memref<18x16xf32, #tpu.memory_space<vmem>>, vector<1x7xf32>,
    %62 = vector.extract_strided_slice %45 {offsets = [3, 0], sizes = [1, 8], strides = [1, 1]} : vector<8x8xf32> to vector<1x8xf32>
    %c9_52 = arith.constant 9 : index
    %c7_53 = arith.constant 7 : index
    %63 = vector.load %arg11[%c9_52, %c7_53] : memref<18x16xf32, #tpu.memory_space<vmem>>, vector<1x8xf32>
    tpu.vector_store %arg11[%c9_52, %c7_53], %62 {strides = array<i32>} : memref<18x16xf32, #tpu.memory_space<vmem>>, vector<1x8xf32>,
    %64 = vector.extract_strided_slice %43 {offsets = [5, 0], sizes = [1, 7], strides = [1, 1]} : vector<9x7xf32> to vector<1x7xf32>
    %c11 = arith.constant 11 : index
    %c0_54 = arith.constant 0 : index
    %65 = vector.load %arg11[%c11, %c0_54] : memref<18x16xf32, #tpu.memory_space<vmem>>, vector<1x7xf32>
    tpu.vector_store %arg11[%c11, %c0_54], %64 {strides = array<i32>} : memref<18x16xf32, #tpu.memory_space<vmem>>, vector<1x7xf32>,
    %66 = vector.extract_strided_slice %45 {offsets = [4, 0], sizes = [1, 8], strides = [1, 1]} : vector<8x8xf32> to vector<1x8xf32>
    %c11_55 = arith.constant 11 : index
    %c7_56 = arith.constant 7 : index
    %67 = vector.load %arg11[%c11_55, %c7_56] : memref<18x16xf32, #tpu.memory_space<vmem>>, vector<1x8xf32>
    tpu.vector_store %arg11[%c11_55, %c7_56], %66 {strides = array<i32>} : memref<18x16xf32, #tpu.memory_space<vmem>>, vector<1x8xf32>,
    %68 = vector.extract_strided_slice %43 {offsets = [6, 0], sizes = [1, 7], strides = [1, 1]} : vector<9x7xf32> to vector<1x7xf32>
    %c13 = arith.constant 13 : index
    %c0_57 = arith.constant 0 : index
    %69 = vector.load %arg11[%c13, %c0_57] : memref<18x16xf32, #tpu.memory_space<vmem>>, vector<1x7xf32>
    tpu.vector_store %arg11[%c13, %c0_57], %68 {strides = array<i32>} : memref<18x16xf32, #tpu.memory_space<vmem>>, vector<1x7xf32>,
    %70 = vector.extract_strided_slice %45 {offsets = [5, 0], sizes = [1, 8], strides = [1, 1]} : vector<8x8xf32> to vector<1x8xf32>
    %c13_58 = arith.constant 13 : index
    %c7_59 = arith.constant 7 : index
    %71 = vector.load %arg11[%c13_58, %c7_59] : memref<18x16xf32, #tpu.memory_space<vmem>>, vector<1x8xf32>
    tpu.vector_store %arg11[%c13_58, %c7_59], %70 {strides = array<i32>} : memref<18x16xf32, #tpu.memory_space<vmem>>, vector<1x8xf32>,
    %72 = vector.extract_strided_slice %43 {offsets = [7, 0], sizes = [1, 7], strides = [1, 1]} : vector<9x7xf32> to vector<1x7xf32>
    %c15_60 = arith.constant 15 : index
    %c0_61 = arith.constant 0 : index
    %73 = vector.load %arg11[%c15_60, %c0_61] : memref<18x16xf32, #tpu.memory_space<vmem>>, vector<1x7xf32>
    tpu.vector_store %arg11[%c15_60, %c0_61], %72 {strides = array<i32>} : memref<18x16xf32, #tpu.memory_space<vmem>>, vector<1x7xf32>,
    %74 = vector.extract_strided_slice %45 {offsets = [6, 0], sizes = [1, 8], strides = [1, 1]} : vector<8x8xf32> to vector<1x8xf32>
    %c15_62 = arith.constant 15 : index
    %c7_63 = arith.constant 7 : index
    %75 = vector.load %arg11[%c15_62, %c7_63] : memref<18x16xf32, #tpu.memory_space<vmem>>, vector<1x8xf32>
    tpu.vector_store %arg11[%c15_62, %c7_63], %74 {strides = array<i32>} : memref<18x16xf32, #tpu.memory_space<vmem>>, vector<1x8xf32>,
    %76 = vector.extract_strided_slice %43 {offsets = [8, 0], sizes = [1, 7], strides = [1, 1]} : vector<9x7xf32> to vector<1x7xf32>
    %c17 = arith.constant 17 : index
    %c0_64 = arith.constant 0 : index
    %77 = vector.load %arg11[%c17, %c0_64] : memref<18x16xf32, #tpu.memory_space<vmem>>, vector<1x7xf32>
    tpu.vector_store %arg11[%c17, %c0_64], %76 {strides = array<i32>} : memref<18x16xf32, #tpu.memory_space<vmem>>, vector<1x7xf32>,
    %78 = vector.extract_strided_slice %45 {offsets = [7, 0], sizes = [1, 8], strides = [1, 1]} : vector<8x8xf32> to vector<1x8xf32>
    %c17_65 = arith.constant 17 : index
    %c7_66 = arith.constant 7 : index
    %79 = vector.load %arg11[%c17_65, %c7_66] : memref<18x16xf32, #tpu.memory_space<vmem>>, vector<1x8xf32>
    tpu.vector_store %arg11[%c17_65, %c7_66], %78 {strides = array<i32>} : memref<18x16xf32, #tpu.memory_space<vmem>>, vector<1x8xf32>,
    %c0_67 = arith.constant 0 : index
    %c0_68 = arith.constant 0 : index
    %80 = vector.load %arg11[%c0_67, %c0_68] : memref<18x16xf32, #tpu.memory_space<vmem>>, vector<18x16xf32>
    %c0_69 = arith.constant 0 : index
    %c0_70 = arith.constant 0 : index
    %81 = vector.load %arg2[%c0_69, %c0_70] : memref<16x128xf32, #tpu.memory_space<vmem>>, vector<16x128xf32>
    %cst_71 = arith.constant dense<0.000000e+00> : vector<18x128xf32>
    %82 = tpu.matmul %80, %81, %cst_71 {dimension_numbers = #tpu.dot_dimension_numbers<[1], [0], [0], [1], [0, 0, 1, 1], [], []>} : vector<18x16xf32>, vector<16x128xf32>, vector<18x128xf32> -> vector<18x128xf32>
    %c0_72 = arith.constant 0 : index
    %c0_73 = arith.constant 0 : index
    %83 = vector.load %arg3[%c0_72, %c0_73] : memref<16x128xf32, #tpu.memory_space<vmem>>, vector<16x128xf32>
    %c0_74 = arith.constant 0 : index
    %c0_75 = arith.constant 0 : index
    %84 = vector.load %arg4[%c0_74, %c0_75] : memref<16x128xf32, #tpu.memory_space<vmem>>, vector<16x128xf32>
    %c0_76 = arith.constant 0 : index
    %c0_77 = arith.constant 0 : index
    %85 = vector.load %arg5[%c0_76, %c0_77] : memref<16x48xf32, #tpu.memory_space<vmem>>, vector<16x48xf32>
    %cst_78 = arith.constant 0.000000e+00 : f32
    %86 = vector.broadcast %cst_78 : f32 to vector<2x16xf32>
    %cst_79 = arith.constant 0.000000e+00 : f32
    %87 = vector.broadcast %cst_79 : f32 to vector<2x16xf32>
    %88 = vector.extract_strided_slice %82 {offsets = [0, 0], sizes = [2, 128], strides = [1, 1]} : vector<18x128xf32> to vector<2x128xf32>
    %cst_80 = arith.constant dense<0.000000e+00> : vector<2x128xf32>
    %89 = tpu.matmul %86, %83, %cst_80 {dimension_numbers = #tpu.dot_dimension_numbers<[1], [0], [0], [1], [0, 0, 1, 1], [], []>} : vector<2x16xf32>, vector<16x128xf32>, vector<2x128xf32> -> vector<2x128xf32>
    %90 = arith.addf %88, %89 : vector<2x128xf32>
    %cst_81 = arith.constant dense<0.000000e+00> : vector<2x128xf32>
    %91 = tpu.matmul %87, %84, %cst_81 {dimension_numbers = #tpu.dot_dimension_numbers<[1], [0], [0], [1], [0, 0, 1, 1], [], []>} : vector<2x16xf32>, vector<16x128xf32>, vector<2x128xf32> -> vector<2x128xf32>
    %92 = arith.addf %90, %91 : vector<2x128xf32>
    %93 = vector.extract_strided_slice %92 {offsets = [0, 0], sizes = [2, 32], strides = [1, 1]} : vector<2x128xf32> to vector<2x32xf32>
    %94 = arith.negf %93 : vector<2x32xf32>
    %95 = math.exp %94 : vector<2x32xf32>
    %cst_82 = arith.constant 1.000000e+00 : f32
    %96 = vector.broadcast %cst_82 : f32 to vector<2x32xf32>
    %97 = arith.addf %96, %95 : vector<2x32xf32>
    %98 = arith.divf %96, %97 : vector<2x32xf32>
    %99 = vector.extract_strided_slice %92 {offsets = [0, 32], sizes = [2, 16], strides = [1, 1]} : vector<2x128xf32> to vector<2x16xf32>
    %100 = vector.extract_strided_slice %98 {offsets = [0, 0], sizes = [2, 16], strides = [1, 1]} : vector<2x32xf32> to vector<2x16xf32>
    %101 = vector.extract_strided_slice %92 {offsets = [0, 48], sizes = [2, 16], strides = [1, 1]} : vector<2x128xf32> to vector<2x16xf32>
    %102 = arith.mulf %100, %101 : vector<2x16xf32>
    %103 = arith.addf %99, %102 : vector<2x16xf32>
    %104 = math.tanh %103 : vector<2x16xf32>
    %105 = vector.extract_strided_slice %98 {offsets = [0, 16], sizes = [2, 16], strides = [1, 1]} : vector<2x32xf32> to vector<2x16xf32>
    %106 = arith.subf %86, %104 : vector<2x16xf32>
    %107 = arith.mulf %105, %106 : vector<2x16xf32>
    %108 = arith.addf %104, %107 : vector<2x16xf32>
    %cst_83 = arith.constant dense<0.000000e+00> : vector<2x48xf32>
    %109 = tpu.matmul %108, %85, %cst_83 {dimension_numbers = #tpu.dot_dimension_numbers<[1], [0], [0], [1], [0, 0, 1, 1], [], []>} : vector<2x16xf32>, vector<16x48xf32>, vector<2x48xf32> -> vector<2x48xf32>
    %110 = vector.extract_strided_slice %109 {offsets = [0, 0], sizes = [2, 32], strides = [1, 1]} : vector<2x48xf32> to vector<2x32xf32>
    %111 = vector.extract_strided_slice %92 {offsets = [0, 64], sizes = [2, 32], strides = [1, 1]} : vector<2x128xf32> to vector<2x32xf32>
    %112 = arith.addf %110, %111 : vector<2x32xf32>
    %113 = arith.negf %112 : vector<2x32xf32>
    %114 = math.exp %113 : vector<2x32xf32>
    %cst_84 = arith.constant 1.000000e+00 : f32
    %115 = vector.broadcast %cst_84 : f32 to vector<2x32xf32>
    %116 = arith.addf %115, %114 : vector<2x32xf32>
    %117 = arith.divf %115, %116 : vector<2x32xf32>
    %118 = vector.extract_strided_slice %109 {offsets = [0, 32], sizes = [2, 16], strides = [1, 1]} : vector<2x48xf32> to vector<2x16xf32>
    %119 = vector.extract_strided_slice %92 {offsets = [0, 112], sizes = [2, 16], strides = [1, 1]} : vector<2x128xf32> to vector<2x16xf32>
    %120 = arith.addf %118, %119 : vector<2x16xf32>
    %121 = vector.extract_strided_slice %117 {offsets = [0, 0], sizes = [2, 16], strides = [1, 1]} : vector<2x32xf32> to vector<2x16xf32>
    %122 = vector.extract_strided_slice %92 {offsets = [0, 96], sizes = [2, 16], strides = [1, 1]} : vector<2x128xf32> to vector<2x16xf32>
    %123 = arith.mulf %121, %122 : vector<2x16xf32>
    %124 = arith.addf %120, %123 : vector<2x16xf32>
    %125 = math.tanh %124 : vector<2x16xf32>
    %126 = vector.extract_strided_slice %117 {offsets = [0, 16], sizes = [2, 16], strides = [1, 1]} : vector<2x32xf32> to vector<2x16xf32>
    %127 = arith.subf %87, %125 : vector<2x16xf32>
    %128 = arith.mulf %126, %127 : vector<2x16xf32>
    %129 = arith.addf %125, %128 : vector<2x16xf32>
    %c0_85 = arith.constant 0 : index
    %c0_86 = arith.constant 0 : index
    %130 = vector.load %arg12[%c0_85, %c0_86] : memref<18x16xf32, #tpu.memory_space<vmem>>, vector<2x16xf32>
    tpu.vector_store %arg12[%c0_85, %c0_86], %129 {strides = array<i32>} : memref<18x16xf32, #tpu.memory_space<vmem>>, vector<2x16xf32>,
    %131 = vector.extract_strided_slice %82 {offsets = [2, 0], sizes = [2, 128], strides = [1, 1]} : vector<18x128xf32> to vector<2x128xf32>
    %cst_87 = arith.constant dense<0.000000e+00> : vector<2x128xf32>
    %132 = tpu.matmul %108, %83, %cst_87 {dimension_numbers = #tpu.dot_dimension_numbers<[1], [0], [0], [1], [0, 0, 1, 1], [], []>} : vector<2x16xf32>, vector<16x128xf32>, vector<2x128xf32> -> vector<2x128xf32>
    %133 = arith.addf %131, %132 : vector<2x128xf32>
    %cst_88 = arith.constant dense<0.000000e+00> : vector<2x128xf32>
    %134 = tpu.matmul %129, %84, %cst_88 {dimension_numbers = #tpu.dot_dimension_numbers<[1], [0], [0], [1], [0, 0, 1, 1], [], []>} : vector<2x16xf32>, vector<16x128xf32>, vector<2x128xf32> -> vector<2x128xf32>
    %135 = arith.addf %133, %134 : vector<2x128xf32>
    %136 = vector.extract_strided_slice %135 {offsets = [0, 0], sizes = [2, 32], strides = [1, 1]} : vector<2x128xf32> to vector<2x32xf32>
    %137 = arith.negf %136 : vector<2x32xf32>
    %138 = math.exp %137 : vector<2x32xf32>
    %cst_89 = arith.constant 1.000000e+00 : f32
    %139 = vector.broadcast %cst_89 : f32 to vector<2x32xf32>
    %140 = arith.addf %139, %138 : vector<2x32xf32>
    %141 = arith.divf %139, %140 : vector<2x32xf32>
    %142 = vector.extract_strided_slice %135 {offsets = [0, 32], sizes = [2, 16], strides = [1, 1]} : vector<2x128xf32> to vector<2x16xf32>
    %143 = vector.extract_strided_slice %141 {offsets = [0, 0], sizes = [2, 16], strides = [1, 1]} : vector<2x32xf32> to vector<2x16xf32>
    %144 = vector.extract_strided_slice %135 {offsets = [0, 48], sizes = [2, 16], strides = [1, 1]} : vector<2x128xf32> to vector<2x16xf32>
    %145 = arith.mulf %143, %144 : vector<2x16xf32>
    %146 = arith.addf %142, %145 : vector<2x16xf32>
    %147 = math.tanh %146 : vector<2x16xf32>
    %148 = vector.extract_strided_slice %141 {offsets = [0, 16], sizes = [2, 16], strides = [1, 1]} : vector<2x32xf32> to vector<2x16xf32>
    %149 = arith.subf %108, %147 : vector<2x16xf32>
    %150 = arith.mulf %148, %149 : vector<2x16xf32>
    %151 = arith.addf %147, %150 : vector<2x16xf32>
    %cst_90 = arith.constant dense<0.000000e+00> : vector<2x48xf32>
    %152 = tpu.matmul %151, %85, %cst_90 {dimension_numbers = #tpu.dot_dimension_numbers<[1], [0], [0], [1], [0, 0, 1, 1], [], []>} : vector<2x16xf32>, vector<16x48xf32>, vector<2x48xf32> -> vector<2x48xf32>
    %153 = vector.extract_strided_slice %152 {offsets = [0, 0], sizes = [2, 32], strides = [1, 1]} : vector<2x48xf32> to vector<2x32xf32>
    %154 = vector.extract_strided_slice %135 {offsets = [0, 64], sizes = [2, 32], strides = [1, 1]} : vector<2x128xf32> to vector<2x32xf32>
    %155 = arith.addf %153, %154 : vector<2x32xf32>
    %156 = arith.negf %155 : vector<2x32xf32>
    %157 = math.exp %156 : vector<2x32xf32>
    %cst_91 = arith.constant 1.000000e+00 : f32
    %158 = vector.broadcast %cst_91 : f32 to vector<2x32xf32>
    %159 = arith.addf %158, %157 : vector<2x32xf32>
    %160 = arith.divf %158, %159 : vector<2x32xf32>
    %161 = vector.extract_strided_slice %152 {offsets = [0, 32], sizes = [2, 16], strides = [1, 1]} : vector<2x48xf32> to vector<2x16xf32>
    %162 = vector.extract_strided_slice %135 {offsets = [0, 112], sizes = [2, 16], strides = [1, 1]} : vector<2x128xf32> to vector<2x16xf32>
    %163 = arith.addf %161, %162 : vector<2x16xf32>
    %164 = vector.extract_strided_slice %160 {offsets = [0, 0], sizes = [2, 16], strides = [1, 1]} : vector<2x32xf32> to vector<2x16xf32>
    %165 = vector.extract_strided_slice %135 {offsets = [0, 96], sizes = [2, 16], strides = [1, 1]} : vector<2x128xf32> to vector<2x16xf32>
    %166 = arith.mulf %164, %165 : vector<2x16xf32>
    %167 = arith.addf %163, %166 : vector<2x16xf32>
    %168 = math.tanh %167 : vector<2x16xf32>
    %169 = vector.extract_strided_slice %160 {offsets = [0, 16], sizes = [2, 16], strides = [1, 1]} : vector<2x32xf32> to vector<2x16xf32>
    %170 = arith.subf %129, %168 : vector<2x16xf32>
    %171 = arith.mulf %169, %170 : vector<2x16xf32>
    %172 = arith.addf %168, %171 : vector<2x16xf32>
    %c2_92 = arith.constant 2 : index
    %c0_93 = arith.constant 0 : index
    %173 = vector.load %arg12[%c2_92, %c0_93] : memref<18x16xf32, #tpu.memory_space<vmem>>, vector<2x16xf32>
    tpu.vector_store %arg12[%c2_92, %c0_93], %172 {strides = array<i32>} : memref<18x16xf32, #tpu.memory_space<vmem>>, vector<2x16xf32>,
    %174 = vector.extract_strided_slice %82 {offsets = [4, 0], sizes = [2, 128], strides = [1, 1]} : vector<18x128xf32> to vector<2x128xf32>
    %cst_94 = arith.constant dense<0.000000e+00> : vector<2x128xf32>
    %175 = tpu.matmul %151, %83, %cst_94 {dimension_numbers = #tpu.dot_dimension_numbers<[1], [0], [0], [1], [0, 0, 1, 1], [], []>} : vector<2x16xf32>, vector<16x128xf32>, vector<2x128xf32> -> vector<2x128xf32>
    %176 = arith.addf %174, %175 : vector<2x128xf32>
    %cst_95 = arith.constant dense<0.000000e+00> : vector<2x128xf32>
    %177 = tpu.matmul %172, %84, %cst_95 {dimension_numbers = #tpu.dot_dimension_numbers<[1], [0], [0], [1], [0, 0, 1, 1], [], []>} : vector<2x16xf32>, vector<16x128xf32>, vector<2x128xf32> -> vector<2x128xf32>
    %178 = arith.addf %176, %177 : vector<2x128xf32>
    %179 = vector.extract_strided_slice %178 {offsets = [0, 0], sizes = [2, 32], strides = [1, 1]} : vector<2x128xf32> to vector<2x32xf32>
    %180 = arith.negf %179 : vector<2x32xf32>
    %181 = math.exp %180 : vector<2x32xf32>
    %cst_96 = arith.constant 1.000000e+00 : f32
    %182 = vector.broadcast %cst_96 : f32 to vector<2x32xf32>
    %183 = arith.addf %182, %181 : vector<2x32xf32>
    %184 = arith.divf %182, %183 : vector<2x32xf32>
    %185 = vector.extract_strided_slice %178 {offsets = [0, 32], sizes = [2, 16], strides = [1, 1]} : vector<2x128xf32> to vector<2x16xf32>
    %186 = vector.extract_strided_slice %184 {offsets = [0, 0], sizes = [2, 16], strides = [1, 1]} : vector<2x32xf32> to vector<2x16xf32>
    %187 = vector.extract_strided_slice %178 {offsets = [0, 48], sizes = [2, 16], strides = [1, 1]} : vector<2x128xf32> to vector<2x16xf32>
    %188 = arith.mulf %186, %187 : vector<2x16xf32>
    %189 = arith.addf %185, %188 : vector<2x16xf32>
    %190 = math.tanh %189 : vector<2x16xf32>
    %191 = vector.extract_strided_slice %184 {offsets = [0, 16], sizes = [2, 16], strides = [1, 1]} : vector<2x32xf32> to vector<2x16xf32>
    %192 = arith.subf %151, %190 : vector<2x16xf32>
    %193 = arith.mulf %191, %192 : vector<2x16xf32>
    %194 = arith.addf %190, %193 : vector<2x16xf32>
    %cst_97 = arith.constant dense<0.000000e+00> : vector<2x48xf32>
    %195 = tpu.matmul %194, %85, %cst_97 {dimension_numbers = #tpu.dot_dimension_numbers<[1], [0], [0], [1], [0, 0, 1, 1], [], []>} : vector<2x16xf32>, vector<16x48xf32>, vector<2x48xf32> -> vector<2x48xf32>
    %196 = vector.extract_strided_slice %195 {offsets = [0, 0], sizes = [2, 32], strides = [1, 1]} : vector<2x48xf32> to vector<2x32xf32>
    %197 = vector.extract_strided_slice %178 {offsets = [0, 64], sizes = [2, 32], strides = [1, 1]} : vector<2x128xf32> to vector<2x32xf32>
    %198 = arith.addf %196, %197 : vector<2x32xf32>
    %199 = arith.negf %198 : vector<2x32xf32>
    %200 = math.exp %199 : vector<2x32xf32>
    %cst_98 = arith.constant 1.000000e+00 : f32
    %201 = vector.broadcast %cst_98 : f32 to vector<2x32xf32>
    %202 = arith.addf %201, %200 : vector<2x32xf32>
    %203 = arith.divf %201, %202 : vector<2x32xf32>
    %204 = vector.extract_strided_slice %195 {offsets = [0, 32], sizes = [2, 16], strides = [1, 1]} : vector<2x48xf32> to vector<2x16xf32>
    %205 = vector.extract_strided_slice %178 {offsets = [0, 112], sizes = [2, 16], strides = [1, 1]} : vector<2x128xf32> to vector<2x16xf32>
    %206 = arith.addf %204, %205 : vector<2x16xf32>
    %207 = vector.extract_strided_slice %203 {offsets = [0, 0], sizes = [2, 16], strides = [1, 1]} : vector<2x32xf32> to vector<2x16xf32>
    %208 = vector.extract_strided_slice %178 {offsets = [0, 96], sizes = [2, 16], strides = [1, 1]} : vector<2x128xf32> to vector<2x16xf32>
    %209 = arith.mulf %207, %208 : vector<2x16xf32>
    %210 = arith.addf %206, %209 : vector<2x16xf32>
    %211 = math.tanh %210 : vector<2x16xf32>
    %212 = vector.extract_strided_slice %203 {offsets = [0, 16], sizes = [2, 16], strides = [1, 1]} : vector<2x32xf32> to vector<2x16xf32>
    %213 = arith.subf %172, %211 : vector<2x16xf32>
    %214 = arith.mulf %212, %213 : vector<2x16xf32>
    %215 = arith.addf %211, %214 : vector<2x16xf32>
    %c4_99 = arith.constant 4 : index
    %c0_100 = arith.constant 0 : index
    %216 = vector.load %arg12[%c4_99, %c0_100] : memref<18x16xf32, #tpu.memory_space<vmem>>, vector<2x16xf32>
    tpu.vector_store %arg12[%c4_99, %c0_100], %215 {strides = array<i32>} : memref<18x16xf32, #tpu.memory_space<vmem>>, vector<2x16xf32>,
    %217 = vector.extract_strided_slice %82 {offsets = [6, 0], sizes = [2, 128], strides = [1, 1]} : vector<18x128xf32> to vector<2x128xf32>
    %cst_101 = arith.constant dense<0.000000e+00> : vector<2x128xf32>
    %218 = tpu.matmul %194, %83, %cst_101 {dimension_numbers = #tpu.dot_dimension_numbers<[1], [0], [0], [1], [0, 0, 1, 1], [], []>} : vector<2x16xf32>, vector<16x128xf32>, vector<2x128xf32> -> vector<2x128xf32>
    %219 = arith.addf %217, %218 : vector<2x128xf32>
    %cst_102 = arith.constant dense<0.000000e+00> : vector<2x128xf32>
    %220 = tpu.matmul %215, %84, %cst_102 {dimension_numbers = #tpu.dot_dimension_numbers<[1], [0], [0], [1], [0, 0, 1, 1], [], []>} : vector<2x16xf32>, vector<16x128xf32>, vector<2x128xf32> -> vector<2x128xf32>
    %221 = arith.addf %219, %220 : vector<2x128xf32>
    %222 = vector.extract_strided_slice %221 {offsets = [0, 0], sizes = [2, 32], strides = [1, 1]} : vector<2x128xf32> to vector<2x32xf32>
    %223 = arith.negf %222 : vector<2x32xf32>
    %224 = math.exp %223 : vector<2x32xf32>
    %cst_103 = arith.constant 1.000000e+00 : f32
    %225 = vector.broadcast %cst_103 : f32 to vector<2x32xf32>
    %226 = arith.addf %225, %224 : vector<2x32xf32>
    %227 = arith.divf %225, %226 : vector<2x32xf32>
    %228 = vector.extract_strided_slice %221 {offsets = [0, 32], sizes = [2, 16], strides = [1, 1]} : vector<2x128xf32> to vector<2x16xf32>
    %229 = vector.extract_strided_slice %227 {offsets = [0, 0], sizes = [2, 16], strides = [1, 1]} : vector<2x32xf32> to vector<2x16xf32>
    %230 = vector.extract_strided_slice %221 {offsets = [0, 48], sizes = [2, 16], strides = [1, 1]} : vector<2x128xf32> to vector<2x16xf32>
    %231 = arith.mulf %229, %230 : vector<2x16xf32>
    %232 = arith.addf %228, %231 : vector<2x16xf32>
    %233 = math.tanh %232 : vector<2x16xf32>
    %234 = vector.extract_strided_slice %227 {offsets = [0, 16], sizes = [2, 16], strides = [1, 1]} : vector<2x32xf32> to vector<2x16xf32>
    %235 = arith.subf %194, %233 : vector<2x16xf32>
    %236 = arith.mulf %234, %235 : vector<2x16xf32>
    %237 = arith.addf %233, %236 : vector<2x16xf32>
    %cst_104 = arith.constant dense<0.000000e+00> : vector<2x48xf32>
    %238 = tpu.matmul %237, %85, %cst_104 {dimension_numbers = #tpu.dot_dimension_numbers<[1], [0], [0], [1], [0, 0, 1, 1], [], []>} : vector<2x16xf32>, vector<16x48xf32>, vector<2x48xf32> -> vector<2x48xf32>
    %239 = vector.extract_strided_slice %238 {offsets = [0, 0], sizes = [2, 32], strides = [1, 1]} : vector<2x48xf32> to vector<2x32xf32>
    %240 = vector.extract_strided_slice %221 {offsets = [0, 64], sizes = [2, 32], strides = [1, 1]} : vector<2x128xf32> to vector<2x32xf32>
    %241 = arith.addf %239, %240 : vector<2x32xf32>
    %242 = arith.negf %241 : vector<2x32xf32>
    %243 = math.exp %242 : vector<2x32xf32>
    %cst_105 = arith.constant 1.000000e+00 : f32
    %244 = vector.broadcast %cst_105 : f32 to vector<2x32xf32>
    %245 = arith.addf %244, %243 : vector<2x32xf32>
    %246 = arith.divf %244, %245 : vector<2x32xf32>
    %247 = vector.extract_strided_slice %238 {offsets = [0, 32], sizes = [2, 16], strides = [1, 1]} : vector<2x48xf32> to vector<2x16xf32>
    %248 = vector.extract_strided_slice %221 {offsets = [0, 112], sizes = [2, 16], strides = [1, 1]} : vector<2x128xf32> to vector<2x16xf32>
    %249 = arith.addf %247, %248 : vector<2x16xf32>
    %250 = vector.extract_strided_slice %246 {offsets = [0, 0], sizes = [2, 16], strides = [1, 1]} : vector<2x32xf32> to vector<2x16xf32>
    %251 = vector.extract_strided_slice %221 {offsets = [0, 96], sizes = [2, 16], strides = [1, 1]} : vector<2x128xf32> to vector<2x16xf32>
    %252 = arith.mulf %250, %251 : vector<2x16xf32>
    %253 = arith.addf %249, %252 : vector<2x16xf32>
    %254 = math.tanh %253 : vector<2x16xf32>
    %255 = vector.extract_strided_slice %246 {offsets = [0, 16], sizes = [2, 16], strides = [1, 1]} : vector<2x32xf32> to vector<2x16xf32>
    %256 = arith.subf %215, %254 : vector<2x16xf32>
    %257 = arith.mulf %255, %256 : vector<2x16xf32>
    %258 = arith.addf %254, %257 : vector<2x16xf32>
    %c6_106 = arith.constant 6 : index
    %c0_107 = arith.constant 0 : index
    %259 = vector.load %arg12[%c6_106, %c0_107] : memref<18x16xf32, #tpu.memory_space<vmem>>, vector<2x16xf32>
    tpu.vector_store %arg12[%c6_106, %c0_107], %258 {strides = array<i32>} : memref<18x16xf32, #tpu.memory_space<vmem>>, vector<2x16xf32>,
    %260 = vector.extract_strided_slice %82 {offsets = [8, 0], sizes = [2, 128], strides = [1, 1]} : vector<18x128xf32> to vector<2x128xf32>
    %cst_108 = arith.constant dense<0.000000e+00> : vector<2x128xf32>
    %261 = tpu.matmul %237, %83, %cst_108 {dimension_numbers = #tpu.dot_dimension_numbers<[1], [0], [0], [1], [0, 0, 1, 1], [], []>} : vector<2x16xf32>, vector<16x128xf32>, vector<2x128xf32> -> vector<2x128xf32>
    %262 = arith.addf %260, %261 : vector<2x128xf32>
    %cst_109 = arith.constant dense<0.000000e+00> : vector<2x128xf32>
    %263 = tpu.matmul %258, %84, %cst_109 {dimension_numbers = #tpu.dot_dimension_numbers<[1], [0], [0], [1], [0, 0, 1, 1], [], []>} : vector<2x16xf32>, vector<16x128xf32>, vector<2x128xf32> -> vector<2x128xf32>
    %264 = arith.addf %262, %263 : vector<2x128xf32>
    %265 = vector.extract_strided_slice %264 {offsets = [0, 0], sizes = [2, 32], strides = [1, 1]} : vector<2x128xf32> to vector<2x32xf32>
    %266 = arith.negf %265 : vector<2x32xf32>
    %267 = math.exp %266 : vector<2x32xf32>
    %cst_110 = arith.constant 1.000000e+00 : f32
    %268 = vector.broadcast %cst_110 : f32 to vector<2x32xf32>
    %269 = arith.addf %268, %267 : vector<2x32xf32>
    %270 = arith.divf %268, %269 : vector<2x32xf32>
    %271 = vector.extract_strided_slice %264 {offsets = [0, 32], sizes = [2, 16], strides = [1, 1]} : vector<2x128xf32> to vector<2x16xf32>
    %272 = vector.extract_strided_slice %270 {offsets = [0, 0], sizes = [2, 16], strides = [1, 1]} : vector<2x32xf32> to vector<2x16xf32>
    %273 = vector.extract_strided_slice %264 {offsets = [0, 48], sizes = [2, 16], strides = [1, 1]} : vector<2x128xf32> to vector<2x16xf32>
    %274 = arith.mulf %272, %273 : vector<2x16xf32>
    %275 = arith.addf %271, %274 : vector<2x16xf32>
    %276 = math.tanh %275 : vector<2x16xf32>
    %277 = vector.extract_strided_slice %270 {offsets = [0, 16], sizes = [2, 16], strides = [1, 1]} : vector<2x32xf32> to vector<2x16xf32>
    %278 = arith.subf %237, %276 : vector<2x16xf32>
    %279 = arith.mulf %277, %278 : vector<2x16xf32>
    %280 = arith.addf %276, %279 : vector<2x16xf32>
    %cst_111 = arith.constant dense<0.000000e+00> : vector<2x48xf32>
    %281 = tpu.matmul %280, %85, %cst_111 {dimension_numbers = #tpu.dot_dimension_numbers<[1], [0], [0], [1], [0, 0, 1, 1], [], []>} : vector<2x16xf32>, vector<16x48xf32>, vector<2x48xf32> -> vector<2x48xf32>
    %282 = vector.extract_strided_slice %281 {offsets = [0, 0], sizes = [2, 32], strides = [1, 1]} : vector<2x48xf32> to vector<2x32xf32>
    %283 = vector.extract_strided_slice %264 {offsets = [0, 64], sizes = [2, 32], strides = [1, 1]} : vector<2x128xf32> to vector<2x32xf32>
    %284 = arith.addf %282, %283 : vector<2x32xf32>
    %285 = arith.negf %284 : vector<2x32xf32>
    %286 = math.exp %285 : vector<2x32xf32>
    %cst_112 = arith.constant 1.000000e+00 : f32
    %287 = vector.broadcast %cst_112 : f32 to vector<2x32xf32>
    %288 = arith.addf %287, %286 : vector<2x32xf32>
    %289 = arith.divf %287, %288 : vector<2x32xf32>
    %290 = vector.extract_strided_slice %281 {offsets = [0, 32], sizes = [2, 16], strides = [1, 1]} : vector<2x48xf32> to vector<2x16xf32>
    %291 = vector.extract_strided_slice %264 {offsets = [0, 112], sizes = [2, 16], strides = [1, 1]} : vector<2x128xf32> to vector<2x16xf32>
    %292 = arith.addf %290, %291 : vector<2x16xf32>
    %293 = vector.extract_strided_slice %289 {offsets = [0, 0], sizes = [2, 16], strides = [1, 1]} : vector<2x32xf32> to vector<2x16xf32>
    %294 = vector.extract_strided_slice %264 {offsets = [0, 96], sizes = [2, 16], strides = [1, 1]} : vector<2x128xf32> to vector<2x16xf32>
    %295 = arith.mulf %293, %294 : vector<2x16xf32>
    %296 = arith.addf %292, %295 : vector<2x16xf32>
    %297 = math.tanh %296 : vector<2x16xf32>
    %298 = vector.extract_strided_slice %289 {offsets = [0, 16], sizes = [2, 16], strides = [1, 1]} : vector<2x32xf32> to vector<2x16xf32>
    %299 = arith.subf %258, %297 : vector<2x16xf32>
    %300 = arith.mulf %298, %299 : vector<2x16xf32>
    %301 = arith.addf %297, %300 : vector<2x16xf32>
    %c8_113 = arith.constant 8 : index
    %c0_114 = arith.constant 0 : index
    %302 = vector.load %arg12[%c8_113, %c0_114] : memref<18x16xf32, #tpu.memory_space<vmem>>, vector<2x16xf32>
    tpu.vector_store %arg12[%c8_113, %c0_114], %301 {strides = array<i32>} : memref<18x16xf32, #tpu.memory_space<vmem>>, vector<2x16xf32>,
    %303 = vector.extract_strided_slice %82 {offsets = [10, 0], sizes = [2, 128], strides = [1, 1]} : vector<18x128xf32> to vector<2x128xf32>
    %cst_115 = arith.constant dense<0.000000e+00> : vector<2x128xf32>
    %304 = tpu.matmul %280, %83, %cst_115 {dimension_numbers = #tpu.dot_dimension_numbers<[1], [0], [0], [1], [0, 0, 1, 1], [], []>} : vector<2x16xf32>, vector<16x128xf32>, vector<2x128xf32> -> vector<2x128xf32>
    %305 = arith.addf %303, %304 : vector<2x128xf32>
    %cst_116 = arith.constant dense<0.000000e+00> : vector<2x128xf32>
    %306 = tpu.matmul %301, %84, %cst_116 {dimension_numbers = #tpu.dot_dimension_numbers<[1], [0], [0], [1], [0, 0, 1, 1], [], []>} : vector<2x16xf32>, vector<16x128xf32>, vector<2x128xf32> -> vector<2x128xf32>
    %307 = arith.addf %305, %306 : vector<2x128xf32>
    %308 = vector.extract_strided_slice %307 {offsets = [0, 0], sizes = [2, 32], strides = [1, 1]} : vector<2x128xf32> to vector<2x32xf32>
    %309 = arith.negf %308 : vector<2x32xf32>
    %310 = math.exp %309 : vector<2x32xf32>
    %cst_117 = arith.constant 1.000000e+00 : f32
    %311 = vector.broadcast %cst_117 : f32 to vector<2x32xf32>
    %312 = arith.addf %311, %310 : vector<2x32xf32>
    %313 = arith.divf %311, %312 : vector<2x32xf32>
    %314 = vector.extract_strided_slice %307 {offsets = [0, 32], sizes = [2, 16], strides = [1, 1]} : vector<2x128xf32> to vector<2x16xf32>
    %315 = vector.extract_strided_slice %313 {offsets = [0, 0], sizes = [2, 16], strides = [1, 1]} : vector<2x32xf32> to vector<2x16xf32>
    %316 = vector.extract_strided_slice %307 {offsets = [0, 48], sizes = [2, 16], strides = [1, 1]} : vector<2x128xf32> to vector<2x16xf32>
    %317 = arith.mulf %315, %316 : vector<2x16xf32>
    %318 = arith.addf %314, %317 : vector<2x16xf32>
    %319 = math.tanh %318 : vector<2x16xf32>
    %320 = vector.extract_strided_slice %313 {offsets = [0, 16], sizes = [2, 16], strides = [1, 1]} : vector<2x32xf32> to vector<2x16xf32>
    %321 = arith.subf %280, %319 : vector<2x16xf32>
    %322 = arith.mulf %320, %321 : vector<2x16xf32>
    %323 = arith.addf %319, %322 : vector<2x16xf32>
    %cst_118 = arith.constant dense<0.000000e+00> : vector<2x48xf32>
    %324 = tpu.matmul %323, %85, %cst_118 {dimension_numbers = #tpu.dot_dimension_numbers<[1], [0], [0], [1], [0, 0, 1, 1], [], []>} : vector<2x16xf32>, vector<16x48xf32>, vector<2x48xf32> -> vector<2x48xf32>
    %325 = vector.extract_strided_slice %324 {offsets = [0, 0], sizes = [2, 32], strides = [1, 1]} : vector<2x48xf32> to vector<2x32xf32>
    %326 = vector.extract_strided_slice %307 {offsets = [0, 64], sizes = [2, 32], strides = [1, 1]} : vector<2x128xf32> to vector<2x32xf32>
    %327 = arith.addf %325, %326 : vector<2x32xf32>
    %328 = arith.negf %327 : vector<2x32xf32>
    %329 = math.exp %328 : vector<2x32xf32>
    %cst_119 = arith.constant 1.000000e+00 : f32
    %330 = vector.broadcast %cst_119 : f32 to vector<2x32xf32>
    %331 = arith.addf %330, %329 : vector<2x32xf32>
    %332 = arith.divf %330, %331 : vector<2x32xf32>
    %333 = vector.extract_strided_slice %324 {offsets = [0, 32], sizes = [2, 16], strides = [1, 1]} : vector<2x48xf32> to vector<2x16xf32>
    %334 = vector.extract_strided_slice %307 {offsets = [0, 112], sizes = [2, 16], strides = [1, 1]} : vector<2x128xf32> to vector<2x16xf32>
    %335 = arith.addf %333, %334 : vector<2x16xf32>
    %336 = vector.extract_strided_slice %332 {offsets = [0, 0], sizes = [2, 16], strides = [1, 1]} : vector<2x32xf32> to vector<2x16xf32>
    %337 = vector.extract_strided_slice %307 {offsets = [0, 96], sizes = [2, 16], strides = [1, 1]} : vector<2x128xf32> to vector<2x16xf32>
    %338 = arith.mulf %336, %337 : vector<2x16xf32>
    %339 = arith.addf %335, %338 : vector<2x16xf32>
    %340 = math.tanh %339 : vector<2x16xf32>
    %341 = vector.extract_strided_slice %332 {offsets = [0, 16], sizes = [2, 16], strides = [1, 1]} : vector<2x32xf32> to vector<2x16xf32>
    %342 = arith.subf %301, %340 : vector<2x16xf32>
    %343 = arith.mulf %341, %342 : vector<2x16xf32>
    %344 = arith.addf %340, %343 : vector<2x16xf32>
    %c10_120 = arith.constant 10 : index
    %c0_121 = arith.constant 0 : index
    %345 = vector.load %arg12[%c10_120, %c0_121] : memref<18x16xf32, #tpu.memory_space<vmem>>, vector<2x16xf32>
    tpu.vector_store %arg12[%c10_120, %c0_121], %344 {strides = array<i32>} : memref<18x16xf32, #tpu.memory_space<vmem>>, vector<2x16xf32>,
    %346 = vector.extract_strided_slice %82 {offsets = [12, 0], sizes = [2, 128], strides = [1, 1]} : vector<18x128xf32> to vector<2x128xf32>
    %cst_122 = arith.constant dense<0.000000e+00> : vector<2x128xf32>
    %347 = tpu.matmul %323, %83, %cst_122 {dimension_numbers = #tpu.dot_dimension_numbers<[1], [0], [0], [1], [0, 0, 1, 1], [], []>} : vector<2x16xf32>, vector<16x128xf32>, vector<2x128xf32> -> vector<2x128xf32>
    %348 = arith.addf %346, %347 : vector<2x128xf32>
    %cst_123 = arith.constant dense<0.000000e+00> : vector<2x128xf32>
    %349 = tpu.matmul %344, %84, %cst_123 {dimension_numbers = #tpu.dot_dimension_numbers<[1], [0], [0], [1], [0, 0, 1, 1], [], []>} : vector<2x16xf32>, vector<16x128xf32>, vector<2x128xf32> -> vector<2x128xf32>
    %350 = arith.addf %348, %349 : vector<2x128xf32>
    %351 = vector.extract_strided_slice %350 {offsets = [0, 0], sizes = [2, 32], strides = [1, 1]} : vector<2x128xf32> to vector<2x32xf32>
    %352 = arith.negf %351 : vector<2x32xf32>
    %353 = math.exp %352 : vector<2x32xf32>
    %cst_124 = arith.constant 1.000000e+00 : f32
    %354 = vector.broadcast %cst_124 : f32 to vector<2x32xf32>
    %355 = arith.addf %354, %353 : vector<2x32xf32>
    %356 = arith.divf %354, %355 : vector<2x32xf32>
    %357 = vector.extract_strided_slice %350 {offsets = [0, 32], sizes = [2, 16], strides = [1, 1]} : vector<2x128xf32> to vector<2x16xf32>
    %358 = vector.extract_strided_slice %356 {offsets = [0, 0], sizes = [2, 16], strides = [1, 1]} : vector<2x32xf32> to vector<2x16xf32>
    %359 = vector.extract_strided_slice %350 {offsets = [0, 48], sizes = [2, 16], strides = [1, 1]} : vector<2x128xf32> to vector<2x16xf32>
    %360 = arith.mulf %358, %359 : vector<2x16xf32>
    %361 = arith.addf %357, %360 : vector<2x16xf32>
    %362 = math.tanh %361 : vector<2x16xf32>
    %363 = vector.extract_strided_slice %356 {offsets = [0, 16], sizes = [2, 16], strides = [1, 1]} : vector<2x32xf32> to vector<2x16xf32>
    %364 = arith.subf %323, %362 : vector<2x16xf32>
    %365 = arith.mulf %363, %364 : vector<2x16xf32>
    %366 = arith.addf %362, %365 : vector<2x16xf32>
    %cst_125 = arith.constant dense<0.000000e+00> : vector<2x48xf32>
    %367 = tpu.matmul %366, %85, %cst_125 {dimension_numbers = #tpu.dot_dimension_numbers<[1], [0], [0], [1], [0, 0, 1, 1], [], []>} : vector<2x16xf32>, vector<16x48xf32>, vector<2x48xf32> -> vector<2x48xf32>
    %368 = vector.extract_strided_slice %367 {offsets = [0, 0], sizes = [2, 32], strides = [1, 1]} : vector<2x48xf32> to vector<2x32xf32>
    %369 = vector.extract_strided_slice %350 {offsets = [0, 64], sizes = [2, 32], strides = [1, 1]} : vector<2x128xf32> to vector<2x32xf32>
    %370 = arith.addf %368, %369 : vector<2x32xf32>
    %371 = arith.negf %370 : vector<2x32xf32>
    %372 = math.exp %371 : vector<2x32xf32>
    %cst_126 = arith.constant 1.000000e+00 : f32
    %373 = vector.broadcast %cst_126 : f32 to vector<2x32xf32>
    %374 = arith.addf %373, %372 : vector<2x32xf32>
    %375 = arith.divf %373, %374 : vector<2x32xf32>
    %376 = vector.extract_strided_slice %367 {offsets = [0, 32], sizes = [2, 16], strides = [1, 1]} : vector<2x48xf32> to vector<2x16xf32>
    %377 = vector.extract_strided_slice %350 {offsets = [0, 112], sizes = [2, 16], strides = [1, 1]} : vector<2x128xf32> to vector<2x16xf32>
    %378 = arith.addf %376, %377 : vector<2x16xf32>
    %379 = vector.extract_strided_slice %375 {offsets = [0, 0], sizes = [2, 16], strides = [1, 1]} : vector<2x32xf32> to vector<2x16xf32>
    %380 = vector.extract_strided_slice %350 {offsets = [0, 96], sizes = [2, 16], strides = [1, 1]} : vector<2x128xf32> to vector<2x16xf32>
    %381 = arith.mulf %379, %380 : vector<2x16xf32>
    %382 = arith.addf %378, %381 : vector<2x16xf32>
    %383 = math.tanh %382 : vector<2x16xf32>
    %384 = vector.extract_strided_slice %375 {offsets = [0, 16], sizes = [2, 16], strides = [1, 1]} : vector<2x32xf32> to vector<2x16xf32>
    %385 = arith.subf %344, %383 : vector<2x16xf32>
    %386 = arith.mulf %384, %385 : vector<2x16xf32>
    %387 = arith.addf %383, %386 : vector<2x16xf32>
    %c12_127 = arith.constant 12 : index
    %c0_128 = arith.constant 0 : index
    %388 = vector.load %arg12[%c12_127, %c0_128] : memref<18x16xf32, #tpu.memory_space<vmem>>, vector<2x16xf32>
    tpu.vector_store %arg12[%c12_127, %c0_128], %387 {strides = array<i32>} : memref<18x16xf32, #tpu.memory_space<vmem>>, vector<2x16xf32>,
    %389 = vector.extract_strided_slice %82 {offsets = [14, 0], sizes = [2, 128], strides = [1, 1]} : vector<18x128xf32> to vector<2x128xf32>
    %cst_129 = arith.constant dense<0.000000e+00> : vector<2x128xf32>
    %390 = tpu.matmul %366, %83, %cst_129 {dimension_numbers = #tpu.dot_dimension_numbers<[1], [0], [0], [1], [0, 0, 1, 1], [], []>} : vector<2x16xf32>, vector<16x128xf32>, vector<2x128xf32> -> vector<2x128xf32>
    %391 = arith.addf %389, %390 : vector<2x128xf32>
    %cst_130 = arith.constant dense<0.000000e+00> : vector<2x128xf32>
    %392 = tpu.matmul %387, %84, %cst_130 {dimension_numbers = #tpu.dot_dimension_numbers<[1], [0], [0], [1], [0, 0, 1, 1], [], []>} : vector<2x16xf32>, vector<16x128xf32>, vector<2x128xf32> -> vector<2x128xf32>
    %393 = arith.addf %391, %392 : vector<2x128xf32>
    %394 = vector.extract_strided_slice %393 {offsets = [0, 0], sizes = [2, 32], strides = [1, 1]} : vector<2x128xf32> to vector<2x32xf32>
    %395 = arith.negf %394 : vector<2x32xf32>
    %396 = math.exp %395 : vector<2x32xf32>
    %cst_131 = arith.constant 1.000000e+00 : f32
    %397 = vector.broadcast %cst_131 : f32 to vector<2x32xf32>
    %398 = arith.addf %397, %396 : vector<2x32xf32>
    %399 = arith.divf %397, %398 : vector<2x32xf32>
    %400 = vector.extract_strided_slice %393 {offsets = [0, 32], sizes = [2, 16], strides = [1, 1]} : vector<2x128xf32> to vector<2x16xf32>
    %401 = vector.extract_strided_slice %399 {offsets = [0, 0], sizes = [2, 16], strides = [1, 1]} : vector<2x32xf32> to vector<2x16xf32>
    %402 = vector.extract_strided_slice %393 {offsets = [0, 48], sizes = [2, 16], strides = [1, 1]} : vector<2x128xf32> to vector<2x16xf32>
    %403 = arith.mulf %401, %402 : vector<2x16xf32>
    %404 = arith.addf %400, %403 : vector<2x16xf32>
    %405 = math.tanh %404 : vector<2x16xf32>
    %406 = vector.extract_strided_slice %399 {offsets = [0, 16], sizes = [2, 16], strides = [1, 1]} : vector<2x32xf32> to vector<2x16xf32>
    %407 = arith.subf %366, %405 : vector<2x16xf32>
    %408 = arith.mulf %406, %407 : vector<2x16xf32>
    %409 = arith.addf %405, %408 : vector<2x16xf32>
    %cst_132 = arith.constant dense<0.000000e+00> : vector<2x48xf32>
    %410 = tpu.matmul %409, %85, %cst_132 {dimension_numbers = #tpu.dot_dimension_numbers<[1], [0], [0], [1], [0, 0, 1, 1], [], []>} : vector<2x16xf32>, vector<16x48xf32>, vector<2x48xf32> -> vector<2x48xf32>
    %411 = vector.extract_strided_slice %410 {offsets = [0, 0], sizes = [2, 32], strides = [1, 1]} : vector<2x48xf32> to vector<2x32xf32>
    %412 = vector.extract_strided_slice %393 {offsets = [0, 64], sizes = [2, 32], strides = [1, 1]} : vector<2x128xf32> to vector<2x32xf32>
    %413 = arith.addf %411, %412 : vector<2x32xf32>
    %414 = arith.negf %413 : vector<2x32xf32>
    %415 = math.exp %414 : vector<2x32xf32>
    %cst_133 = arith.constant 1.000000e+00 : f32
    %416 = vector.broadcast %cst_133 : f32 to vector<2x32xf32>
    %417 = arith.addf %416, %415 : vector<2x32xf32>
    %418 = arith.divf %416, %417 : vector<2x32xf32>
    %419 = vector.extract_strided_slice %410 {offsets = [0, 32], sizes = [2, 16], strides = [1, 1]} : vector<2x48xf32> to vector<2x16xf32>
    %420 = vector.extract_strided_slice %393 {offsets = [0, 112], sizes = [2, 16], strides = [1, 1]} : vector<2x128xf32> to vector<2x16xf32>
    %421 = arith.addf %419, %420 : vector<2x16xf32>
    %422 = vector.extract_strided_slice %418 {offsets = [0, 0], sizes = [2, 16], strides = [1, 1]} : vector<2x32xf32> to vector<2x16xf32>
    %423 = vector.extract_strided_slice %393 {offsets = [0, 96], sizes = [2, 16], strides = [1, 1]} : vector<2x128xf32> to vector<2x16xf32>
    %424 = arith.mulf %422, %423 : vector<2x16xf32>
    %425 = arith.addf %421, %424 : vector<2x16xf32>
    %426 = math.tanh %425 : vector<2x16xf32>
    %427 = vector.extract_strided_slice %418 {offsets = [0, 16], sizes = [2, 16], strides = [1, 1]} : vector<2x32xf32> to vector<2x16xf32>
    %428 = arith.subf %387, %426 : vector<2x16xf32>
    %429 = arith.mulf %427, %428 : vector<2x16xf32>
    %430 = arith.addf %426, %429 : vector<2x16xf32>
    %c14_134 = arith.constant 14 : index
    %c0_135 = arith.constant 0 : index
    %431 = vector.load %arg12[%c14_134, %c0_135] : memref<18x16xf32, #tpu.memory_space<vmem>>, vector<2x16xf32>
    tpu.vector_store %arg12[%c14_134, %c0_135], %430 {strides = array<i32>} : memref<18x16xf32, #tpu.memory_space<vmem>>, vector<2x16xf32>,
    %432 = vector.extract_strided_slice %82 {offsets = [16, 0], sizes = [2, 128], strides = [1, 1]} : vector<18x128xf32> to vector<2x128xf32>
    %cst_136 = arith.constant dense<0.000000e+00> : vector<2x128xf32>
    %433 = tpu.matmul %409, %83, %cst_136 {dimension_numbers = #tpu.dot_dimension_numbers<[1], [0], [0], [1], [0, 0, 1, 1], [], []>} : vector<2x16xf32>, vector<16x128xf32>, vector<2x128xf32> -> vector<2x128xf32>
    %434 = arith.addf %432, %433 : vector<2x128xf32>
    %cst_137 = arith.constant dense<0.000000e+00> : vector<2x128xf32>
    %435 = tpu.matmul %430, %84, %cst_137 {dimension_numbers = #tpu.dot_dimension_numbers<[1], [0], [0], [1], [0, 0, 1, 1], [], []>} : vector<2x16xf32>, vector<16x128xf32>, vector<2x128xf32> -> vector<2x128xf32>
    %436 = arith.addf %434, %435 : vector<2x128xf32>
    %437 = vector.extract_strided_slice %436 {offsets = [0, 0], sizes = [2, 32], strides = [1, 1]} : vector<2x128xf32> to vector<2x32xf32>
    %438 = arith.negf %437 : vector<2x32xf32>
    %439 = math.exp %438 : vector<2x32xf32>
    %cst_138 = arith.constant 1.000000e+00 : f32
    %440 = vector.broadcast %cst_138 : f32 to vector<2x32xf32>
    %441 = arith.addf %440, %439 : vector<2x32xf32>
    %442 = arith.divf %440, %441 : vector<2x32xf32>
    %443 = vector.extract_strided_slice %436 {offsets = [0, 32], sizes = [2, 16], strides = [1, 1]} : vector<2x128xf32> to vector<2x16xf32>
    %444 = vector.extract_strided_slice %442 {offsets = [0, 0], sizes = [2, 16], strides = [1, 1]} : vector<2x32xf32> to vector<2x16xf32>
    %445 = vector.extract_strided_slice %436 {offsets = [0, 48], sizes = [2, 16], strides = [1, 1]} : vector<2x128xf32> to vector<2x16xf32>
    %446 = arith.mulf %444, %445 : vector<2x16xf32>
    %447 = arith.addf %443, %446 : vector<2x16xf32>
    %448 = math.tanh %447 : vector<2x16xf32>
    %449 = vector.extract_strided_slice %442 {offsets = [0, 16], sizes = [2, 16], strides = [1, 1]} : vector<2x32xf32> to vector<2x16xf32>
    %450 = arith.subf %409, %448 : vector<2x16xf32>
    %451 = arith.mulf %449, %450 : vector<2x16xf32>
    %452 = arith.addf %448, %451 : vector<2x16xf32>
    %cst_139 = arith.constant dense<0.000000e+00> : vector<2x48xf32>
    %453 = tpu.matmul %452, %85, %cst_139 {dimension_numbers = #tpu.dot_dimension_numbers<[1], [0], [0], [1], [0, 0, 1, 1], [], []>} : vector<2x16xf32>, vector<16x48xf32>, vector<2x48xf32> -> vector<2x48xf32>
    %454 = vector.extract_strided_slice %453 {offsets = [0, 0], sizes = [2, 32], strides = [1, 1]} : vector<2x48xf32> to vector<2x32xf32>
    %455 = vector.extract_strided_slice %436 {offsets = [0, 64], sizes = [2, 32], strides = [1, 1]} : vector<2x128xf32> to vector<2x32xf32>
    %456 = arith.addf %454, %455 : vector<2x32xf32>
    %457 = arith.negf %456 : vector<2x32xf32>
    %458 = math.exp %457 : vector<2x32xf32>
    %cst_140 = arith.constant 1.000000e+00 : f32
    %459 = vector.broadcast %cst_140 : f32 to vector<2x32xf32>
    %460 = arith.addf %459, %458 : vector<2x32xf32>
    %461 = arith.divf %459, %460 : vector<2x32xf32>
    %462 = vector.extract_strided_slice %453 {offsets = [0, 32], sizes = [2, 16], strides = [1, 1]} : vector<2x48xf32> to vector<2x16xf32>
    %463 = vector.extract_strided_slice %436 {offsets = [0, 112], sizes = [2, 16], strides = [1, 1]} : vector<2x128xf32> to vector<2x16xf32>
    %464 = arith.addf %462, %463 : vector<2x16xf32>
    %465 = vector.extract_strided_slice %461 {offsets = [0, 0], sizes = [2, 16], strides = [1, 1]} : vector<2x32xf32> to vector<2x16xf32>
    %466 = vector.extract_strided_slice %436 {offsets = [0, 96], sizes = [2, 16], strides = [1, 1]} : vector<2x128xf32> to vector<2x16xf32>
    %467 = arith.mulf %465, %466 : vector<2x16xf32>
    %468 = arith.addf %464, %467 : vector<2x16xf32>
    %469 = math.tanh %468 : vector<2x16xf32>
    %470 = vector.extract_strided_slice %461 {offsets = [0, 16], sizes = [2, 16], strides = [1, 1]} : vector<2x32xf32> to vector<2x16xf32>
    %471 = arith.subf %430, %469 : vector<2x16xf32>
    %472 = arith.mulf %470, %471 : vector<2x16xf32>
    %473 = arith.addf %469, %472 : vector<2x16xf32>
    %c16_141 = arith.constant 16 : index
    %c0_142 = arith.constant 0 : index
    %474 = vector.load %arg12[%c16_141, %c0_142] : memref<18x16xf32, #tpu.memory_space<vmem>>, vector<2x16xf32>
    tpu.vector_store %arg12[%c16_141, %c0_142], %473 {strides = array<i32>} : memref<18x16xf32, #tpu.memory_space<vmem>>, vector<2x16xf32>,
    %c0_143 = arith.constant 0 : index
    %c0_144 = arith.constant 0 : index
    %475 = vector.load %arg12[%c0_143, %c0_144] : memref<18x16xf32, #tpu.memory_space<vmem>>, vector<18x16xf32>
    %c0_145 = arith.constant 0 : index
    %c0_146 = arith.constant 0 : index
    %476 = vector.load %arg6[%c0_145, %c0_146] : memref<16x8xf32, #tpu.memory_space<vmem>>, vector<16x8xf32>
    %cst_147 = arith.constant dense<0.000000e+00> : vector<18x8xf32>
    %477 = tpu.matmul %475, %476, %cst_147 {dimension_numbers = #tpu.dot_dimension_numbers<[1], [0], [0], [1], [0, 0, 1, 1], [], []>} : vector<18x16xf32>, vector<16x8xf32>, vector<18x8xf32> -> vector<18x8xf32>
    %c0_148 = arith.constant 0 : index
    %c0_149 = arith.constant 0 : index
    %478 = vector.load %arg7[%c0_148, %c0_149] : memref<1x8xf32, #tpu.memory_space<vmem>>, vector<1x8xf32>
    %479 = vector.broadcast %478 : vector<1x8xf32> to vector<18x8xf32>
    %480 = arith.addf %477, %479 : vector<18x8xf32>
    %cst_150 = arith.constant 0.000000e+00 : f32
    %481 = vector.broadcast %cst_150 : f32 to vector<18x8xf32>
    %482 = arith.maximumf %480, %481 : vector<18x8xf32>
    %c0_151 = arith.constant 0 : index
    %c0_152 = arith.constant 0 : index
    %483 = vector.load %arg8[%c0_151, %c0_152] : memref<8x7xf32, #tpu.memory_space<vmem>>, vector<8x7xf32>
    %cst_153 = arith.constant dense<0.000000e+00> : vector<18x7xf32>
    %484 = tpu.matmul %482, %483, %cst_153 {dimension_numbers = #tpu.dot_dimension_numbers<[1], [0], [0], [1], [0, 0, 1, 1], [], []>} : vector<18x8xf32>, vector<8x7xf32>, vector<18x7xf32> -> vector<18x7xf32>
    %c0_154 = arith.constant 0 : index
    %c0_155 = arith.constant 0 : index
    %485 = vector.load %arg9[%c0_154, %c0_155] : memref<1x7xf32, #tpu.memory_space<vmem>>, vector<1x7xf32>
    %486 = vector.broadcast %485 : vector<1x7xf32> to vector<18x7xf32>
    %487 = arith.addf %484, %486 : vector<18x7xf32>
    %c0_156 = arith.constant 0 : index
    %c0_157 = arith.constant 0 : index
    %488 = vector.load %arg10[%c0_156, %c0_157] : memref<18x7xf32, #tpu.memory_space<vmem>>, vector<18x7xf32>
    tpu.vector_store %arg10[%c0_156, %c0_157], %487 {strides = array<i32>} : memref<18x7xf32, #tpu.memory_space<vmem>>, vector<18x7xf32>,
    return
  }
}

</mosaic_0001>

<llo_original>
// kernel: refine_gru_forward.1
$region0: #{refine_gru_forward.1}
  #allocation0 [shape = 'u32[]', space=smem, size = 0x4, offset = 0x4, fixed_abs, tag = 'smem constant byte address 0x4 - core index']
  #allocation1 [shape = 'u32[144,128]{1,0:T(1,128)}', space=vmem, size = 0x12000, scoped, tag = 'internal scratch']
  #allocation2 [shape = 'f32[18,16]{1,0:T(8,128)}', space=vmem, size = 0x3000, scoped, tag = 'scratch operand']
  #allocation3 [shape = 'f32[18,16]{1,0:T(8,128)}', space=vmem, size = 0x3000, scoped, tag = 'scratch operand']
  %s0 = inlined_call_operand.vmem [shape: f32[2,9,7], index: 0, kind: input, shape index: {}]
  %s1 = inlined_call_operand.vmem [shape: f32[2,8,8], index: 1, kind: input, shape index: {}]
  %s2 = inlined_call_operand.vmem [shape: f32[16,128], index: 2, kind: input, shape index: {}]
  %s3 = inlined_call_operand.vmem [shape: f32[16,128], index: 3, kind: input, shape index: {}]
  %s4 = inlined_call_operand.vmem [shape: f32[16,128], index: 4, kind: input, shape index: {}]
  %s5 = inlined_call_operand.vmem [shape: f32[16,48], index: 5, kind: input, shape index: {}]
  %s6 = inlined_call_operand.vmem [shape: f32[16,8], index: 6, kind: input, shape index: {}]
  %s7 = inlined_call_operand.hbm [shape: f32[1,8], index: 7, kind: input, shape index: {}]
  %s8 = inlined_call_operand.vmem [shape: f32[8,7], index: 8, kind: input, shape index: {}]
  %s9 = inlined_call_operand.hbm [shape: f32[1,7], index: 9, kind: input, shape index: {}]
  %s10 = inlined_call_operand.vmem [shape: f32[18,7], index: 10, kind: output, shape index: {}]
  %s11 = sld [smem:[#allocation0]]
  $region58: #{refine_gru_forward.1} parent=0
    _
  %s13 = ssub.s32 1, %s11
  %s14 = scalar_select 0, %s13, %s11
  $region1: #{refine_gru_forward.1} parent=0
    #allocation4 [shape = 'u8[512]{0}', space=vmem, size = 0x400, scoped, tag = 'input window, operand 7, single buffered']
    #allocation5 [shape = 's32[1]{0}', space=sflag, size = 0x4, scoped, tag = 'scoped memory for refine_gru_forward.1']
    #allocation6 [shape = 'u8[512]{0}', space=vmem, size = 0x400, scoped, tag = 'input window, operand 9, single buffered']
    #allocation7 [shape = 's32[1]{0}', space=sflag, size = 0x4, scoped, tag = 'scoped memory for refine_gru_forward.1']
    %15 = vsyncpa [#allocation5], 0
    %16 = vsyncpa [#allocation7], 0
    // Predicated region
    $region2: #{refine_gru_forward.1} parent=1 // pred_check
      _
    $region3: #{refine_gru_forward.1} parent=1 // pred_check_branch
      %18 = sbr.rel (0) target = $region5
    $region4: #{refine_gru_forward.1} parent=1 // pred_region
      _
    $region5: #{refine_gru_forward.1} parent=1 // pred_fallthru
      _
    // Predicated region
    $region6: #{refine_gru_forward.1} parent=1 // pred_check
      _
    $region7: #{refine_gru_forward.1} parent=1 // pred_check_branch
      %20 = sbr.rel (0) target = $region9
    $region8: #{refine_gru_forward.1} parent=1 // pred_region
      _
    $region9: #{refine_gru_forward.1} parent=1 // pred_fallthru
      _
    // Predicated region
    $region10: #{refine_gru_forward.1} parent=1 // pred_check
      _
    $region11: #{refine_gru_forward.1} parent=1 // pred_check_branch
      %22 = sbr.rel (0) target = $region13
    $region12: #{refine_gru_forward.1} parent=1 // pred_region
      _
    $region13: #{refine_gru_forward.1} parent=1 // pred_fallthru
      _
    // Predicated region
    $region14: #{refine_gru_forward.1} parent=1 // pred_check
      _
    $region15: #{refine_gru_forward.1} parent=1 // pred_check_branch
      %24 = sbr.rel (0) target = $region17
    $region16: #{refine_gru_forward.1} parent=1 // pred_region
      _
    $region17: #{refine_gru_forward.1} parent=1 // pred_fallthru
      _
    // Predicated region
    $region18: #{refine_gru_forward.1} parent=1 // pred_check
      _
    $region19: #{refine_gru_forward.1} parent=1 // pred_check_branch
      %26 = sbr.rel (0) target = $region21
    $region20: #{refine_gru_forward.1} parent=1 // pred_region
      _
    $region21: #{refine_gru_forward.1} parent=1 // pred_fallthru
      _
    // Predicated region
    $region22: #{refine_gru_forward.1} parent=1 // pred_check
      _
    $region23: #{refine_gru_forward.1} parent=1 // pred_check_branch
      %28 = sbr.rel (0) target = $region25
    $region24: #{refine_gru_forward.1} parent=1 // pred_region
      _
    $region25: #{refine_gru_forward.1} parent=1 // pred_fallthru
      _
    // Predicated region
    $region26: #{refine_gru_forward.1} parent=1 // pred_check
      _
    $region27: #{refine_gru_forward.1} parent=1 // pred_check_branch
      %30 = sbr.rel (0) target = $region29
    $region28: #{refine_gru_forward.1} parent=1 // pred_region
      _
    $region29: #{refine_gru_forward.1} parent=1 // pred_fallthru
      _
    // Predicated region
    $region30: #{refine_gru_forward.1} parent=1 // pred_check
      _
    $region31: #{refine_gru_forward.1} parent=1 // pred_check_branch
      %32 = sbr.rel (0) target = $region33
    $region32: #{refine_gru_forward.1} parent=1 // pred_region
      %s34 = ssub.s32 16, 16
      %35 = vsyncadd [#allocation5], %s34
      %s37 = sshll.u32 [#allocation4], 4
      %s38 = int_to_ptr.vmem [resolvable:$true] %s37
      %40 = dma.hbm_to_vmem [thread:$0]  %s7, 16, %s38, [#allocation5]
    $region33: #{refine_gru_forward.1} parent=1 // pred_fallthru
      _
    // Predicated region
    $region34: #{refine_gru_forward.1} parent=1 // pred_check
      _
    $region35: #{refine_gru_forward.1} parent=1 // pred_check_branch
      %42 = sbr.rel (0) target = $region37
    $region36: #{refine_gru_forward.1} parent=1 // pred_region
      _
    $region37: #{refine_gru_forward.1} parent=1 // pred_fallthru
      _
    // Predicated region
    $region38: #{refine_gru_forward.1} parent=1 // pred_check
      _
    $region39: #{refine_gru_forward.1} parent=1 // pred_check_branch
      %44 = sbr.rel (0) target = $region41
    $region40: #{refine_gru_forward.1} parent=1 // pred_region
      %s46 = ssub.s32 16, 16
      %47 = vsyncadd [#allocation7], %s46
      %s49 = sshll.u32 [#allocation6], 4
      %s50 = int_to_ptr.vmem [resolvable:$true] %s49
      %52 = dma.hbm_to_vmem [thread:$0]  %s9, 16, %s50, [#allocation7]
    $region41: #{refine_gru_forward.1} parent=1 // pred_fallthru
      _
    // Predicated region
    $region42: #{refine_gru_forward.1} parent=1 // pred_check
      _
    $region43: #{refine_gru_forward.1} parent=1 // pred_check_branch
      %54 = sbr.rel (0) target = $region45
    $region44: #{refine_gru_forward.1} parent=1 // pred_region
      %55 = dma.done [#allocation5], 16
    $region45: #{refine_gru_forward.1} parent=1 // pred_fallthru
      _
    // Predicated region
    $region46: #{refine_gru_forward.1} parent=1 // pred_check
      _
    $region47: #{refine_gru_forward.1} parent=1 // pred_check_branch
      %57 = sbr.rel (0) target = $region49
    $region48: #{refine_gru_forward.1} parent=1 // pred_region
      %58 = dma.done [#allocation7], 16
    $region49: #{refine_gru_forward.1} parent=1 // pred_fallthru
      _
    %vm59 = vcmask 130048
    %60 = vst.msk [vmem:[#allocation2] sm:$0xff] %vm59, 0.0
    %61 = vst.msk [vmem:[#allocation2 + $0x8] sm:$0xff] %vm59, 0.0
    %vm62 = vcmask 123904
    %63 = vst.msk [vmem:[#allocation2 + $0x10] sm:$0x3] %vm62, 0.0
    %vm64 = vcmask 130168
    %65 = vst.msk [vmem:[#allocation2] sm:$0xff] %vm64, 1.0
    %66 = vst.msk [vmem:[#allocation2 + $0x8] sm:$0xff] %vm64, 1.0
    %vm67 = vcmask 124024
    %68 = vst.msk [vmem:[#allocation2 + $0x10] sm:$0x3] %vm67, 1.0
    %v69 = vld [vmem:[%s0] sm:$0xff]
    %v70 = vld [vmem:[%s0 + $0x8] sm:$0x1]
    %v71 = vld [vmem:[%s1] sm:$0xff]
    %vm72 = vcmask 49152
    %73 = vst.msk [vmem:[#allocation2] sm:$0x1] %vm72, %v69
    %vm74 = vcmask 50177
    %75 = vst.msk [vmem:[#allocation2 + $0x1] sm:$0x2] %vm74, %v69
    %77 = vrot.lane.b32.xlu0 %v71, 7
    %v78 = vpop.permute.xlu0 %77
    %vm80 = vcmask 114744
    %81 = vst.msk [vmem:[#allocation2 + $0x2] sm:$0x1] %vm80, %v78
    %vm82 = vcmask 51202
    %83 = vst.msk [vmem:[#allocation2 + $0x2] sm:$0x4] %vm82, %v69
    %vm84 = vcmask 115769
    %85 = vst.msk [vmem:[#allocation2 + $0x3] sm:$0x2] %vm84, %v78
    %vm86 = vcmask 52227
    %87 = vst.msk [vmem:[#allocation2 + $0x3] sm:$0x8] %vm86, %v69
    %vm88 = vcmask 116794
    %89 = vst.msk [vmem:[#allocation2 + $0x4] sm:$0x4] %vm88, %v78
    %vm90 = vcmask 53252
    %91 = vst.msk [vmem:[#allocation2 + $0x4] sm:$0x10] %vm90, %v69
    %vm92 = vcmask 117819
    %93 = vst.msk [vmem:[#allocation2 + $0x5] sm:$0x8] %vm92, %v78
    %vm94 = vcmask 54277
    %95 = vst.msk [vmem:[#allocation2 + $0x5] sm:$0x20] %vm94, %v69
    %vm96 = vcmask 118844
    %97 = vst.msk [vmem:[#allocation2 + $0x6] sm:$0x10] %vm96, %v78
    %vm98 = vcmask 55302
    %99 = vst.msk [vmem:[#allocation2 + $0x6] sm:$0x40] %vm98, %v69
    %vm100 = vcmask 119869
    %101 = vst.msk [vmem:[#allocation2 + $0x7] sm:$0x20] %vm100, %v78
    %vm102 = vcmask 56327
    %103 = vst.msk [vmem:[#allocation2 + $0x7] sm:$0x80] %vm102, %v69
    %vm104 = vcmask 120894
    %105 = vst.msk [vmem:[#allocation2 + $0x8] sm:$0x40] %vm104, %v78
    %106 = vst.msk [vmem:[#allocation2 + $0x10] sm:$0x1] %vm72, %v70
    %vm107 = vcmask 121919
    %108 = vst.msk [vmem:[#allocation2 + $0x9] sm:$0x80] %vm107, %v78
    %s109 = scalar_lea.vmem %s0, 16
    %v110 = vld [vmem:[%s109] sm:$0xff]
    %v111 = vld [vmem:[%s109 + $0x8] sm:$0x1]
    %s112 = scalar_lea.vmem %s1, 8
    %v113 = vld [vmem:[%s112] sm:$0xff]
    %114 = vst.msk [vmem:[#allocation2 + $0x1] sm:$0x1] %vm72, %v110
    %115 = vst.msk [vmem:[#allocation2 + $0x2] sm:$0x2] %vm74, %v110
    %117 = vrot.lane.b32.xlu0 %v113, 7
    %v118 = vpop.permute.xlu0 %117
    %120 = vst.msk [vmem:[#allocation2 + $0x3] sm:$0x1] %vm80, %v118
    %121 = vst.msk [vmem:[#allocation2 + $0x3] sm:$0x4] %vm82, %v110
    %122 = vst.msk [vmem:[#allocation2 + $0x4] sm:$0x2] %vm84, %v118
    %123 = vst.msk [vmem:[#allocation2 + $0x4] sm:$0x8] %vm86, %v110
    %124 = vst.msk [vmem:[#allocation2 + $0x5] sm:$0x4] %vm88, %v118
    %125 = vst.msk [vmem:[#allocation2 + $0x5] sm:$0x10] %vm90, %v110
    %126 = vst.msk [vmem:[#allocation2 + $0x6] sm:$0x8] %vm92, %v118
    %127 = vst.msk [vmem:[#allocation2 + $0x6] sm:$0x20] %vm94, %v110
    %128 = vst.msk [vmem:[#allocation2 + $0x7] sm:$0x10] %vm96, %v118
    %129 = vst.msk [vmem:[#allocation2 + $0x7] sm:$0x40] %vm98, %v110
    %130 = vst.msk [vmem:[#allocation2 + $0x8] sm:$0x20] %vm100, %v118
    %131 = vst.msk [vmem:[#allocation2 + $0x8] sm:$0x80] %vm102, %v110
    %132 = vst.msk [vmem:[#allocation2 + $0x9] sm:$0x40] %vm104, %v118
    %133 = vst.msk [vmem:[#allocation2 + $0x11] sm:$0x1] %vm72, %v111
    %134 = vst.msk [vmem:[#allocation2 + $0xa] sm:$0x80] %vm107, %v118
    %v135 = vld [vmem:[#allocation2] sm:$0xff]
    %v136 = vld [vmem:[#allocation2 + $0x8] sm:$0xff]
    %v137 = vld [vmem:[#allocation2 + $0x10] sm:$0x3]
    %v138 = vld [vmem:[%s2] sm:$0xff]
    %v139 = vld [vmem:[%s2 + $0x8] sm:$0xff]
    %v141 = vsel %vm59, %v135, 0
    %v144 = vsel %vm59, %v136, 0
    %v147 = vsel %vm59, %v137, 0
    %149 = vmatprep.subr.mxu0 0.0
    %150 = vmatpush1.msra.mxu0 %v138
    %151 = vmatprep.subr.mxu0 0.0
    %152 = vmatpush1.msra.mxu0 %v139
    %153 = vmatprep.subr.mxu0 0.0
    %154 = vmatpush1.msra.mxu0 0.0
    %155 = vmatprep.subr.mxu0 0.0
    %156 = vmatpush1.msra.mxu0 0.0
    %157 = vmatprep.subr.mxu0 0.0
    %158 = vmatpush1.msra.mxu0 0.0
    %159 = vmatprep.subr.mxu0 0.0
    %160 = vmatpush1.msra.mxu0 0.0
    %161 = vmatprep.subr.mxu0 0.0
    %162 = vmatpush1.msra.mxu0 0.0
    %163 = vmatprep.subr.mxu0 0.0
    %164 = vmatpush1.msra.mxu0 0.0
    %165 = vmatprep.subr.mxu0 0.0
    %166 = vmatpush1.msra.mxu0 0.0
    %167 = vmatprep.subr.mxu0 0.0
    %168 = vmatpush1.msra.mxu0 0.0
    %169 = vmatprep.subr.mxu0 0.0
    %170 = vmatpush1.msra.mxu0 0.0
    %171 = vmatprep.subr.mxu0 0.0
    %172 = vmatpush1.msra.mxu0 0.0
    %173 = vmatprep.subr.mxu0 0.0
    %174 = vmatpush1.msra.mxu0 0.0
    %175 = vmatprep.subr.mxu0 0.0
    %176 = vmatpush1.msra.mxu0 0.0
    %177 = vmatprep.subr.mxu0 0.0
    %178 = vmatpush1.msra.mxu0 0.0
    %179 = vmatprep.subr.mxu0 0.0
    %180 = vmatpush1.msra.mxu0 0.0
    %181 = vmatprep.subr.mxu0 0.0
    %182 = vmatpush1.msra.mxu0 0.0
    %183 = vmatprep.subr.mxu0 0.0
    %184 = vmatpush1.msra.mxu0 0.0
    %185 = vmatprep.subr.mxu0 0.0
    %186 = vmatpush1.msra.mxu0 0.0
    %187 = vmatprep.subr.mxu0 0.0
    %188 = vmatpush1.msra.mxu0 0.0
    %189 = vmatprep.subr.mxu0 0.0
    %190 = vmatpush1.msra.mxu0 0.0
    %191 = vmatprep.subr.mxu0 0.0
    %192 = vmatpush1.msra.mxu0 0.0
    %193 = vmatprep.subr.mxu0 0.0
    %194 = vmatpush1.msra.mxu0 0.0
    %195 = vmatprep.subr.mxu0 0.0
    %196 = vmatpush1.msra.mxu0 0.0
    %197 = vmatprep.subr.mxu0 0.0
    %198 = vmatpush1.msra.mxu0 0.0
    %199 = vmatprep.subr.mxu0 0.0
    %200 = vmatpush1.msra.mxu0 0.0
    %201 = vmatprep.subr.mxu0 0.0
    %202 = vmatpush1.msra.mxu0 0.0
    %203 = vmatprep.subr.mxu0 0.0
    %204 = vmatpush1.msra.mxu0 0.0
    %205 = vmatprep.subr.mxu0 0.0
    %206 = vmatpush1.msra.mxu0 0.0
    %207 = vmatprep.subr.mxu0 0.0
    %208 = vmatpush1.msra.mxu0 0.0
    %209 = vmatprep.subr.mxu0 0.0
    %210 = vmatpush1.msra.mxu0 0.0
    %211 = vmatprep.subr.mxu0 0.0
    %212 = vmatpush1.msra.mxu0 0.0
    %213 = vmatprep.mubr.f32.mxu0 0.0
    %214 = vmatmul.mubr.f32.gmra.mrb[0].mxu0 %v141
    %v215 = vpop.f32.mrb[0].mxu0
    %v216 = vadd.f32 0.0, %v215
    %v217 = vpop.f32.mrb[0].mxu0
    %218 = vmatprep.mubr.f32.mxu0 0.0
    %219 = vmatmul.mubr.f32.gmra.mrb[0].mxu0 %v144
    %v220 = vpop.f32.mrb[0].mxu0
    %v221 = vadd.f32 0.0, %v220
    %v222 = vpop.f32.mrb[0].mxu0
    %223 = vmatprep.mubr.f32.mxu0 0.0
    %224 = vmatmul.mubr.f32.gmra.mrb[0].mxu0 %v147
    %v225 = vpop.f32.mrb[0].mxu0
    %v226 = vadd.f32 0.0, %v225
    %v227 = vpop.f32.mrb[0].mxu0
    %228 = vdwg.mxu0
    %v229 = vld [vmem:[%s3] sm:$0xff]
    %v230 = vld [vmem:[%s3 + $0x8] sm:$0xff]
    %v231 = vld [vmem:[%s4] sm:$0xff]
    %v232 = vld [vmem:[%s4 + $0x8] sm:$0xff]
    %v233 = vld [vmem:[%s5] sm:$0xff]
    %v234 = vld [vmem:[%s5 + $0x8] sm:$0xff]
    %v236 = vsel %vm59, 0.0, 0
    %238 = vmatprep.subr.mxu0 0.0
    %239 = vmatpush1.msra.mxu0 %v229
    %240 = vmatprep.subr.mxu0 0.0
    %241 = vmatpush1.msra.mxu0 %v230
    %242 = vmatprep.subr.mxu0 0.0
    %243 = vmatpush1.msra.mxu0 0.0
    %244 = vmatprep.subr.mxu0 0.0
    %245 = vmatpush1.msra.mxu0 0.0
    %246 = vmatprep.subr.mxu0 0.0
    %247 = vmatpush1.msra.mxu0 0.0
    %248 = vmatprep.subr.mxu0 0.0
    %249 = vmatpush1.msra.mxu0 0.0
    %250 = vmatprep.subr.mxu0 0.0
    %251 = vmatpush1.msra.mxu0 0.0
    %252 = vmatprep.subr.mxu0 0.0
    %253 = vmatpush1.msra.mxu0 0.0
    %254 = vmatprep.subr.mxu0 0.0
    %255 = vmatpush1.msra.mxu0 0.0
    %256 = vmatprep.subr.mxu0 0.0
    %257 = vmatpush1.msra.mxu0 0.0
    %258 = vmatprep.subr.mxu0 0.0
    %259 = vmatpush1.msra.mxu0 0.0
    %260 = vmatprep.subr.mxu0 0.0
    %261 = vmatpush1.msra.mxu0 0.0
    %262 = vmatprep.subr.mxu0 0.0
    %263 = vmatpush1.msra.mxu0 0.0
    %264 = vmatprep.subr.mxu0 0.0
    %265 = vmatpush1.msra.mxu0 0.0
    %266 = vmatprep.subr.mxu0 0.0
    %267 = vmatpush1.msra.mxu0 0.0
    %268 = vmatprep.subr.mxu0 0.0
    %269 = vmatpush1.msra.mxu0 0.0
    %270 = vmatprep.subr.mxu0 0.0
    %271 = vmatpush1.msra.mxu0 0.0
    %272 = vmatprep.subr.mxu0 0.0
    %273 = vmatpush1.msra.mxu0 0.0
    %274 = vmatprep.subr.mxu0 0.0
    %275 = vmatpush1.msra.mxu0 0.0
    %276 = vmatprep.subr.mxu0 0.0
    %277 = vmatpush1.msra.mxu0 0.0
    %278 = vmatprep.subr.mxu0 0.0
    %279 = vmatpush1.msra.mxu0 0.0
    %280 = vmatprep.subr.mxu0 0.0
    %281 = vmatpush1.msra.mxu0 0.0
    %282 = vmatprep.subr.mxu0 0.0
    %283 = vmatpush1.msra.mxu0 0.0
    %284 = vmatprep.subr.mxu0 0.0
    %285 = vmatpush1.msra.mxu0 0.0
    %286 = vmatprep.subr.mxu0 0.0
    %287 = vmatpush1.msra.mxu0 0.0
    %288 = vmatprep.subr.mxu0 0.0
    %289 = vmatpush1.msra.mxu0 0.0
    %290 = vmatprep.subr.mxu0 0.0
    %291 = vmatpush1.msra.mxu0 0.0
    %292 = vmatprep.subr.mxu0 0.0
    %293 = vmatpush1.msra.mxu0 0.0
    %294 = vmatprep.subr.mxu0 0.0
    %295 = vmatpush1.msra.mxu0 0.0
    %296 = vmatprep.subr.mxu0 0.0
    %297 = vmatpush1.msra.mxu0 0.0
    %298 = vmatprep.subr.mxu0 0.0
    %299 = vmatpush1.msra.mxu0 0.0
    %300 = vmatprep.subr.mxu0 0.0
    %301 = vmatpush1.msra.mxu0 0.0
    %302 = vmatprep.mubr.f32.mxu0 0.0
    %303 = vmatmul.mubr.f32.gmra.mrb[0].mxu0 %v236
    %v304 = vpop.f32.mrb[0].mxu0
    %v305 = vadd.f32 0.0, %v304
    %v306 = vpop.f32.mrb[0].mxu0
    %307 = vdwg.mxu0
    %v308 = vadd.f32 %v216, %v305
    %309 = vmatprep.subr.mxu0 0.0
    %310 = vmatpush1.msra.mxu0 %v231
    %311 = vmatprep.subr.mxu0 0.0
    %312 = vmatpush1.msra.mxu0 %v232
    %313 = vmatprep.subr.mxu0 0.0
    %314 = vmatpush1.msra.mxu0 0.0
    %315 = vmatprep.subr.mxu0 0.0
    %316 = vmatpush1.msra.mxu0 0.0
    %317 = vmatprep.subr.mxu0 0.0
    %318 = vmatpush1.msra.mxu0 0.0
    %319 = vmatprep.subr.mxu0 0.0
    %320 = vmatpush1.msra.mxu0 0.0
    %321 = vmatprep.subr.mxu0 0.0
    %322 = vmatpush1.msra.mxu0 0.0
    %323 = vmatprep.subr.mxu0 0.0
    %324 = vmatpush1.msra.mxu0 0.0
    %325 = vmatprep.subr.mxu0 0.0
    %326 = vmatpush1.msra.mxu0 0.0
    %327 = vmatprep.subr.mxu0 0.0
    %328 = vmatpush1.msra.mxu0 0.0
    %329 = vmatprep.subr.mxu0 0.0
    %330 = vmatpush1.msra.mxu0 0.0
    %331 = vmatprep.subr.mxu0 0.0
    %332 = vmatpush1.msra.mxu0 0.0
    %333 = vmatprep.subr.mxu0 0.0
    %334 = vmatpush1.msra.mxu0 0.0
    %335 = vmatprep.subr.mxu0 0.0
    %336 = vmatpush1.msra.mxu0 0.0
    %337 = vmatprep.subr.mxu0 0.0
    %338 = vmatpush1.msra.mxu0 0.0
    %339 = vmatprep.subr.mxu0 0.0
    %340 = vmatpush1.msra.mxu0 0.0
    %341 = vmatprep.subr.mxu0 0.0
    %342 = vmatpush1.msra.mxu0 0.0
    %343 = vmatprep.subr.mxu0 0.0
    %344 = vmatpush1.msra.mxu0 0.0
    %345 = vmatprep.subr.mxu0 0.0
    %346 = vmatpush1.msra.mxu0 0.0
    %347 = vmatprep.subr.mxu0 0.0
    %348 = vmatpush1.msra.mxu0 0.0
    %349 = vmatprep.subr.mxu0 0.0
    %350 = vmatpush1.msra.mxu0 0.0
    %351 = vmatprep.subr.mxu0 0.0
    %352 = vmatpush1.msra.mxu0 0.0
    %353 = vmatprep.subr.mxu0 0.0
    %354 = vmatpush1.msra.mxu0 0.0
    %355 = vmatprep.subr.mxu0 0.0
    %356 = vmatpush1.msra.mxu0 0.0
    %357 = vmatprep.subr.mxu0 0.0
    %358 = vmatpush1.msra.mxu0 0.0
    %359 = vmatprep.subr.mxu0 0.0
    %360 = vmatpush1.msra.mxu0 0.0
    %361 = vmatprep.subr.mxu0 0.0
    %362 = vmatpush1.msra.mxu0 0.0
    %363 = vmatprep.subr.mxu0 0.0
    %364 = vmatpush1.msra.mxu0 0.0
    %365 = vmatprep.subr.mxu0 0.0
    %366 = vmatpush1.msra.mxu0 0.0
    %367 = vmatprep.subr.mxu0 0.0
    %368 = vmatpush1.msra.mxu0 0.0
    %369 = vmatprep.subr.mxu0 0.0
    %370 = vmatpush1.msra.mxu0 0.0
    %371 = vmatprep.subr.mxu0 0.0
    %372 = vmatpush1.msra.mxu0 0.0
    %373 = vmatprep.mubr.f32.mxu0 0.0
    %374 = vmatmul.mubr.f32.gmra.mrb[0].mxu0 %v236
    %v375 = vpop.f32.mrb[0].mxu0
    %v376 = vadd.f32 0.0, %v375
    %v377 = vpop.f32.mrb[0].mxu0
    %378 = vdwg.mxu0
    %v379 = vadd.f32 %v308, %v376
    %v380 = vxor.u32 %v379, 2147483648
    %v381 = vmul.f32 %v380, 1.442695
    %v382 = vpow.pop %v381
    %v383 = vadd.f32 %v382, 1.0
    %v384 = vrcp.pop %v383
    %v385 = vmul.f32 1.0, %v384
    %387 = vrot.lane.b32.xlu0 %v379, 80
    %v388 = vpop.permute.xlu0 %387
    %v390 = vmul.f32 %v385, %v388
    %392 = vrot.lane.b32.xlu0 %v390, 32
    %v393 = vpop.permute.xlu0 %392
    %v395 = vadd.f32 %v379, %v393
    %v396 = vtanh.pop %v395
    %v397 = vsub.f32 0.0, %v396
    %399 = vrot.lane.b32.xlu0 %v397, 112
    %v400 = vpop.permute.xlu0 %399
    %v402 = vmul.f32 %v385, %v400
    %404 = vrot.lane.b32.xlu0 %v402, 16
    %v405 = vpop.permute.xlu0 %404
    %v407 = vadd.f32 %v396, %v405
    %409 = vrot.lane.b32.xlu0 %v407, 96
    %v410 = vpop.permute.xlu0 %409
    %v411 = vsel %vm59, %v410, 0
    %413 = vmatprep.subr.mxu0 0.0
    %414 = vmatpush1.msra.mxu0 %v233
    %415 = vmatprep.subr.mxu0 0.0
    %416 = vmatpush1.msra.mxu0 %v234
    %417 = vmatprep.subr.mxu0 0.0
    %418 = vmatpush1.msra.mxu0 0.0
    %419 = vmatprep.subr.mxu0 0.0
    %420 = vmatpush1.msra.mxu0 0.0
    %421 = vmatprep.subr.mxu0 0.0
    %422 = vmatpush1.msra.mxu0 0.0
    %423 = vmatprep.subr.mxu0 0.0
    %424 = vmatpush1.msra.mxu0 0.0
    %425 = vmatprep.subr.mxu0 0.0
    %426 = vmatpush1.msra.mxu0 0.0
    %427 = vmatprep.subr.mxu0 0.0
    %428 = vmatpush1.msra.mxu0 0.0
    %429 = vmatprep.subr.mxu0 0.0
    %430 = vmatpush1.msra.mxu0 0.0
    %431 = vmatprep.subr.mxu0 0.0
    %432 = vmatpush1.msra.mxu0 0.0
    %433 = vmatprep.subr.mxu0 0.0
    %434 = vmatpush1.msra.mxu0 0.0
    %435 = vmatprep.subr.mxu0 0.0
    %436 = vmatpush1.msra.mxu0 0.0
    %437 = vmatprep.subr.mxu0 0.0
    %438 = vmatpush1.msra.mxu0 0.0
    %439 = vmatprep.subr.mxu0 0.0
    %440 = vmatpush1.msra.mxu0 0.0
    %441 = vmatprep.subr.mxu0 0.0
    %442 = vmatpush1.msra.mxu0 0.0
    %443 = vmatprep.subr.mxu0 0.0
    %444 = vmatpush1.msra.mxu0 0.0
    %445 = vmatprep.subr.mxu0 0.0
    %446 = vmatpush1.msra.mxu0 0.0
    %447 = vmatprep.subr.mxu0 0.0
    %448 = vmatpush1.msra.mxu0 0.0
    %449 = vmatprep.subr.mxu0 0.0
    %450 = vmatpush1.msra.mxu0 0.0
    %451 = vmatprep.subr.mxu0 0.0
    %452 = vmatpush1.msra.mxu0 0.0
    %453 = vmatprep.subr.mxu0 0.0
    %454 = vmatpush1.msra.mxu0 0.0
    %455 = vmatprep.subr.mxu0 0.0
    %456 = vmatpush1.msra.mxu0 0.0
    %457 = vmatprep.subr.mxu0 0.0
    %458 = vmatpush1.msra.mxu0 0.0
    %459 = vmatprep.subr.mxu0 0.0
    %460 = vmatpush1.msra.mxu0 0.0
    %461 = vmatprep.subr.mxu0 0.0
    %462 = vmatpush1.msra.mxu0 0.0
    %463 = vmatprep.subr.mxu0 0.0
    %464 = vmatpush1.msra.mxu0 0.0
    %465 = vmatprep.subr.mxu0 0.0
    %466 = vmatpush1.msra.mxu0 0.0
    %467 = vmatprep.subr.mxu0 0.0
    %468 = vmatpush1.msra.mxu0 0.0
    %469 = vmatprep.subr.mxu0 0.0
    %470 = vmatpush1.msra.mxu0 0.0
    %471 = vmatprep.subr.mxu0 0.0
    %472 = vmatpush1.msra.mxu0 0.0
    %473 = vmatprep.subr.mxu0 0.0
    %474 = vmatpush1.msra.mxu0 0.0
    %475 = vmatprep.subr.mxu0 0.0
    %476 = vmatpush1.msra.mxu0 0.0
    %477 = vmatprep.mubr.f32.mxu0 0.0
    %478 = vmatmul.mubr.f32.gmra.mrb[0].mxu0 %v411
    %v479 = vpop.f32.mrb[0].mxu0
    %v480 = vadd.f32 0.0, %v479
    %v481 = vpop.f32.mrb[0].mxu0
    %482 = vdwg.mxu0
    %483 = vrot.lane.b32.xlu0 %v379, 64
    %v484 = vpop.permute.xlu0 %483
    %v486 = vadd.f32 %v480, %v484
    %v487 = vxor.u32 %v486, 2147483648
    %v488 = vmul.f32 %v487, 1.442695
    %v489 = vpow.pop %v488
    %v490 = vadd.f32 %v489, 1.0
    %v491 = vrcp.pop %v490
    %v492 = vmul.f32 1.0, %v491
    %493 = vrot.lane.b32.xlu0 %v379, 48
    %v494 = vpop.permute.xlu0 %493
    %v496 = vadd.f32 %v480, %v494
    %497 = vrot.lane.b32.xlu0 %v379, 32
    %v498 = vpop.permute.xlu0 %497
    %v500 = vmul.f32 %v492, %v498
    %502 = vrot.lane.b32.xlu0 %v500, 32
    %v503 = vpop.permute.xlu0 %502
    %v505 = vadd.f32 %v496, %v503
    %v506 = vtanh.pop %v505
    %v507 = vsub.f32 0.0, %v506
    %509 = vrot.lane.b32.xlu0 %v507, 112
    %v510 = vpop.permute.xlu0 %509
    %v512 = vmul.f32 %v492, %v510
    %514 = vrot.lane.b32.xlu0 %v512, 16
    %v515 = vpop.permute.xlu0 %514
    %v517 = vadd.f32 %v506, %v515
    %519 = vrot.lane.b32.xlu0 %v517, 96
    %v520 = vpop.permute.xlu0 %519
    %522 = vst.msk [vmem:[#allocation3] sm:$0x3] %vm62, %v520
    %523 = vmatprep.subr.mxu0 0.0
    %524 = vmatpush1.msra.mxu0 %v229
    %525 = vmatprep.subr.mxu0 0.0
    %526 = vmatpush1.msra.mxu0 %v230
    %527 = vmatprep.subr.mxu0 0.0
    %528 = vmatpush1.msra.mxu0 0.0
    %529 = vmatprep.subr.mxu0 0.0
    %530 = vmatpush1.msra.mxu0 0.0
    %531 = vmatprep.subr.mxu0 0.0
    %532 = vmatpush1.msra.mxu0 0.0
    %533 = vmatprep.subr.mxu0 0.0
    %534 = vmatpush1.msra.mxu0 0.0
    %535 = vmatprep.subr.mxu0 0.0
    %536 = vmatpush1.msra.mxu0 0.0
    %537 = vmatprep.subr.mxu0 0.0
    %538 = vmatpush1.msra.mxu0 0.0
    %539 = vmatprep.subr.mxu0 0.0
    %540 = vmatpush1.msra.mxu0 0.0
    %541 = vmatprep.subr.mxu0 0.0
    %542 = vmatpush1.msra.mxu0 0.0
    %543 = vmatprep.subr.mxu0 0.0
    %544 = vmatpush1.msra.mxu0 0.0
    %545 = vmatprep.subr.mxu0 0.0
    %546 = vmatpush1.msra.mxu0 0.0
    %547 = vmatprep.subr.mxu0 0.0
    %548 = vmatpush1.msra.mxu0 0.0
    %549 = vmatprep.subr.mxu0 0.0
    %550 = vmatpush1.msra.mxu0 0.0
    %551 = vmatprep.subr.mxu0 0.0
    %552 = vmatpush1.msra.mxu0 0.0
    %553 = vmatprep.subr.mxu0 0.0
    %554 = vmatpush1.msra.mxu0 0.0
    %555 = vmatprep.subr.mxu0 0.0
    %556 = vmatpush1.msra.mxu0 0.0
    %557 = vmatprep.subr.mxu0 0.0
    %558 = vmatpush1.msra.mxu0 0.0
    %559 = vmatprep.subr.mxu0 0.0
    %560 = vmatpush1.msra.mxu0 0.0
    %561 = vmatprep.subr.mxu0 0.0
    %562 = vmatpush1.msra.mxu0 0.0
    %563 = vmatprep.subr.mxu0 0.0
    %564 = vmatpush1.msra.mxu0 0.0
    %565 = vmatprep.subr.mxu0 0.0
    %566 = vmatpush1.msra.mxu0 0.0
    %567 = vmatprep.subr.mxu0 0.0
    %568 = vmatpush1.msra.mxu0 0.0
    %569 = vmatprep.subr.mxu0 0.0
    %570 = vmatpush1.msra.mxu0 0.0
    %571 = vmatprep.subr.mxu0 0.0
    %572 = vmatpush1.msra.mxu0 0.0
    %573 = vmatprep.subr.mxu0 0.0
    %574 = vmatpush1.msra.mxu0 0.0
    %575 = vmatprep.subr.mxu0 0.0
    %576 = vmatpush1.msra.mxu0 0.0
    %577 = vmatprep.subr.mxu0 0.0
    %578 = vmatpush1.msra.mxu0 0.0
    %579 = vmatprep.subr.mxu0 0.0
    %580 = vmatpush1.msra.mxu0 0.0
    %581 = vmatprep.subr.mxu0 0.0
    %582 = vmatpush1.msra.mxu0 0.0
    %583 = vmatprep.subr.mxu0 0.0
    %584 = vmatpush1.msra.mxu0 0.0
    %585 = vmatprep.subr.mxu0 0.0
    %586 = vmatpush1.msra.mxu0 0.0
    %587 = vmatprep.mubr.f32.mxu0 0.0
    %588 = vmatmul.mubr.f32.gmra.mrb[0].mxu0 %v411
    %v589 = vpop.f32.mrb[0].mxu0
    %v590 = vadd.f32 0.0, %v589
    %v591 = vpop.f32.mrb[0].mxu0
    %592 = vdwg.mxu0
    %v594 = vrot.slane %v590, 6
    %v596 = vadd.f32 %v216, %v594
    %v597 = vsel %vm59, %v520, 0
    %599 = vmatprep.subr.mxu0 0.0
    %600 = vmatpush1.msra.mxu0 %v231
    %601 = vmatprep.subr.mxu0 0.0
    %602 = vmatpush1.msra.mxu0 %v232
    %603 = vmatprep.subr.mxu0 0.0
    %604 = vmatpush1.msra.mxu0 0.0
    %605 = vmatprep.subr.mxu0 0.0
    %606 = vmatpush1.msra.mxu0 0.0
    %607 = vmatprep.subr.mxu0 0.0
    %608 = vmatpush1.msra.mxu0 0.0
    %609 = vmatprep.subr.mxu0 0.0
    %610 = vmatpush1.msra.mxu0 0.0
    %611 = vmatprep.subr.mxu0 0.0
    %612 = vmatpush1.msra.mxu0 0.0
    %613 = vmatprep.subr.mxu0 0.0
    %614 = vmatpush1.msra.mxu0 0.0
    %615 = vmatprep.subr.mxu0 0.0
    %616 = vmatpush1.msra.mxu0 0.0
    %617 = vmatprep.subr.mxu0 0.0
    %618 = vmatpush1.msra.mxu0 0.0
    %619 = vmatprep.subr.mxu0 0.0
    %620 = vmatpush1.msra.mxu0 0.0
    %621 = vmatprep.subr.mxu0 0.0
    %622 = vmatpush1.msra.mxu0 0.0
    %623 = vmatprep.subr.mxu0 0.0
    %624 = vmatpush1.msra.mxu0 0.0
    %625 = vmatprep.subr.mxu0 0.0
    %626 = vmatpush1.msra.mxu0 0.0
    %627 = vmatprep.subr.mxu0 0.0
    %628 = vmatpush1.msra.mxu0 0.0
    %629 = vmatprep.subr.mxu0 0.0
    %630 = vmatpush1.msra.mxu0 0.0
    %631 = vmatprep.subr.mxu0 0.0
    %632 = vmatpush1.msra.mxu0 0.0
    %633 = vmatprep.subr.mxu0 0.0
    %634 = vmatpush1.msra.mxu0 0.0
    %635 = vmatprep.subr.mxu0 0.0
    %636 = vmatpush1.msra.mxu0 0.0
    %637 = vmatprep.subr.mxu0 0.0
    %638 = vmatpush1.msra.mxu0 0.0
    %639 = vmatprep.subr.mxu0 0.0
    %640 = vmatpush1.msra.mxu0 0.0
    %641 = vmatprep.subr.mxu0 0.0
    %642 = vmatpush1.msra.mxu0 0.0
    %643 = vmatprep.subr.mxu0 0.0
    %644 = vmatpush1.msra.mxu0 0.0
    %645 = vmatprep.subr.mxu0 0.0
    %646 = vmatpush1.msra.mxu0 0.0
    %647 = vmatprep.subr.mxu0 0.0
    %648 = vmatpush1.msra.mxu0 0.0
    %649 = vmatprep.subr.mxu0 0.0
    %650 = vmatpush1.msra.mxu0 0.0
    %651 = vmatprep.subr.mxu0 0.0
    %652 = vmatpush1.msra.mxu0 0.0
    %653 = vmatprep.subr.mxu0 0.0
    %654 = vmatpush1.msra.mxu0 0.0
    %655 = vmatprep.subr.mxu0 0.0
    %656 = vmatpush1.msra.mxu0 0.0
    %657 = vmatprep.subr.mxu0 0.0
    %658 = vmatpush1.msra.mxu0 0.0
    %659 = vmatprep.subr.mxu0 0.0
    %660 = vmatpush1.msra.mxu0 0.0
    %661 = vmatprep.subr.mxu0 0.0
    %662 = vmatpush1.msra.mxu0 0.0
    %663 = vmatprep.mubr.f32.mxu0 0.0
    %664 = vmatmul.mubr.f32.gmra.mrb[0].mxu0 %v597
    %v665 = vpop.f32.mrb[0].mxu0
    %v666 = vadd.f32 0.0, %v665
    %v667 = vpop.f32.mrb[0].mxu0
    %668 = vdwg.mxu0
    %v670 = vrot.slane %v666, 6
    %v672 = vadd.f32 %v596, %v670
    %v673 = vxor.u32 %v672, 2147483648
    %v674 = vmul.f32 %v673, 1.442695
    %v675 = vpow.pop %v674
    %v676 = vadd.f32 %v675, 1.0
    %v677 = vrcp.pop %v676
    %v678 = vmul.f32 1.0, %v677
    %680 = vrot.lane.b32.xlu0 %v672, 80
    %v681 = vpop.permute.xlu0 %680
    %v683 = vmul.f32 %v678, %v681
    %685 = vrot.lane.b32.xlu0 %v683, 32
    %v686 = vpop.permute.xlu0 %685
    %v688 = vadd.f32 %v672, %v686
    %v689 = vtanh.pop %v688
    %v691 = vrot.slane %v689, 2
    %v693 = vsub.f32 %v407, %v691
    %v695 = vrot.slane %v693, 6
    %696 = vrot.lane.b32.xlu0 %v695, 112
    %v697 = vpop.permute.xlu0 %696
    %v699 = vmul.f32 %v678, %v697
    %701 = vrot.lane.b32.xlu0 %v699, 16
    %v702 = vpop.permute.xlu0 %701
    %v704 = vadd.f32 %v689, %v702
    %v706 = vrot.slane %v704, 2
    %707 = vrot.lane.b32.xlu0 %v706, 96
    %v708 = vpop.permute.xlu0 %707
    %v709 = vsel %vm59, %v708, 0
    %711 = vmatprep.subr.mxu0 0.0
    %712 = vmatpush1.msra.mxu0 %v233
    %713 = vmatprep.subr.mxu0 0.0
    %714 = vmatpush1.msra.mxu0 %v234
    %715 = vmatprep.subr.mxu0 0.0
    %716 = vmatpush1.msra.mxu0 0.0
    %717 = vmatprep.subr.mxu0 0.0
    %718 = vmatpush1.msra.mxu0 0.0
    %719 = vmatprep.subr.mxu0 0.0
    %720 = vmatpush1.msra.mxu0 0.0
    %721 = vmatprep.subr.mxu0 0.0
    %722 = vmatpush1.msra.mxu0 0.0
    %723 = vmatprep.subr.mxu0 0.0
    %724 = vmatpush1.msra.mxu0 0.0
    %725 = vmatprep.subr.mxu0 0.0
    %726 = vmatpush1.msra.mxu0 0.0
    %727 = vmatprep.subr.mxu0 0.0
    %728 = vmatpush1.msra.mxu0 0.0
    %729 = vmatprep.subr.mxu0 0.0
    %730 = vmatpush1.msra.mxu0 0.0
    %731 = vmatprep.subr.mxu0 0.0
    %732 = vmatpush1.msra.mxu0 0.0
    %733 = vmatprep.subr.mxu0 0.0
    %734 = vmatpush1.msra.mxu0 0.0
    %735 = vmatprep.subr.mxu0 0.0
    %736 = vmatpush1.msra.mxu0 0.0
    %737 = vmatprep.subr.mxu0 0.0
    %738 = vmatpush1.msra.mxu0 0.0
    %739 = vmatprep.subr.mxu0 0.0
    %740 = vmatpush1.msra.mxu0 0.0
    %741 = vmatprep.subr.mxu0 0.0
    %742 = vmatpush1.msra.mxu0 0.0
    %743 = vmatprep.subr.mxu0 0.0
    %744 = vmatpush1.msra.mxu0 0.0
    %745 = vmatprep.subr.mxu0 0.0
    %746 = vmatpush1.msra.mxu0 0.0
    %747 = vmatprep.subr.mxu0 0.0
    %748 = vmatpush1.msra.mxu0 0.0
    %749 = vmatprep.subr.mxu0 0.0
    %750 = vmatpush1.msra.mxu0 0.0
    %751 = vmatprep.subr.mxu0 0.0
    %752 = vmatpush1.msra.mxu0 0.0
    %753 = vmatprep.subr.mxu0 0.0
    %754 = vmatpush1.msra.mxu0 0.0
    %755 = vmatprep.subr.mxu0 0.0
    %756 = vmatpush1.msra.mxu0 0.0
    %757 = vmatprep.subr.mxu0 0.0
    %758 = vmatpush1.msra.mxu0 0.0
    %759 = vmatprep.subr.mxu0 0.0
    %760 = vmatpush1.msra.mxu0 0.0
    %761 = vmatprep.subr.mxu0 0.0
    %762 = vmatpush1.msra.mxu0 0.0
    %763 = vmatprep.subr.mxu0 0.0
    %764 = vmatpush1.msra.mxu0 0.0
    %765 = vmatprep.subr.mxu0 0.0
    %766 = vmatpush1.msra.mxu0 0.0
    %767 = vmatprep.subr.mxu0 0.0
    %768 = vmatpush1.msra.mxu0 0.0
    %769 = vmatprep.subr.mxu0 0.0
    %770 = vmatpush1.msra.mxu0 0.0
    %771 = vmatprep.subr.mxu0 0.0
    %772 = vmatpush1.msra.mxu0 0.0
    %773 = vmatprep.subr.mxu0 0.0
    %774 = vmatpush1.msra.mxu0 0.0
    %775 = vmatprep.mubr.f32.mxu0 0.0
    %776 = vmatmul.mubr.f32.gmra.mrb[0].mxu0 %v709
    %v777 = vpop.f32.mrb[0].mxu0
    %v778 = vadd.f32 0.0, %v777
    %v779 = vpop.f32.mrb[0].mxu0
    %780 = vdwg.mxu0
    %v781 = vrot.slane %v672, 2
    %782 = vrot.lane.b32.xlu0 %v781, 64
    %v783 = vpop.permute.xlu0 %782
    %v785 = vadd.f32 %v778, %v783
    %v786 = vxor.u32 %v785, 2147483648
    %v787 = vmul.f32 %v786, 1.442695
    %v788 = vpow.pop %v787
    %v789 = vadd.f32 %v788, 1.0
    %v790 = vrcp.pop %v789
    %v791 = vmul.f32 1.0, %v790
    %792 = vrot.lane.b32.xlu0 %v781, 48
    %v793 = vpop.permute.xlu0 %792
    %v795 = vadd.f32 %v778, %v793
    %796 = vrot.lane.b32.xlu0 %v781, 32
    %v797 = vpop.permute.xlu0 %796
    %v799 = vmul.f32 %v791, %v797
    %801 = vrot.lane.b32.xlu0 %v799, 32
    %v802 = vpop.permute.xlu0 %801
    %v804 = vadd.f32 %v795, %v802
    %v805 = vtanh.pop %v804
    %v806 = vsub.f32 %v517, %v805
    %808 = vrot.lane.b32.xlu0 %v806, 112
    %v809 = vpop.permute.xlu0 %808
    %v811 = vmul.f32 %v791, %v809
    %813 = vrot.lane.b32.xlu0 %v811, 16
    %v814 = vpop.permute.xlu0 %813
    %v816 = vadd.f32 %v805, %v814
    %818 = vrot.lane.b32.xlu0 %v816, 96
    %v819 = vpop.permute.xlu0 %818
    %821 = vst.msk [vmem:[#allocation3 + $0x2] sm:$0x3] %vm62, %v819
    %822 = vmatprep.subr.mxu0 0.0
    %823 = vmatpush1.msra.mxu0 %v229
    %824 = vmatprep.subr.mxu0 0.0
    %825 = vmatpush1.msra.mxu0 %v230
    %826 = vmatprep.subr.mxu0 0.0
    %827 = vmatpush1.msra.mxu0 0.0
    %828 = vmatprep.subr.mxu0 0.0
    %829 = vmatpush1.msra.mxu0 0.0
    %830 = vmatprep.subr.mxu0 0.0
    %831 = vmatpush1.msra.mxu0 0.0
    %832 = vmatprep.subr.mxu0 0.0
    %833 = vmatpush1.msra.mxu0 0.0
    %834 = vmatprep.subr.mxu0 0.0
    %835 = vmatpush1.msra.mxu0 0.0
    %836 = vmatprep.subr.mxu0 0.0
    %837 = vmatpush1.msra.mxu0 0.0
    %838 = vmatprep.subr.mxu0 0.0
    %839 = vmatpush1.msra.mxu0 0.0
    %840 = vmatprep.subr.mxu0 0.0
    %841 = vmatpush1.msra.mxu0 0.0
    %842 = vmatprep.subr.mxu0 0.0
    %843 = vmatpush1.msra.mxu0 0.0
    %844 = vmatprep.subr.mxu0 0.0
    %845 = vmatpush1.msra.mxu0 0.0
    %846 = vmatprep.subr.mxu0 0.0
    %847 = vmatpush1.msra.mxu0 0.0
    %848 = vmatprep.subr.mxu0 0.0
    %849 = vmatpush1.msra.mxu0 0.0
    %850 = vmatprep.subr.mxu0 0.0
    %851 = vmatpush1.msra.mxu0 0.0
    %852 = vmatprep.subr.mxu0 0.0
    %853 = vmatpush1.msra.mxu0 0.0
    %854 = vmatprep.subr.mxu0 0.0
    %855 = vmatpush1.msra.mxu0 0.0
    %856 = vmatprep.subr.mxu0 0.0
    %857 = vmatpush1.msra.mxu0 0.0
    %858 = vmatprep.subr.mxu0 0.0
    %859 = vmatpush1.msra.mxu0 0.0
    %860 = vmatprep.subr.mxu0 0.0
    %861 = vmatpush1.msra.mxu0 0.0
    %862 = vmatprep.subr.mxu0 0.0
    %863 = vmatpush1.msra.mxu0 0.0
    %864 = vmatprep.subr.mxu0 0.0
    %865 = vmatpush1.msra.mxu0 0.0
    %866 = vmatprep.subr.mxu0 0.0
    %867 = vmatpush1.msra.mxu0 0.0
    %868 = vmatprep.subr.mxu0 0.0
    %869 = vmatpush1.msra.mxu0 0.0
    %870 = vmatprep.subr.mxu0 0.0
    %871 = vmatpush1.msra.mxu0 0.0
    %872 = vmatprep.subr.mxu0 0.0
    %873 = vmatpush1.msra.mxu0 0.0
    %874 = vmatprep.subr.mxu0 0.0
    %875 = vmatpush1.msra.mxu0 0.0
    %876 = vmatprep.subr.mxu0 0.0
    %877 = vmatpush1.msra.mxu0 0.0
    %878 = vmatprep.subr.mxu0 0.0
    %879 = vmatpush1.msra.mxu0 0.0
    %880 = vmatprep.subr.mxu0 0.0
    %881 = vmatpush1.msra.mxu0 0.0
    %882 = vmatprep.subr.mxu0 0.0
    %883 = vmatpush1.msra.mxu0 0.0
    %884 = vmatprep.subr.mxu0 0.0
    %885 = vmatpush1.msra.mxu0 0.0
    %886 = vmatprep.mubr.f32.mxu0 0.0
    %887 = vmatmul.mubr.f32.gmra.mrb[0].mxu0 %v709
    %v888 = vpop.f32.mrb[0].mxu0
    %v889 = vadd.f32 0.0, %v888
    %v890 = vpop.f32.mrb[0].mxu0
    %891 = vdwg.mxu0
    %v893 = vrot.slane %v889, 4
    %v895 = vadd.f32 %v216, %v893
    %v896 = vsel %vm59, %v819, 0
    %898 = vmatprep.subr.mxu0 0.0
    %899 = vmatpush1.msra.mxu0 %v231
    %900 = vmatprep.subr.mxu0 0.0
    %901 = vmatpush1.msra.mxu0 %v232
    %902 = vmatprep.subr.mxu0 0.0
    %903 = vmatpush1.msra.mxu0 0.0
    %904 = vmatprep.subr.mxu0 0.0
    %905 = vmatpush1.msra.mxu0 0.0
    %906 = vmatprep.subr.mxu0 0.0
    %907 = vmatpush1.msra.mxu0 0.0
    %908 = vmatprep.subr.mxu0 0.0
    %909 = vmatpush1.msra.mxu0 0.0
    %910 = vmatprep.subr.mxu0 0.0
    %911 = vmatpush1.msra.mxu0 0.0
    %912 = vmatprep.subr.mxu0 0.0
    %913 = vmatpush1.msra.mxu0 0.0
    %914 = vmatprep.subr.mxu0 0.0
    %915 = vmatpush1.msra.mxu0 0.0
    %916 = vmatprep.subr.mxu0 0.0
    %917 = vmatpush1.msra.mxu0 0.0
    %918 = vmatprep.subr.mxu0 0.0
    %919 = vmatpush1.msra.mxu0 0.0
    %920 = vmatprep.subr.mxu0 0.0
    %921 = vmatpush1.msra.mxu0 0.0
    %922 = vmatprep.subr.mxu0 0.0
    %923 = vmatpush1.msra.mxu0 0.0
    %924 = vmatprep.subr.mxu0 0.0
    %925 = vmatpush1.msra.mxu0 0.0
    %926 = vmatprep.subr.mxu0 0.0
    %927 = vmatpush1.msra.mxu0 0.0
    %928 = vmatprep.subr.mxu0 0.0
    %929 = vmatpush1.msra.mxu0 0.0
    %930 = vmatprep.subr.mxu0 0.0
    %931 = vmatpush1.msra.mxu0 0.0
    %932 = vmatprep.subr.mxu0 0.0
    %933 = vmatpush1.msra.mxu0 0.0
    %934 = vmatprep.subr.mxu0 0.0
    %935 = vmatpush1.msra.mxu0 0.0
    %936 = vmatprep.subr.mxu0 0.0
    %937 = vmatpush1.msra.mxu0 0.0
    %938 = vmatprep.subr.mxu0 0.0
    %939 = vmatpush1.msra.mxu0 0.0
    %940 = vmatprep.subr.mxu0 0.0
    %941 = vmatpush1.msra.mxu0 0.0
    %942 = vmatprep.subr.mxu0 0.0
    %943 = vmatpush1.msra.mxu0 0.0
    %944 = vmatprep.subr.mxu0 0.0
    %945 = vmatpush1.msra.mxu0 0.0
    %946 = vmatprep.subr.mxu0 0.0
    %947 = vmatpush1.msra.mxu0 0.0
    %948 = vmatprep.subr.mxu0 0.0
    %949 = vmatpush1.msra.mxu0 0.0
    %950 = vmatprep.subr.mxu0 0.0
    %951 = vmatpush1.msra.mxu0 0.0
    %952 = vmatprep.subr.mxu0 0.0
    %953 = vmatpush1.msra.mxu0 0.0
    %954 = vmatprep.subr.mxu0 0.0
    %955 = vmatpush1.msra.mxu0 0.0
    %956 = vmatprep.subr.mxu0 0.0
    %957 = vmatpush1.msra.mxu0 0.0
    %958 = vmatprep.subr.mxu0 0.0
    %959 = vmatpush1.msra.mxu0 0.0
    %960 = vmatprep.subr.mxu0 0.0
    %961 = vmatpush1.msra.mxu0 0.0
    %962 = vmatprep.mubr.f32.mxu0 0.0
    %963 = vmatmul.mubr.f32.gmra.mrb[0].mxu0 %v896
    %v964 = vpop.f32.mrb[0].mxu0
    %v965 = vadd.f32 0.0, %v964
    %v966 = vpop.f32.mrb[0].mxu0
    %967 = vdwg.mxu0
    %v969 = vrot.slane %v965, 4
    %v971 = vadd.f32 %v895, %v969
    %v972 = vxor.u32 %v971, 2147483648
    %v973 = vmul.f32 %v972, 1.442695
    %v974 = vpow.pop %v973
    %v975 = vadd.f32 %v974, 1.0
    %v976 = vrcp.pop %v975
    %v977 = vmul.f32 1.0, %v976
    %979 = vrot.lane.b32.xlu0 %v971, 80
    %v980 = vpop.permute.xlu0 %979
    %v982 = vmul.f32 %v977, %v980
    %984 = vrot.lane.b32.xlu0 %v982, 32
    %v985 = vpop.permute.xlu0 %984
    %v987 = vadd.f32 %v971, %v985
    %v988 = vtanh.pop %v987
    %v990 = vrot.slane %v988, 2
    %v992 = vsub.f32 %v704, %v990
    %v994 = vrot.slane %v992, 6
    %995 = vrot.lane.b32.xlu0 %v994, 112
    %v996 = vpop.permute.xlu0 %995
    %v998 = vmul.f32 %v977, %v996
    %1000 = vrot.lane.b32.xlu0 %v998, 16
    %v1001 = vpop.permute.xlu0 %1000
    %v1003 = vadd.f32 %v988, %v1001
    %v1005 = vrot.slane %v1003, 4
    %1006 = vrot.lane.b32.xlu0 %v1005, 96
    %v1007 = vpop.permute.xlu0 %1006
    %v1008 = vsel %vm59, %v1007, 0
    %1010 = vmatprep.subr.mxu0 0.0
    %1011 = vmatpush1.msra.mxu0 %v233
    %1012 = vmatprep.subr.mxu0 0.0
    %1013 = vmatpush1.msra.mxu0 %v234
    %1014 = vmatprep.subr.mxu0 0.0
    %1015 = vmatpush1.msra.mxu0 0.0
    %1016 = vmatprep.subr.mxu0 0.0
    %1017 = vmatpush1.msra.mxu0 0.0
    %1018 = vmatprep.subr.mxu0 0.0
    %1019 = vmatpush1.msra.mxu0 0.0
    %1020 = vmatprep.subr.mxu0 0.0
    %1021 = vmatpush1.msra.mxu0 0.0
    %1022 = vmatprep.subr.mxu0 0.0
    %1023 = vmatpush1.msra.mxu0 0.0
    %1024 = vmatprep.subr.mxu0 0.0
    %1025 = vmatpush1.msra.mxu0 0.0
    %1026 = vmatprep.subr.mxu0 0.0
    %1027 = vmatpush1.msra.mxu0 0.0
    %1028 = vmatprep.subr.mxu0 0.0
    %1029 = vmatpush1.msra.mxu0 0.0
    %1030 = vmatprep.subr.mxu0 0.0
    %1031 = vmatpush1.msra.mxu0 0.0
    %1032 = vmatprep.subr.mxu0 0.0
    %1033 = vmatpush1.msra.mxu0 0.0
    %1034 = vmatprep.subr.mxu0 0.0
    %1035 = vmatpush1.msra.mxu0 0.0
    %1036 = vmatprep.subr.mxu0 0.0
    %1037 = vmatpush1.msra.mxu0 0.0
    %1038 = vmatprep.subr.mxu0 0.0
    %1039 = vmatpush1.msra.mxu0 0.0
    %1040 = vmatprep.subr.mxu0 0.0
    %1041 = vmatpush1.msra.mxu0 0.0
    %1042 = vmatprep.subr.mxu0 0.0
    %1043 = vmatpush1.msra.mxu0 0.0
    %1044 = vmatprep.subr.mxu0 0.0
    %1045 = vmatpush1.msra.mxu0 0.0
    %1046 = vmatprep.subr.mxu0 0.0
    %1047 = vmatpush1.msra.mxu0 0.0
    %1048 = vmatprep.subr.mxu0 0.0
    %1049 = vmatpush1.msra.mxu0 0.0
    %1050 = vmatprep.subr.mxu0 0.0
    %1051 = vmatpush1.msra.mxu0 0.0
    %1052 = vmatprep.subr.mxu0 0.0
    %1053 = vmatpush1.msra.mxu0 0.0
    %1054 = vmatprep.subr.mxu0 0.0
    %1055 = vmatpush1.msra.mxu0 0.0
    %1056 = vmatprep.subr.mxu0 0.0
    %1057 = vmatpush1.msra.mxu0 0.0
    %1058 = vmatprep.subr.mxu0 0.0
    %1059 = vmatpush1.msra.mxu0 0.0
    %1060 = vmatprep.subr.mxu0 0.0
    %1061 = vmatpush1.msra.mxu0 0.0
    %1062 = vmatprep.subr.mxu0 0.0
    %1063 = vmatpush1.msra.mxu0 0.0
    %1064 = vmatprep.subr.mxu0 0.0
    %1065 = vmatpush1.msra.mxu0 0.0
    %1066 = vmatprep.subr.mxu0 0.0
    %1067 = vmatpush1.msra.mxu0 0.0
    %1068 = vmatprep.subr.mxu0 0.0
    %1069 = vmatpush1.msra.mxu0 0.0
    %1070 = vmatprep.subr.mxu0 0.0
    %1071 = vmatpush1.msra.mxu0 0.0
    %1072 = vmatprep.subr.mxu0 0.0
    %1073 = vmatpush1.msra.mxu0 0.0
    %1074 = vmatprep.mubr.f32.mxu0 0.0
    %1075 = vmatmul.mubr.f32.gmra.mrb[0].mxu0 %v1008
    %v1076 = vpop.f32.mrb[0].mxu0
    %v1077 = vadd.f32 0.0, %v1076
    %v1078 = vpop.f32.mrb[0].mxu0
    %1079 = vdwg.mxu0
    %v1080 = vrot.slane %v971, 4
    %1081 = vrot.lane.b32.xlu0 %v1080, 64
    %v1082 = vpop.permute.xlu0 %1081
    %v1084 = vadd.f32 %v1077, %v1082
    %v1085 = vxor.u32 %v1084, 2147483648
    %v1086 = vmul.f32 %v1085, 1.442695
    %v1087 = vpow.pop %v1086
    %v1088 = vadd.f32 %v1087, 1.0
    %v1089 = vrcp.pop %v1088
    %v1090 = vmul.f32 1.0, %v1089
    %1091 = vrot.lane.b32.xlu0 %v1080, 48
    %v1092 = vpop.permute.xlu0 %1091
    %v1094 = vadd.f32 %v1077, %v1092
    %1095 = vrot.lane.b32.xlu0 %v1080, 32
    %v1096 = vpop.permute.xlu0 %1095
    %v1098 = vmul.f32 %v1090, %v1096
    %1100 = vrot.lane.b32.xlu0 %v1098, 32
    %v1101 = vpop.permute.xlu0 %1100
    %v1103 = vadd.f32 %v1094, %v1101
    %v1104 = vtanh.pop %v1103
    %v1105 = vsub.f32 %v816, %v1104
    %1107 = vrot.lane.b32.xlu0 %v1105, 112
    %v1108 = vpop.permute.xlu0 %1107
    %v1110 = vmul.f32 %v1090, %v1108
    %1112 = vrot.lane.b32.xlu0 %v1110, 16
    %v1113 = vpop.permute.xlu0 %1112
    %v1115 = vadd.f32 %v1104, %v1113
    %1117 = vrot.lane.b32.xlu0 %v1115, 96
    %v1118 = vpop.permute.xlu0 %1117
    %1120 = vst.msk [vmem:[#allocation3 + $0x4] sm:$0x3] %vm62, %v1118
    %1121 = vmatprep.subr.mxu0 0.0
    %1122 = vmatpush1.msra.mxu0 %v229
    %1123 = vmatprep.subr.mxu0 0.0
    %1124 = vmatpush1.msra.mxu0 %v230
    %1125 = vmatprep.subr.mxu0 0.0
    %1126 = vmatpush1.msra.mxu0 0.0
    %1127 = vmatprep.subr.mxu0 0.0
    %1128 = vmatpush1.msra.mxu0 0.0
    %1129 = vmatprep.subr.mxu0 0.0
    %1130 = vmatpush1.msra.mxu0 0.0
    %1131 = vmatprep.subr.mxu0 0.0
    %1132 = vmatpush1.msra.mxu0 0.0
    %1133 = vmatprep.subr.mxu0 0.0
    %1134 = vmatpush1.msra.mxu0 0.0
    %1135 = vmatprep.subr.mxu0 0.0
    %1136 = vmatpush1.msra.mxu0 0.0
    %1137 = vmatprep.subr.mxu0 0.0
    %1138 = vmatpush1.msra.mxu0 0.0
    %1139 = vmatprep.subr.mxu0 0.0
    %1140 = vmatpush1.msra.mxu0 0.0
    %1141 = vmatprep.subr.mxu0 0.0
    %1142 = vmatpush1.msra.mxu0 0.0
    %1143 = vmatprep.subr.mxu0 0.0
    %1144 = vmatpush1.msra.mxu0 0.0
    %1145 = vmatprep.subr.mxu0 0.0
    %1146 = vmatpush1.msra.mxu0 0.0
    %1147 = vmatprep.subr.mxu0 0.0
    %1148 = vmatpush1.msra.mxu0 0.0
    %1149 = vmatprep.subr.mxu0 0.0
    %1150 = vmatpush1.msra.mxu0 0.0
    %1151 = vmatprep.subr.mxu0 0.0
    %1152 = vmatpush1.msra.mxu0 0.0
    %1153 = vmatprep.subr.mxu0 0.0
    %1154 = vmatpush1.msra.mxu0 0.0
    %1155 = vmatprep.subr.mxu0 0.0
    %1156 = vmatpush1.msra.mxu0 0.0
    %1157 = vmatprep.subr.mxu0 0.0
    %1158 = vmatpush1.msra.mxu0 0.0
    %1159 = vmatprep.subr.mxu0 0.0
    %1160 = vmatpush1.msra.mxu0 0.0
    %1161 = vmatprep.subr.mxu0 0.0
    %1162 = vmatpush1.msra.mxu0 0.0
    %1163 = vmatprep.subr.mxu0 0.0
    %1164 = vmatpush1.msra.mxu0 0.0
    %1165 = vmatprep.subr.mxu0 0.0
    %1166 = vmatpush1.msra.mxu0 0.0
    %1167 = vmatprep.subr.mxu0 0.0
    %1168 = vmatpush1.msra.mxu0 0.0
    %1169 = vmatprep.subr.mxu0 0.0
    %1170 = vmatpush1.msra.mxu0 0.0
    %1171 = vmatprep.subr.mxu0 0.0
    %1172 = vmatpush1.msra.mxu0 0.0
    %1173 = vmatprep.subr.mxu0 0.0
    %1174 = vmatpush1.msra.mxu0 0.0
    %1175 = vmatprep.subr.mxu0 0.0
    %1176 = vmatpush1.msra.mxu0 0.0
    %1177 = vmatprep.subr.mxu0 0.0
    %1178 = vmatpush1.msra.mxu0 0.0
    %1179 = vmatprep.subr.mxu0 0.0
    %1180 = vmatpush1.msra.mxu0 0.0
    %1181 = vmatprep.subr.mxu0 0.0
    %1182 = vmatpush1.msra.mxu0 0.0
    %1183 = vmatprep.subr.mxu0 0.0
    %1184 = vmatpush1.msra.mxu0 0.0
    %1185 = vmatprep.mubr.f32.mxu0 0.0
    %1186 = vmatmul.mubr.f32.gmra.mrb[0].mxu0 %v1008
    %v1187 = vpop.f32.mrb[0].mxu0
    %v1188 = vadd.f32 0.0, %v1187
    %v1189 = vpop.f32.mrb[0].mxu0
    %1190 = vdwg.mxu0
    %v1192 = vrot.slane %v1188, 2
    %v1194 = vadd.f32 %v216, %v1192
    %v1195 = vsel %vm59, %v1118, 0
    %1197 = vmatprep.subr.mxu0 0.0
    %1198 = vmatpush1.msra.mxu0 %v231
    %1199 = vmatprep.subr.mxu0 0.0
    %1200 = vmatpush1.msra.mxu0 %v232
    %1201 = vmatprep.subr.mxu0 0.0
    %1202 = vmatpush1.msra.mxu0 0.0
    %1203 = vmatprep.subr.mxu0 0.0
    %1204 = vmatpush1.msra.mxu0 0.0
    %1205 = vmatprep.subr.mxu0 0.0
    %1206 = vmatpush1.msra.mxu0 0.0
    %1207 = vmatprep.subr.mxu0 0.0
    %1208 = vmatpush1.msra.mxu0 0.0
    %1209 = vmatprep.subr.mxu0 0.0
    %1210 = vmatpush1.msra.mxu0 0.0
    %1211 = vmatprep.subr.mxu0 0.0
    %1212 = vmatpush1.msra.mxu0 0.0
    %1213 = vmatprep.subr.mxu0 0.0
    %1214 = vmatpush1.msra.mxu0 0.0
    %1215 = vmatprep.subr.mxu0 0.0
    %1216 = vmatpush1.msra.mxu0 0.0
    %1217 = vmatprep.subr.mxu0 0.0
    %1218 = vmatpush1.msra.mxu0 0.0
    %1219 = vmatprep.subr.mxu0 0.0
    %1220 = vmatpush1.msra.mxu0 0.0
    %1221 = vmatprep.subr.mxu0 0.0
    %1222 = vmatpush1.msra.mxu0 0.0
    %1223 = vmatprep.subr.mxu0 0.0
    %1224 = vmatpush1.msra.mxu0 0.0
    %1225 = vmatprep.subr.mxu0 0.0
    %1226 = vmatpush1.msra.mxu0 0.0
    %1227 = vmatprep.subr.mxu0 0.0
    %1228 = vmatpush1.msra.mxu0 0.0
    %1229 = vmatprep.subr.mxu0 0.0
    %1230 = vmatpush1.msra.mxu0 0.0
    %1231 = vmatprep.subr.mxu0 0.0
    %1232 = vmatpush1.msra.mxu0 0.0
    %1233 = vmatprep.subr.mxu0 0.0
    %1234 = vmatpush1.msra.mxu0 0.0
    %1235 = vmatprep.subr.mxu0 0.0
    %1236 = vmatpush1.msra.mxu0 0.0
    %1237 = vmatprep.subr.mxu0 0.0
    %1238 = vmatpush1.msra.mxu0 0.0
    %1239 = vmatprep.subr.mxu0 0.0
    %1240 = vmatpush1.msra.mxu0 0.0
    %1241 = vmatprep.subr.mxu0 0.0
    %1242 = vmatpush1.msra.mxu0 0.0
    %1243 = vmatprep.subr.mxu0 0.0
    %1244 = vmatpush1.msra.mxu0 0.0
    %1245 = vmatprep.subr.mxu0 0.0
    %1246 = vmatpush1.msra.mxu0 0.0
    %1247 = vmatprep.subr.mxu0 0.0
    %1248 = vmatpush1.msra.mxu0 0.0
    %1249 = vmatprep.subr.mxu0 0.0
    %1250 = vmatpush1.msra.mxu0 0.0
    %1251 = vmatprep.subr.mxu0 0.0
    %1252 = vmatpush1.msra.mxu0 0.0
    %1253 = vmatprep.subr.mxu0 0.0
    %1254 = vmatpush1.msra.mxu0 0.0
    %1255 = vmatprep.subr.mxu0 0.0
    %1256 = vmatpush1.msra.mxu0 0.0
    %1257 = vmatprep.subr.mxu0 0.0
    %1258 = vmatpush1.msra.mxu0 0.0
    %1259 = vmatprep.subr.mxu0 0.0
    %1260 = vmatpush1.msra.mxu0 0.0
    %1261 = vmatprep.mubr.f32.mxu0 0.0
    %1262 = vmatmul.mubr.f32.gmra.mrb[0].mxu0 %v1195
    %v1263 = vpop.f32.mrb[0].mxu0
    %v1264 = vadd.f32 0.0, %v1263
    %v1265 = vpop.f32.mrb[0].mxu0
    %1266 = vdwg.mxu0
    %v1268 = vrot.slane %v1264, 2
    %v1270 = vadd.f32 %v1194, %v1268
    %v1271 = vxor.u32 %v1270, 2147483648
    %v1272 = vmul.f32 %v1271, 1.442695
    %v1273 = vpow.pop %v1272
    %v1274 = vadd.f32 %v1273, 1.0
    %v1275 = vrcp.pop %v1274
    %v1276 = vmul.f32 1.0, %v1275
    %1278 = vrot.lane.b32.xlu0 %v1270, 80
    %v1279 = vpop.permute.xlu0 %1278
    %v1281 = vmul.f32 %v1276, %v1279
    %1283 = vrot.lane.b32.xlu0 %v1281, 32
    %v1284 = vpop.permute.xlu0 %1283
    %v1286 = vadd.f32 %v1270, %v1284
    %v1287 = vtanh.pop %v1286
    %v1289 = vrot.slane %v1287, 2
    %v1291 = vsub.f32 %v1003, %v1289
    %v1293 = vrot.slane %v1291, 6
    %1294 = vrot.lane.b32.xlu0 %v1293, 112
    %v1295 = vpop.permute.xlu0 %1294
    %v1297 = vmul.f32 %v1276, %v1295
    %1299 = vrot.lane.b32.xlu0 %v1297, 16
    %v1300 = vpop.permute.xlu0 %1299
    %v1302 = vadd.f32 %v1287, %v1300
    %v1304 = vrot.slane %v1302, 6
    %1305 = vrot.lane.b32.xlu0 %v1304, 96
    %v1306 = vpop.permute.xlu0 %1305
    %v1307 = vsel %vm59, %v1306, 0
    %1309 = vmatprep.subr.mxu0 0.0
    %1310 = vmatpush1.msra.mxu0 %v233
    %1311 = vmatprep.subr.mxu0 0.0
    %1312 = vmatpush1.msra.mxu0 %v234
    %1313 = vmatprep.subr.mxu0 0.0
    %1314 = vmatpush1.msra.mxu0 0.0
    %1315 = vmatprep.subr.mxu0 0.0
    %1316 = vmatpush1.msra.mxu0 0.0
    %1317 = vmatprep.subr.mxu0 0.0
    %1318 = vmatpush1.msra.mxu0 0.0
    %1319 = vmatprep.subr.mxu0 0.0
    %1320 = vmatpush1.msra.mxu0 0.0
    %1321 = vmatprep.subr.mxu0 0.0
    %1322 = vmatpush1.msra.mxu0 0.0
    %1323 = vmatprep.subr.mxu0 0.0
    %1324 = vmatpush1.msra.mxu0 0.0
    %1325 = vmatprep.subr.mxu0 0.0
    %1326 = vmatpush1.msra.mxu0 0.0
    %1327 = vmatprep.subr.mxu0 0.0
    %1328 = vmatpush1.msra.mxu0 0.0
    %1329 = vmatprep.subr.mxu0 0.0
    %1330 = vmatpush1.msra.mxu0 0.0
    %1331 = vmatprep.subr.mxu0 0.0
    %1332 = vmatpush1.msra.mxu0 0.0
    %1333 = vmatprep.subr.mxu0 0.0
    %1334 = vmatpush1.msra.mxu0 0.0
    %1335 = vmatprep.subr.mxu0 0.0
    %1336 = vmatpush1.msra.mxu0 0.0
    %1337 = vmatprep.subr.mxu0 0.0
    %1338 = vmatpush1.msra.mxu0 0.0
    %1339 = vmatprep.subr.mxu0 0.0
    %1340 = vmatpush1.msra.mxu0 0.0
    %1341 = vmatprep.subr.mxu0 0.0
    %1342 = vmatpush1.msra.mxu0 0.0
    %1343 = vmatprep.subr.mxu0 0.0
    %1344 = vmatpush1.msra.mxu0 0.0
    %1345 = vmatprep.subr.mxu0 0.0
    %1346 = vmatpush1.msra.mxu0 0.0
    %1347 = vmatprep.subr.mxu0 0.0
    %1348 = vmatpush1.msra.mxu0 0.0
    %1349 = vmatprep.subr.mxu0 0.0
    %1350 = vmatpush1.msra.mxu0 0.0
    %1351 = vmatprep.subr.mxu0 0.0
    %1352 = vmatpush1.msra.mxu0 0.0
    %1353 = vmatprep.subr.mxu0 0.0
    %1354 = vmatpush1.msra.mxu0 0.0
    %1355 = vmatprep.subr.mxu0 0.0
    %1356 = vmatpush1.msra.mxu0 0.0
    %1357 = vmatprep.subr.mxu0 0.0
    %1358 = vmatpush1.msra.mxu0 0.0
    %1359 = vmatprep.subr.mxu0 0.0
    %1360 = vmatpush1.msra.mxu0 0.0
    %1361 = vmatprep.subr.mxu0 0.0
    %1362 = vmatpush1.msra.mxu0 0.0
    %1363 = vmatprep.subr.mxu0 0.0
    %1364 = vmatpush1.msra.mxu0 0.0
    %1365 = vmatprep.subr.mxu0 0.0
    %1366 = vmatpush1.msra.mxu0 0.0
    %1367 = vmatprep.subr.mxu0 0.0
    %1368 = vmatpush1.msra.mxu0 0.0
    %1369 = vmatprep.subr.mxu0 0.0
    %1370 = vmatpush1.msra.mxu0 0.0
    %1371 = vmatprep.subr.mxu0 0.0
    %1372 = vmatpush1.msra.mxu0 0.0
    %1373 = vmatprep.mubr.f32.mxu0 0.0
    %1374 = vmatmul.mubr.f32.gmra.mrb[0].mxu0 %v1307
    %v1375 = vpop.f32.mrb[0].mxu0
    %v1376 = vadd.f32 0.0, %v1375
    %v1377 = vpop.f32.mrb[0].mxu0
    %1378 = vdwg.mxu0
    %v1379 = vrot.slane %v1270, 6
    %1380 = vrot.lane.b32.xlu0 %v1379, 64
    %v1381 = vpop.permute.xlu0 %1380
    %v1383 = vadd.f32 %v1376, %v1381
    %v1384 = vxor.u32 %v1383, 2147483648
    %v1385 = vmul.f32 %v1384, 1.442695
    %v1386 = vpow.pop %v1385
    %v1387 = vadd.f32 %v1386, 1.0
    %v1388 = vrcp.pop %v1387
    %v1389 = vmul.f32 1.0, %v1388
    %1390 = vrot.lane.b32.xlu0 %v1379, 48
    %v1391 = vpop.permute.xlu0 %1390
    %v1393 = vadd.f32 %v1376, %v1391
    %1394 = vrot.lane.b32.xlu0 %v1379, 32
    %v1395 = vpop.permute.xlu0 %1394
    %v1397 = vmul.f32 %v1389, %v1395
    %1399 = vrot.lane.b32.xlu0 %v1397, 32
    %v1400 = vpop.permute.xlu0 %1399
    %v1402 = vadd.f32 %v1393, %v1400
    %v1403 = vtanh.pop %v1402
    %v1404 = vsub.f32 %v1115, %v1403
    %1406 = vrot.lane.b32.xlu0 %v1404, 112
    %v1407 = vpop.permute.xlu0 %1406
    %v1409 = vmul.f32 %v1389, %v1407
    %1411 = vrot.lane.b32.xlu0 %v1409, 16
    %v1412 = vpop.permute.xlu0 %1411
    %v1414 = vadd.f32 %v1403, %v1412
    %1416 = vrot.lane.b32.xlu0 %v1414, 96
    %v1417 = vpop.permute.xlu0 %1416
    %1419 = vst.msk [vmem:[#allocation3 + $0x6] sm:$0x3] %vm62, %v1417
    %1420 = vmatprep.subr.mxu0 0.0
    %1421 = vmatpush1.msra.mxu0 %v229
    %1422 = vmatprep.subr.mxu0 0.0
    %1423 = vmatpush1.msra.mxu0 %v230
    %1424 = vmatprep.subr.mxu0 0.0
    %1425 = vmatpush1.msra.mxu0 0.0
    %1426 = vmatprep.subr.mxu0 0.0
    %1427 = vmatpush1.msra.mxu0 0.0
    %1428 = vmatprep.subr.mxu0 0.0
    %1429 = vmatpush1.msra.mxu0 0.0
    %1430 = vmatprep.subr.mxu0 0.0
    %1431 = vmatpush1.msra.mxu0 0.0
    %1432 = vmatprep.subr.mxu0 0.0
    %1433 = vmatpush1.msra.mxu0 0.0
    %1434 = vmatprep.subr.mxu0 0.0
    %1435 = vmatpush1.msra.mxu0 0.0
    %1436 = vmatprep.subr.mxu0 0.0
    %1437 = vmatpush1.msra.mxu0 0.0
    %1438 = vmatprep.subr.mxu0 0.0
    %1439 = vmatpush1.msra.mxu0 0.0
    %1440 = vmatprep.subr.mxu0 0.0
    %1441 = vmatpush1.msra.mxu0 0.0
    %1442 = vmatprep.subr.mxu0 0.0
    %1443 = vmatpush1.msra.mxu0 0.0
    %1444 = vmatprep.subr.mxu0 0.0
    %1445 = vmatpush1.msra.mxu0 0.0
    %1446 = vmatprep.subr.mxu0 0.0
    %1447 = vmatpush1.msra.mxu0 0.0
    %1448 = vmatprep.subr.mxu0 0.0
    %1449 = vmatpush1.msra.mxu0 0.0
    %1450 = vmatprep.subr.mxu0 0.0
    %1451 = vmatpush1.msra.mxu0 0.0
    %1452 = vmatprep.subr.mxu0 0.0
    %1453 = vmatpush1.msra.mxu0 0.0
    %1454 = vmatprep.subr.mxu0 0.0
    %1455 = vmatpush1.msra.mxu0 0.0
    %1456 = vmatprep.subr.mxu0 0.0
    %1457 = vmatpush1.msra.mxu0 0.0
    %1458 = vmatprep.subr.mxu0 0.0
    %1459 = vmatpush1.msra.mxu0 0.0
    %1460 = vmatprep.subr.mxu0 0.0
    %1461 = vmatpush1.msra.mxu0 0.0
    %1462 = vmatprep.subr.mxu0 0.0
    %1463 = vmatpush1.msra.mxu0 0.0
    %1464 = vmatprep.subr.mxu0 0.0
    %1465 = vmatpush1.msra.mxu0 0.0
    %1466 = vmatprep.subr.mxu0 0.0
    %1467 = vmatpush1.msra.mxu0 0.0
    %1468 = vmatprep.subr.mxu0 0.0
    %1469 = vmatpush1.msra.mxu0 0.0
    %1470 = vmatprep.subr.mxu0 0.0
    %1471 = vmatpush1.msra.mxu0 0.0
    %1472 = vmatprep.subr.mxu0 0.0
    %1473 = vmatpush1.msra.mxu0 0.0
    %1474 = vmatprep.subr.mxu0 0.0
    %1475 = vmatpush1.msra.mxu0 0.0
    %1476 = vmatprep.subr.mxu0 0.0
    %1477 = vmatpush1.msra.mxu0 0.0
    %1478 = vmatprep.subr.mxu0 0.0
    %1479 = vmatpush1.msra.mxu0 0.0
    %1480 = vmatprep.subr.mxu0 0.0
    %1481 = vmatpush1.msra.mxu0 0.0
    %1482 = vmatprep.subr.mxu0 0.0
    %1483 = vmatpush1.msra.mxu0 0.0
    %1484 = vmatprep.mubr.f32.mxu0 0.0
    %1485 = vmatmul.mubr.f32.gmra.mrb[0].mxu0 %v1307
    %v1486 = vpop.f32.mrb[0].mxu0
    %v1487 = vadd.f32 0.0, %v1486
    %v1488 = vpop.f32.mrb[0].mxu0
    %1489 = vdwg.mxu0
    %v1490 = vadd.f32 %v221, %v1487
    %v1491 = vsel %vm59, %v1417, 0
    %1493 = vmatprep.subr.mxu0 0.0
    %1494 = vmatpush1.msra.mxu0 %v231
    %1495 = vmatprep.subr.mxu0 0.0
    %1496 = vmatpush1.msra.mxu0 %v232
    %1497 = vmatprep.subr.mxu0 0.0
    %1498 = vmatpush1.msra.mxu0 0.0
    %1499 = vmatprep.subr.mxu0 0.0
    %1500 = vmatpush1.msra.mxu0 0.0
    %1501 = vmatprep.subr.mxu0 0.0
    %1502 = vmatpush1.msra.mxu0 0.0
    %1503 = vmatprep.subr.mxu0 0.0
    %1504 = vmatpush1.msra.mxu0 0.0
    %1505 = vmatprep.subr.mxu0 0.0
    %1506 = vmatpush1.msra.mxu0 0.0
    %1507 = vmatprep.subr.mxu0 0.0
    %1508 = vmatpush1.msra.mxu0 0.0
    %1509 = vmatprep.subr.mxu0 0.0
    %1510 = vmatpush1.msra.mxu0 0.0
    %1511 = vmatprep.subr.mxu0 0.0
    %1512 = vmatpush1.msra.mxu0 0.0
    %1513 = vmatprep.subr.mxu0 0.0
    %1514 = vmatpush1.msra.mxu0 0.0
    %1515 = vmatprep.subr.mxu0 0.0
    %1516 = vmatpush1.msra.mxu0 0.0
    %1517 = vmatprep.subr.mxu0 0.0
    %1518 = vmatpush1.msra.mxu0 0.0
    %1519 = vmatprep.subr.mxu0 0.0
    %1520 = vmatpush1.msra.mxu0 0.0
    %1521 = vmatprep.subr.mxu0 0.0
    %1522 = vmatpush1.msra.mxu0 0.0
    %1523 = vmatprep.subr.mxu0 0.0
    %1524 = vmatpush1.msra.mxu0 0.0
    %1525 = vmatprep.subr.mxu0 0.0
    %1526 = vmatpush1.msra.mxu0 0.0
    %1527 = vmatprep.subr.mxu0 0.0
    %1528 = vmatpush1.msra.mxu0 0.0
    %1529 = vmatprep.subr.mxu0 0.0
    %1530 = vmatpush1.msra.mxu0 0.0
    %1531 = vmatprep.subr.mxu0 0.0
    %1532 = vmatpush1.msra.mxu0 0.0
    %1533 = vmatprep.subr.mxu0 0.0
    %1534 = vmatpush1.msra.mxu0 0.0
    %1535 = vmatprep.subr.mxu0 0.0
    %1536 = vmatpush1.msra.mxu0 0.0
    %1537 = vmatprep.subr.mxu0 0.0
    %1538 = vmatpush1.msra.mxu0 0.0
    %1539 = vmatprep.subr.mxu0 0.0
    %1540 = vmatpush1.msra.mxu0 0.0
    %1541 = vmatprep.subr.mxu0 0.0
    %1542 = vmatpush1.msra.mxu0 0.0
    %1543 = vmatprep.subr.mxu0 0.0
    %1544 = vmatpush1.msra.mxu0 0.0
    %1545 = vmatprep.subr.mxu0 0.0
    %1546 = vmatpush1.msra.mxu0 0.0
    %1547 = vmatprep.subr.mxu0 0.0
    %1548 = vmatpush1.msra.mxu0 0.0
    %1549 = vmatprep.subr.mxu0 0.0
    %1550 = vmatpush1.msra.mxu0 0.0
    %1551 = vmatprep.subr.mxu0 0.0
    %1552 = vmatpush1.msra.mxu0 0.0
    %1553 = vmatprep.subr.mxu0 0.0
    %1554 = vmatpush1.msra.mxu0 0.0
    %1555 = vmatprep.subr.mxu0 0.0
    %1556 = vmatpush1.msra.mxu0 0.0
    %1557 = vmatprep.mubr.f32.mxu0 0.0
    %1558 = vmatmul.mubr.f32.gmra.mrb[0].mxu0 %v1491
    %v1559 = vpop.f32.mrb[0].mxu0
    %v1560 = vadd.f32 0.0, %v1559
    %v1561 = vpop.f32.mrb[0].mxu0
    %1562 = vdwg.mxu0
    %v1563 = vadd.f32 %v1490, %v1560
    %v1564 = vxor.u32 %v1563, 2147483648
    %v1565 = vmul.f32 %v1564, 1.442695
    %v1566 = vpow.pop %v1565
    %v1567 = vadd.f32 %v1566, 1.0
    %v1568 = vrcp.pop %v1567
    %v1569 = vmul.f32 1.0, %v1568
    %1571 = vrot.lane.b32.xlu0 %v1563, 80
    %v1572 = vpop.permute.xlu0 %1571
    %v1574 = vmul.f32 %v1569, %v1572
    %1576 = vrot.lane.b32.xlu0 %v1574, 32
    %v1577 = vpop.permute.xlu0 %1576
    %v1579 = vadd.f32 %v1563, %v1577
    %v1580 = vtanh.pop %v1579
    %v1582 = vrot.slane %v1580, 2
    %v1584 = vsub.f32 %v1302, %v1582
    %v1586 = vrot.slane %v1584, 6
    %1587 = vrot.lane.b32.xlu0 %v1586, 112
    %v1588 = vpop.permute.xlu0 %1587
    %v1590 = vmul.f32 %v1569, %v1588
    %1592 = vrot.lane.b32.xlu0 %v1590, 16
    %v1593 = vpop.permute.xlu0 %1592
    %v1595 = vadd.f32 %v1580, %v1593
    %1597 = vrot.lane.b32.xlu0 %v1595, 96
    %v1598 = vpop.permute.xlu0 %1597
    %v1599 = vsel %vm59, %v1598, 0
    %1601 = vmatprep.subr.mxu0 0.0
    %1602 = vmatpush1.msra.mxu0 %v233
    %1603 = vmatprep.subr.mxu0 0.0
    %1604 = vmatpush1.msra.mxu0 %v234
    %1605 = vmatprep.subr.mxu0 0.0
    %1606 = vmatpush1.msra.mxu0 0.0
    %1607 = vmatprep.subr.mxu0 0.0
    %1608 = vmatpush1.msra.mxu0 0.0
    %1609 = vmatprep.subr.mxu0 0.0
    %1610 = vmatpush1.msra.mxu0 0.0
    %1611 = vmatprep.subr.mxu0 0.0
    %1612 = vmatpush1.msra.mxu0 0.0
    %1613 = vmatprep.subr.mxu0 0.0
    %1614 = vmatpush1.msra.mxu0 0.0
    %1615 = vmatprep.subr.mxu0 0.0
    %1616 = vmatpush1.msra.mxu0 0.0
    %1617 = vmatprep.subr.mxu0 0.0
    %1618 = vmatpush1.msra.mxu0 0.0
    %1619 = vmatprep.subr.mxu0 0.0
    %1620 = vmatpush1.msra.mxu0 0.0
    %1621 = vmatprep.subr.mxu0 0.0
    %1622 = vmatpush1.msra.mxu0 0.0
    %1623 = vmatprep.subr.mxu0 0.0
    %1624 = vmatpush1.msra.mxu0 0.0
    %1625 = vmatprep.subr.mxu0 0.0
    %1626 = vmatpush1.msra.mxu0 0.0
    %1627 = vmatprep.subr.mxu0 0.0
    %1628 = vmatpush1.msra.mxu0 0.0
    %1629 = vmatprep.subr.mxu0 0.0
    %1630 = vmatpush1.msra.mxu0 0.0
    %1631 = vmatprep.subr.mxu0 0.0
    %1632 = vmatpush1.msra.mxu0 0.0
    %1633 = vmatprep.subr.mxu0 0.0
    %1634 = vmatpush1.msra.mxu0 0.0
    %1635 = vmatprep.subr.mxu0 0.0
    %1636 = vmatpush1.msra.mxu0 0.0
    %1637 = vmatprep.subr.mxu0 0.0
    %1638 = vmatpush1.msra.mxu0 0.0
    %1639 = vmatprep.subr.mxu0 0.0
    %1640 = vmatpush1.msra.mxu0 0.0
    %1641 = vmatprep.subr.mxu0 0.0
    %1642 = vmatpush1.msra.mxu0 0.0
    %1643 = vmatprep.subr.mxu0 0.0
    %1644 = vmatpush1.msra.mxu0 0.0
    %1645 = vmatprep.subr.mxu0 0.0
    %1646 = vmatpush1.msra.mxu0 0.0
    %1647 = vmatprep.subr.mxu0 0.0
    %1648 = vmatpush1.msra.mxu0 0.0
    %1649 = vmatprep.subr.mxu0 0.0
    %1650 = vmatpush1.msra.mxu0 0.0
    %1651 = vmatprep.subr.mxu0 0.0
    %1652 = vmatpush1.msra.mxu0 0.0
    %1653 = vmatprep.subr.mxu0 0.0
    %1654 = vmatpush1.msra.mxu0 0.0
    %1655 = vmatprep.subr.mxu0 0.0
    %1656 = vmatpush1.msra.mxu0 0.0
    %1657 = vmatprep.subr.mxu0 0.0
    %1658 = vmatpush1.msra.mxu0 0.0
    %1659 = vmatprep.subr.mxu0 0.0
    %1660 = vmatpush1.msra.mxu0 0.0
    %1661 = vmatprep.subr.mxu0 0.0
    %1662 = vmatpush1.msra.mxu0 0.0
    %1663 = vmatprep.subr.mxu0 0.0
    %1664 = vmatpush1.msra.mxu0 0.0
    %1665 = vmatprep.mubr.f32.mxu0 0.0
    %1666 = vmatmul.mubr.f32.gmra.mrb[0].mxu0 %v1599
    %v1667 = vpop.f32.mrb[0].mxu0
    %v1668 = vadd.f32 0.0, %v1667
    %v1669 = vpop.f32.mrb[0].mxu0
    %1670 = vdwg.mxu0
    %1671 = vrot.lane.b32.xlu0 %v1563, 64
    %v1672 = vpop.permute.xlu0 %1671
    %v1674 = vadd.f32 %v1668, %v1672
    %v1675 = vxor.u32 %v1674, 2147483648
    %v1676 = vmul.f32 %v1675, 1.442695
    %v1677 = vpow.pop %v1676
    %v1678 = vadd.f32 %v1677, 1.0
    %v1679 = vrcp.pop %v1678
    %v1680 = vmul.f32 1.0, %v1679
    %1681 = vrot.lane.b32.xlu0 %v1563, 48
    %v1682 = vpop.permute.xlu0 %1681
    %v1684 = vadd.f32 %v1668, %v1682
    %1685 = vrot.lane.b32.xlu0 %v1563, 32
    %v1686 = vpop.permute.xlu0 %1685
    %v1688 = vmul.f32 %v1680, %v1686
    %1690 = vrot.lane.b32.xlu0 %v1688, 32
    %v1691 = vpop.permute.xlu0 %1690
    %v1693 = vadd.f32 %v1684, %v1691
    %v1694 = vtanh.pop %v1693
    %v1695 = vsub.f32 %v1414, %v1694
    %1697 = vrot.lane.b32.xlu0 %v1695, 112
    %v1698 = vpop.permute.xlu0 %1697
    %v1700 = vmul.f32 %v1680, %v1698
    %1702 = vrot.lane.b32.xlu0 %v1700, 16
    %v1703 = vpop.permute.xlu0 %1702
    %v1705 = vadd.f32 %v1694, %v1703
    %1707 = vrot.lane.b32.xlu0 %v1705, 96
    %v1708 = vpop.permute.xlu0 %1707
    %1710 = vst.msk [vmem:[#allocation3 + $0x8] sm:$0x3] %vm62, %v1708
    %1711 = vmatprep.subr.mxu0 0.0
    %1712 = vmatpush1.msra.mxu0 %v229
    %1713 = vmatprep.subr.mxu0 0.0
    %1714 = vmatpush1.msra.mxu0 %v230
    %1715 = vmatprep.subr.mxu0 0.0
    %1716 = vmatpush1.msra.mxu0 0.0
    %1717 = vmatprep.subr.mxu0 0.0
    %1718 = vmatpush1.msra.mxu0 0.0
    %1719 = vmatprep.subr.mxu0 0.0
    %1720 = vmatpush1.msra.mxu0 0.0
    %1721 = vmatprep.subr.mxu0 0.0
    %1722 = vmatpush1.msra.mxu0 0.0
    %1723 = vmatprep.subr.mxu0 0.0
    %1724 = vmatpush1.msra.mxu0 0.0
    %1725 = vmatprep.subr.mxu0 0.0
    %1726 = vmatpush1.msra.mxu0 0.0
    %1727 = vmatprep.subr.mxu0 0.0
    %1728 = vmatpush1.msra.mxu0 0.0
    %1729 = vmatprep.subr.mxu0 0.0
    %1730 = vmatpush1.msra.mxu0 0.0
    %1731 = vmatprep.subr.mxu0 0.0
    %1732 = vmatpush1.msra.mxu0 0.0
    %1733 = vmatprep.subr.mxu0 0.0
    %1734 = vmatpush1.msra.mxu0 0.0
    %1735 = vmatprep.subr.mxu0 0.0
    %1736 = vmatpush1.msra.mxu0 0.0
    %1737 = vmatprep.subr.mxu0 0.0
    %1738 = vmatpush1.msra.mxu0 0.0
    %1739 = vmatprep.subr.mxu0 0.0
    %1740 = vmatpush1.msra.mxu0 0.0
    %1741 = vmatprep.subr.mxu0 0.0
    %1742 = vmatpush1.msra.mxu0 0.0
    %1743 = vmatprep.subr.mxu0 0.0
    %1744 = vmatpush1.msra.mxu0 0.0
    %1745 = vmatprep.subr.mxu0 0.0
    %1746 = vmatpush1.msra.mxu0 0.0
    %1747 = vmatprep.subr.mxu0 0.0
    %1748 = vmatpush1.msra.mxu0 0.0
    %1749 = vmatprep.subr.mxu0 0.0
    %1750 = vmatpush1.msra.mxu0 0.0
    %1751 = vmatprep.subr.mxu0 0.0
    %1752 = vmatpush1.msra.mxu0 0.0
    %1753 = vmatprep.subr.mxu0 0.0
    %1754 = vmatpush1.msra.mxu0 0.0
    %1755 = vmatprep.subr.mxu0 0.0
    %1756 = vmatpush1.msra.mxu0 0.0
    %1757 = vmatprep.subr.mxu0 0.0
    %1758 = vmatpush1.msra.mxu0 0.0
    %1759 = vmatprep.subr.mxu0 0.0
    %1760 = vmatpush1.msra.mxu0 0.0
    %1761 = vmatprep.subr.mxu0 0.0
    %1762 = vmatpush1.msra.mxu0 0.0
    %1763 = vmatprep.subr.mxu0 0.0
    %1764 = vmatpush1.msra.mxu0 0.0
    %1765 = vmatprep.subr.mxu0 0.0
    %1766 = vmatpush1.msra.mxu0 0.0
    %1767 = vmatprep.subr.mxu0 0.0
    %1768 = vmatpush1.msra.mxu0 0.0
    %1769 = vmatprep.subr.mxu0 0.0
    %1770 = vmatpush1.msra.mxu0 0.0
    %1771 = vmatprep.subr.mxu0 0.0
    %1772 = vmatpush1.msra.mxu0 0.0
    %1773 = vmatprep.subr.mxu0 0.0
    %1774 = vmatpush1.msra.mxu0 0.0
    %1775 = vmatprep.mubr.f32.mxu0 0.0
    %1776 = vmatmul.mubr.f32.gmra.mrb[0].mxu0 %v1599
    %v1777 = vpop.f32.mrb[0].mxu0
    %v1778 = vadd.f32 0.0, %v1777
    %v1779 = vpop.f32.mrb[0].mxu0
    %1780 = vdwg.mxu0
    %v1782 = vrot.slane %v1778, 6
    %v1784 = vadd.f32 %v221, %v1782
    %v1785 = vsel %vm59, %v1708, 0
    %1787 = vmatprep.subr.mxu0 0.0
    %1788 = vmatpush1.msra.mxu0 %v231
    %1789 = vmatprep.subr.mxu0 0.0
    %1790 = vmatpush1.msra.mxu0 %v232
    %1791 = vmatprep.subr.mxu0 0.0
    %1792 = vmatpush1.msra.mxu0 0.0
    %1793 = vmatprep.subr.mxu0 0.0
    %1794 = vmatpush1.msra.mxu0 0.0
    %1795 = vmatprep.subr.mxu0 0.0
    %1796 = vmatpush1.msra.mxu0 0.0
    %1797 = vmatprep.subr.mxu0 0.0
    %1798 = vmatpush1.msra.mxu0 0.0
    %1799 = vmatprep.subr.mxu0 0.0
    %1800 = vmatpush1.msra.mxu0 0.0
    %1801 = vmatprep.subr.mxu0 0.0
    %1802 = vmatpush1.msra.mxu0 0.0
    %1803 = vmatprep.subr.mxu0 0.0
    %1804 = vmatpush1.msra.mxu0 0.0
    %1805 = vmatprep.subr.mxu0 0.0
    %1806 = vmatpush1.msra.mxu0 0.0
    %1807 = vmatprep.subr.mxu0 0.0
    %1808 = vmatpush1.msra.mxu0 0.0
    %1809 = vmatprep.subr.mxu0 0.0
    %1810 = vmatpush1.msra.mxu0 0.0
    %1811 = vmatprep.subr.mxu0 0.0
    %1812 = vmatpush1.msra.mxu0 0.0
    %1813 = vmatprep.subr.mxu0 0.0
    %1814 = vmatpush1.msra.mxu0 0.0
    %1815 = vmatprep.subr.mxu0 0.0
    %1816 = vmatpush1.msra.mxu0 0.0
    %1817 = vmatprep.subr.mxu0 0.0
    %1818 = vmatpush1.msra.mxu0 0.0
    %1819 = vmatprep.subr.mxu0 0.0
    %1820 = vmatpush1.msra.mxu0 0.0
    %1821 = vmatprep.subr.mxu0 0.0
    %1822 = vmatpush1.msra.mxu0 0.0
    %1823 = vmatprep.subr.mxu0 0.0
    %1824 = vmatpush1.msra.mxu0 0.0
    %1825 = vmatprep.subr.mxu0 0.0
    %1826 = vmatpush1.msra.mxu0 0.0
    %1827 = vmatprep.subr.mxu0 0.0
    %1828 = vmatpush1.msra.mxu0 0.0
    %1829 = vmatprep.subr.mxu0 0.0
    %1830 = vmatpush1.msra.mxu0 0.0
    %1831 = vmatprep.subr.mxu0 0.0
    %1832 = vmatpush1.msra.mxu0 0.0
    %1833 = vmatprep.subr.mxu0 0.0
    %1834 = vmatpush1.msra.mxu0 0.0
    %1835 = vmatprep.subr.mxu0 0.0
    %1836 = vmatpush1.msra.mxu0 0.0
    %1837 = vmatprep.subr.mxu0 0.0
    %1838 = vmatpush1.msra.mxu0 0.0
    %1839 = vmatprep.subr.mxu0 0.0
    %1840 = vmatpush1.msra.mxu0 0.0
    %1841 = vmatprep.subr.mxu0 0.0
    %1842 = vmatpush1.msra.mxu0 0.0
    %1843 = vmatprep.subr.mxu0 0.0
    %1844 = vmatpush1.msra.mxu0 0.0
    %1845 = vmatprep.subr.mxu0 0.0
    %1846 = vmatpush1.msra.mxu0 0.0
    %1847 = vmatprep.subr.mxu0 0.0
    %1848 = vmatpush1.msra.mxu0 0.0
    %1849 = vmatprep.subr.mxu0 0.0
    %1850 = vmatpush1.msra.mxu0 0.0
    %1851 = vmatprep.mubr.f32.mxu0 0.0
    %1852 = vmatmul.mubr.f32.gmra.mrb[0].mxu0 %v1785
    %v1853 = vpop.f32.mrb[0].mxu0
    %v1854 = vadd.f32 0.0, %v1853
    %v1855 = vpop.f32.mrb[0].mxu0
    %1856 = vdwg.mxu0
    %v1858 = vrot.slane %v1854, 6
    %v1860 = vadd.f32 %v1784, %v1858
    %v1861 = vxor.u32 %v1860, 2147483648
    %v1862 = vmul.f32 %v1861, 1.442695
    %v1863 = vpow.pop %v1862
    %v1864 = vadd.f32 %v1863, 1.0
    %v1865 = vrcp.pop %v1864
    %v1866 = vmul.f32 1.0, %v1865
    %1868 = vrot.lane.b32.xlu0 %v1860, 80
    %v1869 = vpop.permute.xlu0 %1868
    %v1871 = vmul.f32 %v1866, %v1869
    %1873 = vrot.lane.b32.xlu0 %v1871, 32
    %v1874 = vpop.permute.xlu0 %1873
    %v1876 = vadd.f32 %v1860, %v1874
    %v1877 = vtanh.pop %v1876
    %v1879 = vrot.slane %v1877, 2
    %v1881 = vsub.f32 %v1595, %v1879
    %v1883 = vrot.slane %v1881, 6
    %1884 = vrot.lane.b32.xlu0 %v1883, 112
    %v1885 = vpop.permute.xlu0 %1884
    %v1887 = vmul.f32 %v1866, %v1885
    %1889 = vrot.lane.b32.xlu0 %v1887, 16
    %v1890 = vpop.permute.xlu0 %1889
    %v1892 = vadd.f32 %v1877, %v1890
    %v1894 = vrot.slane %v1892, 2
    %1895 = vrot.lane.b32.xlu0 %v1894, 96
    %v1896 = vpop.permute.xlu0 %1895
    %v1897 = vsel %vm59, %v1896, 0
    %1899 = vmatprep.subr.mxu0 0.0
    %1900 = vmatpush1.msra.mxu0 %v233
    %1901 = vmatprep.subr.mxu0 0.0
    %1902 = vmatpush1.msra.mxu0 %v234
    %1903 = vmatprep.subr.mxu0 0.0
    %1904 = vmatpush1.msra.mxu0 0.0
    %1905 = vmatprep.subr.mxu0 0.0
    %1906 = vmatpush1.msra.mxu0 0.0
    %1907 = vmatprep.subr.mxu0 0.0
    %1908 = vmatpush1.msra.mxu0 0.0
    %1909 = vmatprep.subr.mxu0 0.0
    %1910 = vmatpush1.msra.mxu0 0.0
    %1911 = vmatprep.subr.mxu0 0.0
    %1912 = vmatpush1.msra.mxu0 0.0
    %1913 = vmatprep.subr.mxu0 0.0
    %1914 = vmatpush1.msra.mxu0 0.0
    %1915 = vmatprep.subr.mxu0 0.0
    %1916 = vmatpush1.msra.mxu0 0.0
    %1917 = vmatprep.subr.mxu0 0.0
    %1918 = vmatpush1.msra.mxu0 0.0
    %1919 = vmatprep.subr.mxu0 0.0
    %1920 = vmatpush1.msra.mxu0 0.0
    %1921 = vmatprep.subr.mxu0 0.0
    %1922 = vmatpush1.msra.mxu0 0.0
    %1923 = vmatprep.subr.mxu0 0.0
    %1924 = vmatpush1.msra.mxu0 0.0
    %1925 = vmatprep.subr.mxu0 0.0
    %1926 = vmatpush1.msra.mxu0 0.0
    %1927 = vmatprep.subr.mxu0 0.0
    %1928 = vmatpush1.msra.mxu0 0.0
    %1929 = vmatprep.subr.mxu0 0.0
    %1930 = vmatpush1.msra.mxu0 0.0
    %1931 = vmatprep.subr.mxu0 0.0
    %1932 = vmatpush1.msra.mxu0 0.0
    %1933 = vmatprep.subr.mxu0 0.0
    %1934 = vmatpush1.msra.mxu0 0.0
    %1935 = vmatprep.subr.mxu0 0.0
    %1936 = vmatpush1.msra.mxu0 0.0
    %1937 = vmatprep.subr.mxu0 0.0
    %1938 = vmatpush1.msra.mxu0 0.0
    %1939 = vmatprep.subr.mxu0 0.0
    %1940 = vmatpush1.msra.mxu0 0.0
    %1941 = vmatprep.subr.mxu0 0.0
    %1942 = vmatpush1.msra.mxu0 0.0
    %1943 = vmatprep.subr.mxu0 0.0
    %1944 = vmatpush1.msra.mxu0 0.0
    %1945 = vmatprep.subr.mxu0 0.0
    %1946 = vmatpush1.msra.mxu0 0.0
    %1947 = vmatprep.subr.mxu0 0.0
    %1948 = vmatpush1.msra.mxu0 0.0
    %1949 = vmatprep.subr.mxu0 0.0
    %1950 = vmatpush1.msra.mxu0 0.0
    %1951 = vmatprep.subr.mxu0 0.0
    %1952 = vmatpush1.msra.mxu0 0.0
    %1953 = vmatprep.subr.mxu0 0.0
    %1954 = vmatpush1.msra.mxu0 0.0
    %1955 = vmatprep.subr.mxu0 0.0
    %1956 = vmatpush1.msra.mxu0 0.0
    %1957 = vmatprep.subr.mxu0 0.0
    %1958 = vmatpush1.msra.mxu0 0.0
    %1959 = vmatprep.subr.mxu0 0.0
    %1960 = vmatpush1.msra.mxu0 0.0
    %1961 = vmatprep.subr.mxu0 0.0
    %1962 = vmatpush1.msra.mxu0 0.0
    %1963 = vmatprep.mubr.f32.mxu0 0.0
    %1964 = vmatmul.mubr.f32.gmra.mrb[0].mxu0 %v1897
    %v1965 = vpop.f32.mrb[0].mxu0
    %v1966 = vadd.f32 0.0, %v1965
    %v1967 = vpop.f32.mrb[0].mxu0
    %1968 = vdwg.mxu0
    %v1969 = vrot.slane %v1860, 2
    %1970 = vrot.lane.b32.xlu0 %v1969, 64
    %v1971 = vpop.permute.xlu0 %1970
    %v1973 = vadd.f32 %v1966, %v1971
    %v1974 = vxor.u32 %v1973, 2147483648
    %v1975 = vmul.f32 %v1974, 1.442695
    %v1976 = vpow.pop %v1975
    %v1977 = vadd.f32 %v1976, 1.0
    %v1978 = vrcp.pop %v1977
    %v1979 = vmul.f32 1.0, %v1978
    %1980 = vrot.lane.b32.xlu0 %v1969, 48
    %v1981 = vpop.permute.xlu0 %1980
    %v1983 = vadd.f32 %v1966, %v1981
    %1984 = vrot.lane.b32.xlu0 %v1969, 32
    %v1985 = vpop.permute.xlu0 %1984
    %v1987 = vmul.f32 %v1979, %v1985
    %1989 = vrot.lane.b32.xlu0 %v1987, 32
    %v1990 = vpop.permute.xlu0 %1989
    %v1992 = vadd.f32 %v1983, %v1990
    %v1993 = vtanh.pop %v1992
    %v1994 = vsub.f32 %v1705, %v1993
    %1996 = vrot.lane.b32.xlu0 %v1994, 112
    %v1997 = vpop.permute.xlu0 %1996
    %v1999 = vmul.f32 %v1979, %v1997
    %2001 = vrot.lane.b32.xlu0 %v1999, 16
    %v2002 = vpop.permute.xlu0 %2001
    %v2004 = vadd.f32 %v1993, %v2002
    %2006 = vrot.lane.b32.xlu0 %v2004, 96
    %v2007 = vpop.permute.xlu0 %2006
    %2009 = vst.msk [vmem:[#allocation3 + $0xa] sm:$0x3] %vm62, %v2007
    %2010 = vmatprep.subr.mxu0 0.0
    %2011 = vmatpush1.msra.mxu0 %v229
    %2012 = vmatprep.subr.mxu0 0.0
    %2013 = vmatpush1.msra.mxu0 %v230
    %2014 = vmatprep.subr.mxu0 0.0
    %2015 = vmatpush1.msra.mxu0 0.0
    %2016 = vmatprep.subr.mxu0 0.0
    %2017 = vmatpush1.msra.mxu0 0.0
    %2018 = vmatprep.subr.mxu0 0.0
    %2019 = vmatpush1.msra.mxu0 0.0
    %2020 = vmatprep.subr.mxu0 0.0
    %2021 = vmatpush1.msra.mxu0 0.0
    %2022 = vmatprep.subr.mxu0 0.0
    %2023 = vmatpush1.msra.mxu0 0.0
    %2024 = vmatprep.subr.mxu0 0.0
    %2025 = vmatpush1.msra.mxu0 0.0
    %2026 = vmatprep.subr.mxu0 0.0
    %2027 = vmatpush1.msra.mxu0 0.0
    %2028 = vmatprep.subr.mxu0 0.0
    %2029 = vmatpush1.msra.mxu0 0.0
    %2030 = vmatprep.subr.mxu0 0.0
    %2031 = vmatpush1.msra.mxu0 0.0
    %2032 = vmatprep.subr.mxu0 0.0
    %2033 = vmatpush1.msra.mxu0 0.0
    %2034 = vmatprep.subr.mxu0 0.0
    %2035 = vmatpush1.msra.mxu0 0.0
    %2036 = vmatprep.subr.mxu0 0.0
    %2037 = vmatpush1.msra.mxu0 0.0
    %2038 = vmatprep.subr.mxu0 0.0
    %2039 = vmatpush1.msra.mxu0 0.0
    %2040 = vmatprep.subr.mxu0 0.0
    %2041 = vmatpush1.msra.mxu0 0.0
    %2042 = vmatprep.subr.mxu0 0.0
    %2043 = vmatpush1.msra.mxu0 0.0
    %2044 = vmatprep.subr.mxu0 0.0
    %2045 = vmatpush1.msra.mxu0 0.0
    %2046 = vmatprep.subr.mxu0 0.0
    %2047 = vmatpush1.msra.mxu0 0.0
    %2048 = vmatprep.subr.mxu0 0.0
    %2049 = vmatpush1.msra.mxu0 0.0
    %2050 = vmatprep.subr.mxu0 0.0
    %2051 = vmatpush1.msra.mxu0 0.0
    %2052 = vmatprep.subr.mxu0 0.0
    %2053 = vmatpush1.msra.mxu0 0.0
    %2054 = vmatprep.subr.mxu0 0.0
    %2055 = vmatpush1.msra.mxu0 0.0
    %2056 = vmatprep.subr.mxu0 0.0
    %2057 = vmatpush1.msra.mxu0 0.0
    %2058 = vmatprep.subr.mxu0 0.0
    %2059 = vmatpush1.msra.mxu0 0.0
    %2060 = vmatprep.subr.mxu0 0.0
    %2061 = vmatpush1.msra.mxu0 0.0
    %2062 = vmatprep.subr.mxu0 0.0
    %2063 = vmatpush1.msra.mxu0 0.0
    %2064 = vmatprep.subr.mxu0 0.0
    %2065 = vmatpush1.msra.mxu0 0.0
    %2066 = vmatprep.subr.mxu0 0.0
    %2067 = vmatpush1.msra.mxu0 0.0
    %2068 = vmatprep.subr.mxu0 0.0
    %2069 = vmatpush1.msra.mxu0 0.0
    %2070 = vmatprep.subr.mxu0 0.0
    %2071 = vmatpush1.msra.mxu0 0.0
    %2072 = vmatprep.subr.mxu0 0.0
    %2073 = vmatpush1.msra.mxu0 0.0
    %2074 = vmatprep.mubr.f32.mxu0 0.0
    %2075 = vmatmul.mubr.f32.gmra.mrb[0].mxu0 %v1897
    %v2076 = vpop.f32.mrb[0].mxu0
    %v2077 = vadd.f32 0.0, %v2076
    %v2078 = vpop.f32.mrb[0].mxu0
    %2079 = vdwg.mxu0
    %v2081 = vrot.slane %v2077, 4
    %v2083 = vadd.f32 %v221, %v2081
    %v2084 = vsel %vm59, %v2007, 0
    %2086 = vmatprep.subr.mxu0 0.0
    %2087 = vmatpush1.msra.mxu0 %v231
    %2088 = vmatprep.subr.mxu0 0.0
    %2089 = vmatpush1.msra.mxu0 %v232
    %2090 = vmatprep.subr.mxu0 0.0
    %2091 = vmatpush1.msra.mxu0 0.0
    %2092 = vmatprep.subr.mxu0 0.0
    %2093 = vmatpush1.msra.mxu0 0.0
    %2094 = vmatprep.subr.mxu0 0.0
    %2095 = vmatpush1.msra.mxu0 0.0
    %2096 = vmatprep.subr.mxu0 0.0
    %2097 = vmatpush1.msra.mxu0 0.0
    %2098 = vmatprep.subr.mxu0 0.0
    %2099 = vmatpush1.msra.mxu0 0.0
    %2100 = vmatprep.subr.mxu0 0.0
    %2101 = vmatpush1.msra.mxu0 0.0
    %2102 = vmatprep.subr.mxu0 0.0
    %2103 = vmatpush1.msra.mxu0 0.0
    %2104 = vmatprep.subr.mxu0 0.0
    %2105 = vmatpush1.msra.mxu0 0.0
    %2106 = vmatprep.subr.mxu0 0.0
    %2107 = vmatpush1.msra.mxu0 0.0
    %2108 = vmatprep.subr.mxu0 0.0
    %2109 = vmatpush1.msra.mxu0 0.0
    %2110 = vmatprep.subr.mxu0 0.0
    %2111 = vmatpush1.msra.mxu0 0.0
    %2112 = vmatprep.subr.mxu0 0.0
    %2113 = vmatpush1.msra.mxu0 0.0
    %2114 = vmatprep.subr.mxu0 0.0
    %2115 = vmatpush1.msra.mxu0 0.0
    %2116 = vmatprep.subr.mxu0 0.0
    %2117 = vmatpush1.msra.mxu0 0.0
    %2118 = vmatprep.subr.mxu0 0.0
    %2119 = vmatpush1.msra.mxu0 0.0
    %2120 = vmatprep.subr.mxu0 0.0
    %2121 = vmatpush1.msra.mxu0 0.0
    %2122 = vmatprep.subr.mxu0 0.0
    %2123 = vmatpush1.msra.mxu0 0.0
    %2124 = vmatprep.subr.mxu0 0.0
    %2125 = vmatpush1.msra.mxu0 0.0
    %2126 = vmatprep.subr.mxu0 0.0
    %2127 = vmatpush1.msra.mxu0 0.0
    %2128 = vmatprep.subr.mxu0 0.0
    %2129 = vmatpush1.msra.mxu0 0.0
    %2130 = vmatprep.subr.mxu0 0.0
    %2131 = vmatpush1.msra.mxu0 0.0
    %2132 = vmatprep.subr.mxu0 0.0
    %2133 = vmatpush1.msra.mxu0 0.0
    %2134 = vmatprep.subr.mxu0 0.0
    %2135 = vmatpush1.msra.mxu0 0.0
    %2136 = vmatprep.subr.mxu0 0.0
    %2137 = vmatpush1.msra.mxu0 0.0
    %2138 = vmatprep.subr.mxu0 0.0
    %2139 = vmatpush1.msra.mxu0 0.0
    %2140 = vmatprep.subr.mxu0 0.0
    %2141 = vmatpush1.msra.mxu0 0.0
    %2142 = vmatprep.subr.mxu0 0.0
    %2143 = vmatpush1.msra.mxu0 0.0
    %2144 = vmatprep.subr.mxu0 0.0
    %2145 = vmatpush1.msra.mxu0 0.0
    %2146 = vmatprep.subr.mxu0 0.0
    %2147 = vmatpush1.msra.mxu0 0.0
    %2148 = vmatprep.subr.mxu0 0.0
    %2149 = vmatpush1.msra.mxu0 0.0
    %2150 = vmatprep.mubr.f32.mxu0 0.0
    %2151 = vmatmul.mubr.f32.gmra.mrb[0].mxu0 %v2084
    %v2152 = vpop.f32.mrb[0].mxu0
    %v2153 = vadd.f32 0.0, %v2152
    %v2154 = vpop.f32.mrb[0].mxu0
    %2155 = vdwg.mxu0
    %v2157 = vrot.slane %v2153, 4
    %v2159 = vadd.f32 %v2083, %v2157
    %v2160 = vxor.u32 %v2159, 2147483648
    %v2161 = vmul.f32 %v2160, 1.442695
    %v2162 = vpow.pop %v2161
    %v2163 = vadd.f32 %v2162, 1.0
    %v2164 = vrcp.pop %v2163
    %v2165 = vmul.f32 1.0, %v2164
    %2167 = vrot.lane.b32.xlu0 %v2159, 80
    %v2168 = vpop.permute.xlu0 %2167
    %v2170 = vmul.f32 %v2165, %v2168
    %2172 = vrot.lane.b32.xlu0 %v2170, 32
    %v2173 = vpop.permute.xlu0 %2172
    %v2175 = vadd.f32 %v2159, %v2173
    %v2176 = vtanh.pop %v2175
    %v2178 = vrot.slane %v2176, 2
    %v2180 = vsub.f32 %v1892, %v2178
    %v2182 = vrot.slane %v2180, 6
    %2183 = vrot.lane.b32.xlu0 %v2182, 112
    %v2184 = vpop.permute.xlu0 %2183
    %v2186 = vmul.f32 %v2165, %v2184
    %2188 = vrot.lane.b32.xlu0 %v2186, 16
    %v2189 = vpop.permute.xlu0 %2188
    %v2191 = vadd.f32 %v2176, %v2189
    %v2193 = vrot.slane %v2191, 4
    %2194 = vrot.lane.b32.xlu0 %v2193, 96
    %v2195 = vpop.permute.xlu0 %2194
    %v2196 = vsel %vm59, %v2195, 0
    %2198 = vmatprep.subr.mxu0 0.0
    %2199 = vmatpush1.msra.mxu0 %v233
    %2200 = vmatprep.subr.mxu0 0.0
    %2201 = vmatpush1.msra.mxu0 %v234
    %2202 = vmatprep.subr.mxu0 0.0
    %2203 = vmatpush1.msra.mxu0 0.0
    %2204 = vmatprep.subr.mxu0 0.0
    %2205 = vmatpush1.msra.mxu0 0.0
    %2206 = vmatprep.subr.mxu0 0.0
    %2207 = vmatpush1.msra.mxu0 0.0
    %2208 = vmatprep.subr.mxu0 0.0
    %2209 = vmatpush1.msra.mxu0 0.0
    %2210 = vmatprep.subr.mxu0 0.0
    %2211 = vmatpush1.msra.mxu0 0.0
    %2212 = vmatprep.subr.mxu0 0.0
    %2213 = vmatpush1.msra.mxu0 0.0
    %2214 = vmatprep.subr.mxu0 0.0
    %2215 = vmatpush1.msra.mxu0 0.0
    %2216 = vmatprep.subr.mxu0 0.0
    %2217 = vmatpush1.msra.mxu0 0.0
    %2218 = vmatprep.subr.mxu0 0.0
    %2219 = vmatpush1.msra.mxu0 0.0
    %2220 = vmatprep.subr.mxu0 0.0
    %2221 = vmatpush1.msra.mxu0 0.0
    %2222 = vmatprep.subr.mxu0 0.0
    %2223 = vmatpush1.msra.mxu0 0.0
    %2224 = vmatprep.subr.mxu0 0.0
    %2225 = vmatpush1.msra.mxu0 0.0
    %2226 = vmatprep.subr.mxu0 0.0
    %2227 = vmatpush1.msra.mxu0 0.0
    %2228 = vmatprep.subr.mxu0 0.0
    %2229 = vmatpush1.msra.mxu0 0.0
    %2230 = vmatprep.subr.mxu0 0.0
    %2231 = vmatpush1.msra.mxu0 0.0
    %2232 = vmatprep.subr.mxu0 0.0
    %2233 = vmatpush1.msra.mxu0 0.0
    %2234 = vmatprep.subr.mxu0 0.0
    %2235 = vmatpush1.msra.mxu0 0.0
    %2236 = vmatprep.subr.mxu0 0.0
    %2237 = vmatpush1.msra.mxu0 0.0
    %2238 = vmatprep.subr.mxu0 0.0
    %2239 = vmatpush1.msra.mxu0 0.0
    %2240 = vmatprep.subr.mxu0 0.0
    %2241 = vmatpush1.msra.mxu0 0.0
    %2242 = vmatprep.subr.mxu0 0.0
    %2243 = vmatpush1.msra.mxu0 0.0
    %2244 = vmatprep.subr.mxu0 0.0
    %2245 = vmatpush1.msra.mxu0 0.0
    %2246 = vmatprep.subr.mxu0 0.0
    %2247 = vmatpush1.msra.mxu0 0.0
    %2248 = vmatprep.subr.mxu0 0.0
    %2249 = vmatpush1.msra.mxu0 0.0
    %2250 = vmatprep.subr.mxu0 0.0
    %2251 = vmatpush1.msra.mxu0 0.0
    %2252 = vmatprep.subr.mxu0 0.0
    %2253 = vmatpush1.msra.mxu0 0.0
    %2254 = vmatprep.subr.mxu0 0.0
    %2255 = vmatpush1.msra.mxu0 0.0
    %2256 = vmatprep.subr.mxu0 0.0
    %2257 = vmatpush1.msra.mxu0 0.0
    %2258 = vmatprep.subr.mxu0 0.0
    %2259 = vmatpush1.msra.mxu0 0.0
    %2260 = vmatprep.subr.mxu0 0.0
    %2261 = vmatpush1.msra.mxu0 0.0
    %2262 = vmatprep.mubr.f32.mxu0 0.0
    %2263 = vmatmul.mubr.f32.gmra.mrb[0].mxu0 %v2196
    %v2264 = vpop.f32.mrb[0].mxu0
    %v2265 = vadd.f32 0.0, %v2264
    %v2266 = vpop.f32.mrb[0].mxu0
    %2267 = vdwg.mxu0
    %v2268 = vrot.slane %v2159, 4
    %2269 = vrot.lane.b32.xlu0 %v2268, 64
    %v2270 = vpop.permute.xlu0 %2269
    %v2272 = vadd.f32 %v2265, %v2270
    %v2273 = vxor.u32 %v2272, 2147483648
    %v2274 = vmul.f32 %v2273, 1.442695
    %v2275 = vpow.pop %v2274
    %v2276 = vadd.f32 %v2275, 1.0
    %v2277 = vrcp.pop %v2276
    %v2278 = vmul.f32 1.0, %v2277
    %2279 = vrot.lane.b32.xlu0 %v2268, 48
    %v2280 = vpop.permute.xlu0 %2279
    %v2282 = vadd.f32 %v2265, %v2280
    %2283 = vrot.lane.b32.xlu0 %v2268, 32
    %v2284 = vpop.permute.xlu0 %2283
    %v2286 = vmul.f32 %v2278, %v2284
    %2288 = vrot.lane.b32.xlu0 %v2286, 32
    %v2289 = vpop.permute.xlu0 %2288
    %v2291 = vadd.f32 %v2282, %v2289
    %v2292 = vtanh.pop %v2291
    %v2293 = vsub.f32 %v2004, %v2292
    %2295 = vrot.lane.b32.xlu0 %v2293, 112
    %v2296 = vpop.permute.xlu0 %2295
    %v2298 = vmul.f32 %v2278, %v2296
    %2300 = vrot.lane.b32.xlu0 %v2298, 16
    %v2301 = vpop.permute.xlu0 %2300
    %v2303 = vadd.f32 %v2292, %v2301
    %2305 = vrot.lane.b32.xlu0 %v2303, 96
    %v2306 = vpop.permute.xlu0 %2305
    %2308 = vst.msk [vmem:[#allocation3 + $0xc] sm:$0x3] %vm62, %v2306
    %2309 = vmatprep.subr.mxu0 0.0
    %2310 = vmatpush1.msra.mxu0 %v229
    %2311 = vmatprep.subr.mxu0 0.0
    %2312 = vmatpush1.msra.mxu0 %v230
    %2313 = vmatprep.subr.mxu0 0.0
    %2314 = vmatpush1.msra.mxu0 0.0
    %2315 = vmatprep.subr.mxu0 0.0
    %2316 = vmatpush1.msra.mxu0 0.0
    %2317 = vmatprep.subr.mxu0 0.0
    %2318 = vmatpush1.msra.mxu0 0.0
    %2319 = vmatprep.subr.mxu0 0.0
    %2320 = vmatpush1.msra.mxu0 0.0
    %2321 = vmatprep.subr.mxu0 0.0
    %2322 = vmatpush1.msra.mxu0 0.0
    %2323 = vmatprep.subr.mxu0 0.0
    %2324 = vmatpush1.msra.mxu0 0.0
    %2325 = vmatprep.subr.mxu0 0.0
    %2326 = vmatpush1.msra.mxu0 0.0
    %2327 = vmatprep.subr.mxu0 0.0
    %2328 = vmatpush1.msra.mxu0 0.0
    %2329 = vmatprep.subr.mxu0 0.0
    %2330 = vmatpush1.msra.mxu0 0.0
    %2331 = vmatprep.subr.mxu0 0.0
    %2332 = vmatpush1.msra.mxu0 0.0
    %2333 = vmatprep.subr.mxu0 0.0
    %2334 = vmatpush1.msra.mxu0 0.0
    %2335 = vmatprep.subr.mxu0 0.0
    %2336 = vmatpush1.msra.mxu0 0.0
    %2337 = vmatprep.subr.mxu0 0.0
    %2338 = vmatpush1.msra.mxu0 0.0
    %2339 = vmatprep.subr.mxu0 0.0
    %2340 = vmatpush1.msra.mxu0 0.0
    %2341 = vmatprep.subr.mxu0 0.0
    %2342 = vmatpush1.msra.mxu0 0.0
    %2343 = vmatprep.subr.mxu0 0.0
    %2344 = vmatpush1.msra.mxu0 0.0
    %2345 = vmatprep.subr.mxu0 0.0
    %2346 = vmatpush1.msra.mxu0 0.0
    %2347 = vmatprep.subr.mxu0 0.0
    %2348 = vmatpush1.msra.mxu0 0.0
    %2349 = vmatprep.subr.mxu0 0.0
    %2350 = vmatpush1.msra.mxu0 0.0
    %2351 = vmatprep.subr.mxu0 0.0
    %2352 = vmatpush1.msra.mxu0 0.0
    %2353 = vmatprep.subr.mxu0 0.0
    %2354 = vmatpush1.msra.mxu0 0.0
    %2355 = vmatprep.subr.mxu0 0.0
    %2356 = vmatpush1.msra.mxu0 0.0
    %2357 = vmatprep.subr.mxu0 0.0
    %2358 = vmatpush1.msra.mxu0 0.0
    %2359 = vmatprep.subr.mxu0 0.0
    %2360 = vmatpush1.msra.mxu0 0.0
    %2361 = vmatprep.subr.mxu0 0.0
    %2362 = vmatpush1.msra.mxu0 0.0
    %2363 = vmatprep.subr.mxu0 0.0
    %2364 = vmatpush1.msra.mxu0 0.0
    %2365 = vmatprep.subr.mxu0 0.0
    %2366 = vmatpush1.msra.mxu0 0.0
    %2367 = vmatprep.subr.mxu0 0.0
    %2368 = vmatpush1.msra.mxu0 0.0
    %2369 = vmatprep.subr.mxu0 0.0
    %2370 = vmatpush1.msra.mxu0 0.0
    %2371 = vmatprep.subr.mxu0 0.0
    %2372 = vmatpush1.msra.mxu0 0.0
    %2373 = vmatprep.mubr.f32.mxu0 0.0
    %2374 = vmatmul.mubr.f32.gmra.mrb[0].mxu0 %v2196
    %v2375 = vpop.f32.mrb[0].mxu0
    %v2376 = vadd.f32 0.0, %v2375
    %v2377 = vpop.f32.mrb[0].mxu0
    %2378 = vdwg.mxu0
    %v2380 = vrot.slane %v2376, 2
    %v2382 = vadd.f32 %v221, %v2380
    %v2383 = vsel %vm59, %v2306, 0
    %2385 = vmatprep.subr.mxu0 0.0
    %2386 = vmatpush1.msra.mxu0 %v231
    %2387 = vmatprep.subr.mxu0 0.0
    %2388 = vmatpush1.msra.mxu0 %v232
    %2389 = vmatprep.subr.mxu0 0.0
    %2390 = vmatpush1.msra.mxu0 0.0
    %2391 = vmatprep.subr.mxu0 0.0
    %2392 = vmatpush1.msra.mxu0 0.0
    %2393 = vmatprep.subr.mxu0 0.0
    %2394 = vmatpush1.msra.mxu0 0.0
    %2395 = vmatprep.subr.mxu0 0.0
    %2396 = vmatpush1.msra.mxu0 0.0
    %2397 = vmatprep.subr.mxu0 0.0
    %2398 = vmatpush1.msra.mxu0 0.0
    %2399 = vmatprep.subr.mxu0 0.0
    %2400 = vmatpush1.msra.mxu0 0.0
    %2401 = vmatprep.subr.mxu0 0.0
    %2402 = vmatpush1.msra.mxu0 0.0
    %2403 = vmatprep.subr.mxu0 0.0
    %2404 = vmatpush1.msra.mxu0 0.0
    %2405 = vmatprep.subr.mxu0 0.0
    %2406 = vmatpush1.msra.mxu0 0.0
    %2407 = vmatprep.subr.mxu0 0.0
    %2408 = vmatpush1.msra.mxu0 0.0
    %2409 = vmatprep.subr.mxu0 0.0
    %2410 = vmatpush1.msra.mxu0 0.0
    %2411 = vmatprep.subr.mxu0 0.0
    %2412 = vmatpush1.msra.mxu0 0.0
    %2413 = vmatprep.subr.mxu0 0.0
    %2414 = vmatpush1.msra.mxu0 0.0
    %2415 = vmatprep.subr.mxu0 0.0
    %2416 = vmatpush1.msra.mxu0 0.0
    %2417 = vmatprep.subr.mxu0 0.0
    %2418 = vmatpush1.msra.mxu0 0.0
    %2419 = vmatprep.subr.mxu0 0.0
    %2420 = vmatpush1.msra.mxu0 0.0
    %2421 = vmatprep.subr.mxu0 0.0
    %2422 = vmatpush1.msra.mxu0 0.0
    %2423 = vmatprep.subr.mxu0 0.0
    %2424 = vmatpush1.msra.mxu0 0.0
    %2425 = vmatprep.subr.mxu0 0.0
    %2426 = vmatpush1.msra.mxu0 0.0
    %2427 = vmatprep.subr.mxu0 0.0
    %2428 = vmatpush1.msra.mxu0 0.0
    %2429 = vmatprep.subr.mxu0 0.0
    %2430 = vmatpush1.msra.mxu0 0.0
    %2431 = vmatprep.subr.mxu0 0.0
    %2432 = vmatpush1.msra.mxu0 0.0
    %2433 = vmatprep.subr.mxu0 0.0
    %2434 = vmatpush1.msra.mxu0 0.0
    %2435 = vmatprep.subr.mxu0 0.0
    %2436 = vmatpush1.msra.mxu0 0.0
    %2437 = vmatprep.subr.mxu0 0.0
    %2438 = vmatpush1.msra.mxu0 0.0
    %2439 = vmatprep.subr.mxu0 0.0
    %2440 = vmatpush1.msra.mxu0 0.0
    %2441 = vmatprep.subr.mxu0 0.0
    %2442 = vmatpush1.msra.mxu0 0.0
    %2443 = vmatprep.subr.mxu0 0.0
    %2444 = vmatpush1.msra.mxu0 0.0
    %2445 = vmatprep.subr.mxu0 0.0
    %2446 = vmatpush1.msra.mxu0 0.0
    %2447 = vmatprep.subr.mxu0 0.0
    %2448 = vmatpush1.msra.mxu0 0.0
    %2449 = vmatprep.mubr.f32.mxu0 0.0
    %2450 = vmatmul.mubr.f32.gmra.mrb[0].mxu0 %v2383
    %v2451 = vpop.f32.mrb[0].mxu0
    %v2452 = vadd.f32 0.0, %v2451
    %v2453 = vpop.f32.mrb[0].mxu0
    %2454 = vdwg.mxu0
    %v2456 = vrot.slane %v2452, 2
    %v2458 = vadd.f32 %v2382, %v2456
    %v2459 = vxor.u32 %v2458, 2147483648
    %v2460 = vmul.f32 %v2459, 1.442695
    %v2461 = vpow.pop %v2460
    %v2462 = vadd.f32 %v2461, 1.0
    %v2463 = vrcp.pop %v2462
    %v2464 = vmul.f32 1.0, %v2463
    %2466 = vrot.lane.b32.xlu0 %v2458, 80
    %v2467 = vpop.permute.xlu0 %2466
    %v2469 = vmul.f32 %v2464, %v2467
    %2471 = vrot.lane.b32.xlu0 %v2469, 32
    %v2472 = vpop.permute.xlu0 %2471
    %v2474 = vadd.f32 %v2458, %v2472
    %v2475 = vtanh.pop %v2474
    %v2477 = vrot.slane %v2475, 2
    %v2479 = vsub.f32 %v2191, %v2477
    %v2481 = vrot.slane %v2479, 6
    %2482 = vrot.lane.b32.xlu0 %v2481, 112
    %v2483 = vpop.permute.xlu0 %2482
    %v2485 = vmul.f32 %v2464, %v2483
    %2487 = vrot.lane.b32.xlu0 %v2485, 16
    %v2488 = vpop.permute.xlu0 %2487
    %v2490 = vadd.f32 %v2475, %v2488
    %v2492 = vrot.slane %v2490, 6
    %2493 = vrot.lane.b32.xlu0 %v2492, 96
    %v2494 = vpop.permute.xlu0 %2493
    %v2495 = vsel %vm59, %v2494, 0
    %2497 = vmatprep.subr.mxu0 0.0
    %2498 = vmatpush1.msra.mxu0 %v233
    %2499 = vmatprep.subr.mxu0 0.0
    %2500 = vmatpush1.msra.mxu0 %v234
    %2501 = vmatprep.subr.mxu0 0.0
    %2502 = vmatpush1.msra.mxu0 0.0
    %2503 = vmatprep.subr.mxu0 0.0
    %2504 = vmatpush1.msra.mxu0 0.0
    %2505 = vmatprep.subr.mxu0 0.0
    %2506 = vmatpush1.msra.mxu0 0.0
    %2507 = vmatprep.subr.mxu0 0.0
    %2508 = vmatpush1.msra.mxu0 0.0
    %2509 = vmatprep.subr.mxu0 0.0
    %2510 = vmatpush1.msra.mxu0 0.0
    %2511 = vmatprep.subr.mxu0 0.0
    %2512 = vmatpush1.msra.mxu0 0.0
    %2513 = vmatprep.subr.mxu0 0.0
    %2514 = vmatpush1.msra.mxu0 0.0
    %2515 = vmatprep.subr.mxu0 0.0
    %2516 = vmatpush1.msra.mxu0 0.0
    %2517 = vmatprep.subr.mxu0 0.0
    %2518 = vmatpush1.msra.mxu0 0.0
    %2519 = vmatprep.subr.mxu0 0.0
    %2520 = vmatpush1.msra.mxu0 0.0
    %2521 = vmatprep.subr.mxu0 0.0
    %2522 = vmatpush1.msra.mxu0 0.0
    %2523 = vmatprep.subr.mxu0 0.0
    %2524 = vmatpush1.msra.mxu0 0.0
    %2525 = vmatprep.subr.mxu0 0.0
    %2526 = vmatpush1.msra.mxu0 0.0
    %2527 = vmatprep.subr.mxu0 0.0
    %2528 = vmatpush1.msra.mxu0 0.0
    %2529 = vmatprep.subr.mxu0 0.0
    %2530 = vmatpush1.msra.mxu0 0.0
    %2531 = vmatprep.subr.mxu0 0.0
    %2532 = vmatpush1.msra.mxu0 0.0
    %2533 = vmatprep.subr.mxu0 0.0
    %2534 = vmatpush1.msra.mxu0 0.0
    %2535 = vmatprep.subr.mxu0 0.0
    %2536 = vmatpush1.msra.mxu0 0.0
    %2537 = vmatprep.subr.mxu0 0.0
    %2538 = vmatpush1.msra.mxu0 0.0
    %2539 = vmatprep.subr.mxu0 0.0
    %2540 = vmatpush1.msra.mxu0 0.0
    %2541 = vmatprep.subr.mxu0 0.0
    %2542 = vmatpush1.msra.mxu0 0.0
    %2543 = vmatprep.subr.mxu0 0.0
    %2544 = vmatpush1.msra.mxu0 0.0
    %2545 = vmatprep.subr.mxu0 0.0
    %2546 = vmatpush1.msra.mxu0 0.0
    %2547 = vmatprep.subr.mxu0 0.0
    %2548 = vmatpush1.msra.mxu0 0.0
    %2549 = vmatprep.subr.mxu0 0.0
    %2550 = vmatpush1.msra.mxu0 0.0
    %2551 = vmatprep.subr.mxu0 0.0
    %2552 = vmatpush1.msra.mxu0 0.0
    %2553 = vmatprep.subr.mxu0 0.0
    %2554 = vmatpush1.msra.mxu0 0.0
    %2555 = vmatprep.subr.mxu0 0.0
    %2556 = vmatpush1.msra.mxu0 0.0
    %2557 = vmatprep.subr.mxu0 0.0
    %2558 = vmatpush1.msra.mxu0 0.0
    %2559 = vmatprep.subr.mxu0 0.0
    %2560 = vmatpush1.msra.mxu0 0.0
    %2561 = vmatprep.mubr.f32.mxu0 0.0
    %2562 = vmatmul.mubr.f32.gmra.mrb[0].mxu0 %v2495
    %v2563 = vpop.f32.mrb[0].mxu0
    %v2564 = vadd.f32 0.0, %v2563
    %v2565 = vpop.f32.mrb[0].mxu0
    %2566 = vdwg.mxu0
    %v2567 = vrot.slane %v2458, 6
    %2568 = vrot.lane.b32.xlu0 %v2567, 64
    %v2569 = vpop.permute.xlu0 %2568
    %v2571 = vadd.f32 %v2564, %v2569
    %v2572 = vxor.u32 %v2571, 2147483648
    %v2573 = vmul.f32 %v2572, 1.442695
    %v2574 = vpow.pop %v2573
    %v2575 = vadd.f32 %v2574, 1.0
    %v2576 = vrcp.pop %v2575
    %v2577 = vmul.f32 1.0, %v2576
    %2578 = vrot.lane.b32.xlu0 %v2567, 48
    %v2579 = vpop.permute.xlu0 %2578
    %v2581 = vadd.f32 %v2564, %v2579
    %2582 = vrot.lane.b32.xlu0 %v2567, 32
    %v2583 = vpop.permute.xlu0 %2582
    %v2585 = vmul.f32 %v2577, %v2583
    %2587 = vrot.lane.b32.xlu0 %v2585, 32
    %v2588 = vpop.permute.xlu0 %2587
    %v2590 = vadd.f32 %v2581, %v2588
    %v2591 = vtanh.pop %v2590
    %v2592 = vsub.f32 %v2303, %v2591
    %2594 = vrot.lane.b32.xlu0 %v2592, 112
    %v2595 = vpop.permute.xlu0 %2594
    %v2597 = vmul.f32 %v2577, %v2595
    %2599 = vrot.lane.b32.xlu0 %v2597, 16
    %v2600 = vpop.permute.xlu0 %2599
    %v2602 = vadd.f32 %v2591, %v2600
    %2604 = vrot.lane.b32.xlu0 %v2602, 96
    %v2605 = vpop.permute.xlu0 %2604
    %2607 = vst.msk [vmem:[#allocation3 + $0xe] sm:$0x3] %vm62, %v2605
    %2608 = vmatprep.subr.mxu0 0.0
    %2609 = vmatpush1.msra.mxu0 %v229
    %2610 = vmatprep.subr.mxu0 0.0
    %2611 = vmatpush1.msra.mxu0 %v230
    %2612 = vmatprep.subr.mxu0 0.0
    %2613 = vmatpush1.msra.mxu0 0.0
    %2614 = vmatprep.subr.mxu0 0.0
    %2615 = vmatpush1.msra.mxu0 0.0
    %2616 = vmatprep.subr.mxu0 0.0
    %2617 = vmatpush1.msra.mxu0 0.0
    %2618 = vmatprep.subr.mxu0 0.0
    %2619 = vmatpush1.msra.mxu0 0.0
    %2620 = vmatprep.subr.mxu0 0.0
    %2621 = vmatpush1.msra.mxu0 0.0
    %2622 = vmatprep.subr.mxu0 0.0
    %2623 = vmatpush1.msra.mxu0 0.0
    %2624 = vmatprep.subr.mxu0 0.0
    %2625 = vmatpush1.msra.mxu0 0.0
    %2626 = vmatprep.subr.mxu0 0.0
    %2627 = vmatpush1.msra.mxu0 0.0
    %2628 = vmatprep.subr.mxu0 0.0
    %2629 = vmatpush1.msra.mxu0 0.0
    %2630 = vmatprep.subr.mxu0 0.0
    %2631 = vmatpush1.msra.mxu0 0.0
    %2632 = vmatprep.subr.mxu0 0.0
    %2633 = vmatpush1.msra.mxu0 0.0
    %2634 = vmatprep.subr.mxu0 0.0
    %2635 = vmatpush1.msra.mxu0 0.0
    %2636 = vmatprep.subr.mxu0 0.0
    %2637 = vmatpush1.msra.mxu0 0.0
    %2638 = vmatprep.subr.mxu0 0.0
    %2639 = vmatpush1.msra.mxu0 0.0
    %2640 = vmatprep.subr.mxu0 0.0
    %2641 = vmatpush1.msra.mxu0 0.0
    %2642 = vmatprep.subr.mxu0 0.0
    %2643 = vmatpush1.msra.mxu0 0.0
    %2644 = vmatprep.subr.mxu0 0.0
    %2645 = vmatpush1.msra.mxu0 0.0
    %2646 = vmatprep.subr.mxu0 0.0
    %2647 = vmatpush1.msra.mxu0 0.0
    %2648 = vmatprep.subr.mxu0 0.0
    %2649 = vmatpush1.msra.mxu0 0.0
    %2650 = vmatprep.subr.mxu0 0.0
    %2651 = vmatpush1.msra.mxu0 0.0
    %2652 = vmatprep.subr.mxu0 0.0
    %2653 = vmatpush1.msra.mxu0 0.0
    %2654 = vmatprep.subr.mxu0 0.0
    %2655 = vmatpush1.msra.mxu0 0.0
    %2656 = vmatprep.subr.mxu0 0.0
    %2657 = vmatpush1.msra.mxu0 0.0
    %2658 = vmatprep.subr.mxu0 0.0
    %2659 = vmatpush1.msra.mxu0 0.0
    %2660 = vmatprep.subr.mxu0 0.0
    %2661 = vmatpush1.msra.mxu0 0.0
    %2662 = vmatprep.subr.mxu0 0.0
    %2663 = vmatpush1.msra.mxu0 0.0
    %2664 = vmatprep.subr.mxu0 0.0
    %2665 = vmatpush1.msra.mxu0 0.0
    %2666 = vmatprep.subr.mxu0 0.0
    %2667 = vmatpush1.msra.mxu0 0.0
    %2668 = vmatprep.subr.mxu0 0.0
    %2669 = vmatpush1.msra.mxu0 0.0
    %2670 = vmatprep.subr.mxu0 0.0
    %2671 = vmatpush1.msra.mxu0 0.0
    %2672 = vmatprep.mubr.f32.mxu0 0.0
    %2673 = vmatmul.mubr.f32.gmra.mrb[0].mxu0 %v2495
    %v2674 = vpop.f32.mrb[0].mxu0
    %v2675 = vadd.f32 0.0, %v2674
    %v2676 = vpop.f32.mrb[0].mxu0
    %2677 = vdwg.mxu0
    %v2678 = vadd.f32 %v226, %v2675
    %v2679 = vsel %vm59, %v2605, 0
    %2681 = vmatprep.subr.mxu0 0.0
    %2682 = vmatpush1.msra.mxu0 %v231
    %2683 = vmatprep.subr.mxu0 0.0
    %2684 = vmatpush1.msra.mxu0 %v232
    %2685 = vmatprep.subr.mxu0 0.0
    %2686 = vmatpush1.msra.mxu0 0.0
    %2687 = vmatprep.subr.mxu0 0.0
    %2688 = vmatpush1.msra.mxu0 0.0
    %2689 = vmatprep.subr.mxu0 0.0
    %2690 = vmatpush1.msra.mxu0 0.0
    %2691 = vmatprep.subr.mxu0 0.0
    %2692 = vmatpush1.msra.mxu0 0.0
    %2693 = vmatprep.subr.mxu0 0.0
    %2694 = vmatpush1.msra.mxu0 0.0
    %2695 = vmatprep.subr.mxu0 0.0
    %2696 = vmatpush1.msra.mxu0 0.0
    %2697 = vmatprep.subr.mxu0 0.0
    %2698 = vmatpush1.msra.mxu0 0.0
    %2699 = vmatprep.subr.mxu0 0.0
    %2700 = vmatpush1.msra.mxu0 0.0
    %2701 = vmatprep.subr.mxu0 0.0
    %2702 = vmatpush1.msra.mxu0 0.0
    %2703 = vmatprep.subr.mxu0 0.0
    %2704 = vmatpush1.msra.mxu0 0.0
    %2705 = vmatprep.subr.mxu0 0.0
    %2706 = vmatpush1.msra.mxu0 0.0
    %2707 = vmatprep.subr.mxu0 0.0
    %2708 = vmatpush1.msra.mxu0 0.0
    %2709 = vmatprep.subr.mxu0 0.0
    %2710 = vmatpush1.msra.mxu0 0.0
    %2711 = vmatprep.subr.mxu0 0.0
    %2712 = vmatpush1.msra.mxu0 0.0
    %2713 = vmatprep.subr.mxu0 0.0
    %2714 = vmatpush1.msra.mxu0 0.0
    %2715 = vmatprep.subr.mxu0 0.0
    %2716 = vmatpush1.msra.mxu0 0.0
    %2717 = vmatprep.subr.mxu0 0.0
    %2718 = vmatpush1.msra.mxu0 0.0
    %2719 = vmatprep.subr.mxu0 0.0
    %2720 = vmatpush1.msra.mxu0 0.0
    %2721 = vmatprep.subr.mxu0 0.0
    %2722 = vmatpush1.msra.mxu0 0.0
    %2723 = vmatprep.subr.mxu0 0.0
    %2724 = vmatpush1.msra.mxu0 0.0
    %2725 = vmatprep.subr.mxu0 0.0
    %2726 = vmatpush1.msra.mxu0 0.0
    %2727 = vmatprep.subr.mxu0 0.0
    %2728 = vmatpush1.msra.mxu0 0.0
    %2729 = vmatprep.subr.mxu0 0.0
    %2730 = vmatpush1.msra.mxu0 0.0
    %2731 = vmatprep.subr.mxu0 0.0
    %2732 = vmatpush1.msra.mxu0 0.0
    %2733 = vmatprep.subr.mxu0 0.0
    %2734 = vmatpush1.msra.mxu0 0.0
    %2735 = vmatprep.subr.mxu0 0.0
    %2736 = vmatpush1.msra.mxu0 0.0
    %2737 = vmatprep.subr.mxu0 0.0
    %2738 = vmatpush1.msra.mxu0 0.0
    %2739 = vmatprep.subr.mxu0 0.0
    %2740 = vmatpush1.msra.mxu0 0.0
    %2741 = vmatprep.subr.mxu0 0.0
    %2742 = vmatpush1.msra.mxu0 0.0
    %2743 = vmatprep.subr.mxu0 0.0
    %2744 = vmatpush1.msra.mxu0 0.0
    %2745 = vmatprep.mubr.f32.mxu0 0.0
    %2746 = vmatmul.mubr.f32.gmra.mrb[0].mxu0 %v2679
    %v2747 = vpop.f32.mrb[0].mxu0
    %v2748 = vadd.f32 0.0, %v2747
    %v2749 = vpop.f32.mrb[0].mxu0
    %2750 = vdwg.mxu0
    %v2751 = vadd.f32 %v2678, %v2748
    %v2752 = vxor.u32 %v2751, 2147483648
    %v2753 = vmul.f32 %v2752, 1.442695
    %v2754 = vpow.pop %v2753
    %v2755 = vadd.f32 %v2754, 1.0
    %v2756 = vrcp.pop %v2755
    %v2757 = vmul.f32 1.0, %v2756
    %2759 = vrot.lane.b32.xlu0 %v2751, 80
    %v2760 = vpop.permute.xlu0 %2759
    %v2762 = vmul.f32 %v2757, %v2760
    %2764 = vrot.lane.b32.xlu0 %v2762, 32
    %v2765 = vpop.permute.xlu0 %2764
    %v2767 = vadd.f32 %v2751, %v2765
    %v2768 = vtanh.pop %v2767
    %v2770 = vrot.slane %v2768, 2
    %v2772 = vsub.f32 %v2490, %v2770
    %v2774 = vrot.slane %v2772, 6
    %2775 = vrot.lane.b32.xlu0 %v2774, 112
    %v2776 = vpop.permute.xlu0 %2775
    %v2778 = vmul.f32 %v2757, %v2776
    %2780 = vrot.lane.b32.xlu0 %v2778, 16
    %v2781 = vpop.permute.xlu0 %2780
    %v2783 = vadd.f32 %v2768, %v2781
    %2785 = vrot.lane.b32.xlu0 %v2783, 96
    %v2786 = vpop.permute.xlu0 %2785
    %v2787 = vsel %vm59, %v2786, 0
    %2789 = vmatprep.subr.mxu0 0.0
    %2790 = vmatpush1.msra.mxu0 %v233
    %2791 = vmatprep.subr.mxu0 0.0
    %2792 = vmatpush1.msra.mxu0 %v234
    %2793 = vmatprep.subr.mxu0 0.0
    %2794 = vmatpush1.msra.mxu0 0.0
    %2795 = vmatprep.subr.mxu0 0.0
    %2796 = vmatpush1.msra.mxu0 0.0
    %2797 = vmatprep.subr.mxu0 0.0
    %2798 = vmatpush1.msra.mxu0 0.0
    %2799 = vmatprep.subr.mxu0 0.0
    %2800 = vmatpush1.msra.mxu0 0.0
    %2801 = vmatprep.subr.mxu0 0.0
    %2802 = vmatpush1.msra.mxu0 0.0
    %2803 = vmatprep.subr.mxu0 0.0
    %2804 = vmatpush1.msra.mxu0 0.0
    %2805 = vmatprep.subr.mxu0 0.0
    %2806 = vmatpush1.msra.mxu0 0.0
    %2807 = vmatprep.subr.mxu0 0.0
    %2808 = vmatpush1.msra.mxu0 0.0
    %2809 = vmatprep.subr.mxu0 0.0
    %2810 = vmatpush1.msra.mxu0 0.0
    %2811 = vmatprep.subr.mxu0 0.0
    %2812 = vmatpush1.msra.mxu0 0.0
    %2813 = vmatprep.subr.mxu0 0.0
    %2814 = vmatpush1.msra.mxu0 0.0
    %2815 = vmatprep.subr.mxu0 0.0
    %2816 = vmatpush1.msra.mxu0 0.0
    %2817 = vmatprep.subr.mxu0 0.0
    %2818 = vmatpush1.msra.mxu0 0.0
    %2819 = vmatprep.subr.mxu0 0.0
    %2820 = vmatpush1.msra.mxu0 0.0
    %2821 = vmatprep.subr.mxu0 0.0
    %2822 = vmatpush1.msra.mxu0 0.0
    %2823 = vmatprep.subr.mxu0 0.0
    %2824 = vmatpush1.msra.mxu0 0.0
    %2825 = vmatprep.subr.mxu0 0.0
    %2826 = vmatpush1.msra.mxu0 0.0
    %2827 = vmatprep.subr.mxu0 0.0
    %2828 = vmatpush1.msra.mxu0 0.0
    %2829 = vmatprep.subr.mxu0 0.0
    %2830 = vmatpush1.msra.mxu0 0.0
    %2831 = vmatprep.subr.mxu0 0.0
    %2832 = vmatpush1.msra.mxu0 0.0
    %2833 = vmatprep.subr.mxu0 0.0
    %2834 = vmatpush1.msra.mxu0 0.0
    %2835 = vmatprep.subr.mxu0 0.0
    %2836 = vmatpush1.msra.mxu0 0.0
    %2837 = vmatprep.subr.mxu0 0.0
    %2838 = vmatpush1.msra.mxu0 0.0
    %2839 = vmatprep.subr.mxu0 0.0
    %2840 = vmatpush1.msra.mxu0 0.0
    %2841 = vmatprep.subr.mxu0 0.0
    %2842 = vmatpush1.msra.mxu0 0.0
    %2843 = vmatprep.subr.mxu0 0.0
    %2844 = vmatpush1.msra.mxu0 0.0
    %2845 = vmatprep.subr.mxu0 0.0
    %2846 = vmatpush1.msra.mxu0 0.0
    %2847 = vmatprep.subr.mxu0 0.0
    %2848 = vmatpush1.msra.mxu0 0.0
    %2849 = vmatprep.subr.mxu0 0.0
    %2850 = vmatpush1.msra.mxu0 0.0
    %2851 = vmatprep.subr.mxu0 0.0
    %2852 = vmatpush1.msra.mxu0 0.0
    %2853 = vmatprep.mubr.f32.mxu0 0.0
    %2854 = vmatmul.mubr.f32.gmra.mrb[0].mxu0 %v2787
    %v2855 = vpop.f32.mrb[0].mxu0
    %v2856 = vadd.f32 0.0, %v2855
    %v2857 = vpop.f32.mrb[0].mxu0
    %2858 = vdwg.mxu0
    %2859 = vrot.lane.b32.xlu0 %v2751, 64
    %v2860 = vpop.permute.xlu0 %2859
    %v2862 = vadd.f32 %v2856, %v2860
    %v2863 = vxor.u32 %v2862, 2147483648
    %v2864 = vmul.f32 %v2863, 1.442695
    %v2865 = vpow.pop %v2864
    %v2866 = vadd.f32 %v2865, 1.0
    %v2867 = vrcp.pop %v2866
    %v2868 = vmul.f32 1.0, %v2867
    %2869 = vrot.lane.b32.xlu0 %v2751, 48
    %v2870 = vpop.permute.xlu0 %2869
    %v2872 = vadd.f32 %v2856, %v2870
    %2873 = vrot.lane.b32.xlu0 %v2751, 32
    %v2874 = vpop.permute.xlu0 %2873
    %v2876 = vmul.f32 %v2868, %v2874
    %2878 = vrot.lane.b32.xlu0 %v2876, 32
    %v2879 = vpop.permute.xlu0 %2878
    %v2881 = vadd.f32 %v2872, %v2879
    %v2882 = vtanh.pop %v2881
    %v2883 = vsub.f32 %v2602, %v2882
    %2885 = vrot.lane.b32.xlu0 %v2883, 112
    %v2886 = vpop.permute.xlu0 %2885
    %v2888 = vmul.f32 %v2868, %v2886
    %2890 = vrot.lane.b32.xlu0 %v2888, 16
    %v2891 = vpop.permute.xlu0 %2890
    %v2893 = vadd.f32 %v2882, %v2891
    %2895 = vrot.lane.b32.xlu0 %v2893, 96
    %v2896 = vpop.permute.xlu0 %2895
    %2898 = vst.msk [vmem:[#allocation3 + $0x10] sm:$0x3] %vm62, %v2896
    %v2899 = vld [vmem:[#allocation3] sm:$0xff]
    %v2900 = vld [vmem:[#allocation3 + $0x8] sm:$0xff]
    %v2901 = vld [vmem:[#allocation3 + $0x10] sm:$0x3]
    %v2902 = vld [vmem:[%s6] sm:$0xff]
    %v2903 = vld [vmem:[%s6 + $0x8] sm:$0xff]
    %v2904 = vld [vmem:[#allocation4] sm:$0x1]
    %v2906 = vlaneseq
    %v2907 = vshrl.u32 %v2906, 7
    %v2908 = vsub.s32 0, %v2907
    %v2909 = vrot.slane %v2904, %v2908
    %v2912 = vsel %vm59, %v2899, 0
    %v2915 = vsel %vm59, %v2900, 0
    %v2918 = vsel %vm59, %v2901, 0
    %2920 = vmatprep.subr.mxu0 0.0
    %2921 = vmatpush1.msra.mxu0 %v2902
    %2922 = vmatprep.subr.mxu0 0.0
    %2923 = vmatpush1.msra.mxu0 %v2903
    %2924 = vmatprep.subr.mxu0 0.0
    %2925 = vmatpush1.msra.mxu0 0.0
    %2926 = vmatprep.subr.mxu0 0.0
    %2927 = vmatpush1.msra.mxu0 0.0
    %2928 = vmatprep.subr.mxu0 0.0
    %2929 = vmatpush1.msra.mxu0 0.0
    %2930 = vmatprep.subr.mxu0 0.0
    %2931 = vmatpush1.msra.mxu0 0.0
    %2932 = vmatprep.subr.mxu0 0.0
    %2933 = vmatpush1.msra.mxu0 0.0
    %2934 = vmatprep.subr.mxu0 0.0
    %2935 = vmatpush1.msra.mxu0 0.0
    %2936 = vmatprep.subr.mxu0 0.0
    %2937 = vmatpush1.msra.mxu0 0.0
    %2938 = vmatprep.subr.mxu0 0.0
    %2939 = vmatpush1.msra.mxu0 0.0
    %2940 = vmatprep.subr.mxu0 0.0
    %2941 = vmatpush1.msra.mxu0 0.0
    %2942 = vmatprep.subr.mxu0 0.0
    %2943 = vmatpush1.msra.mxu0 0.0
    %2944 = vmatprep.subr.mxu0 0.0
    %2945 = vmatpush1.msra.mxu0 0.0
    %2946 = vmatprep.subr.mxu0 0.0
    %2947 = vmatpush1.msra.mxu0 0.0
    %2948 = vmatprep.subr.mxu0 0.0
    %2949 = vmatpush1.msra.mxu0 0.0
    %2950 = vmatprep.subr.mxu0 0.0
    %2951 = vmatpush1.msra.mxu0 0.0
    %2952 = vmatprep.subr.mxu0 0.0
    %2953 = vmatpush1.msra.mxu0 0.0
    %2954 = vmatprep.subr.mxu0 0.0
    %2955 = vmatpush1.msra.mxu0 0.0
    %2956 = vmatprep.subr.mxu0 0.0
    %2957 = vmatpush1.msra.mxu0 0.0
    %2958 = vmatprep.subr.mxu0 0.0
    %2959 = vmatpush1.msra.mxu0 0.0
    %2960 = vmatprep.subr.mxu0 0.0
    %2961 = vmatpush1.msra.mxu0 0.0
    %2962 = vmatprep.subr.mxu0 0.0
    %2963 = vmatpush1.msra.mxu0 0.0
    %2964 = vmatprep.subr.mxu0 0.0
    %2965 = vmatpush1.msra.mxu0 0.0
    %2966 = vmatprep.subr.mxu0 0.0
    %2967 = vmatpush1.msra.mxu0 0.0
    %2968 = vmatprep.subr.mxu0 0.0
    %2969 = vmatpush1.msra.mxu0 0.0
    %2970 = vmatprep.subr.mxu0 0.0
    %2971 = vmatpush1.msra.mxu0 0.0
    %2972 = vmatprep.subr.mxu0 0.0
    %2973 = vmatpush1.msra.mxu0 0.0
    %2974 = vmatprep.subr.mxu0 0.0
    %2975 = vmatpush1.msra.mxu0 0.0
    %2976 = vmatprep.subr.mxu0 0.0
    %2977 = vmatpush1.msra.mxu0 0.0
    %2978 = vmatprep.subr.mxu0 0.0
    %2979 = vmatpush1.msra.mxu0 0.0
    %2980 = vmatprep.subr.mxu0 0.0
    %2981 = vmatpush1.msra.mxu0 0.0
    %2982 = vmatprep.subr.mxu0 0.0
    %2983 = vmatpush1.msra.mxu0 0.0
    %2984 = vmatprep.mubr.f32.mxu0 0.0
    %2985 = vmatmul.mubr.f32.gmra.mrb[0].mxu0 %v2912
    %v2986 = vpop.f32.mrb[0].mxu0
    %v2987 = vadd.f32 %v2909, %v2986
    %v2988 = vpop.f32.mrb[0].mxu0
    %2989 = vmatprep.mubr.f32.mxu0 0.0
    %2990 = vmatmul.mubr.f32.gmra.mrb[0].mxu0 %v2915
    %v2991 = vpop.f32.mrb[0].mxu0
    %v2992 = vadd.f32 %v2909, %v2991
    %v2993 = vpop.f32.mrb[0].mxu0
    %2994 = vmatprep.mubr.f32.mxu0 0.0
    %2995 = vmatmul.mubr.f32.gmra.mrb[0].mxu0 %v2918
    %v2996 = vpop.f32.mrb[0].mxu0
    %v2997 = vadd.f32 %v2909, %v2996
    %v2998 = vpop.f32.mrb[0].mxu0
    %2999 = vdwg.mxu0
    %v3000 = vmax.f32 %v2987, 0.0
    %v3001 = vmax.f32 %v2992, 0.0
    %v3002 = vmax.f32 %v2997, 0.0
    %v3003 = vld [vmem:[%s8] sm:$0xff]
    %v3004 = vld [vmem:[#allocation6] sm:$0x1]
    %v3006 = vlaneseq
    %v3007 = vshrl.u32 %v3006, 7
    %v3008 = vsub.s32 0, %v3007
    %v3009 = vrot.slane %v3004, %v3008
    %vm3011 = vcmask 64512
    %v3013 = vsel %vm3011, %v3000, 0
    %v3016 = vsel %vm3011, %v3001, 0
    %v3019 = vsel %vm3011, %v3002, 0
    %3021 = vmatprep.subr.mxu0 0.0
    %3022 = vmatpush1.msra.mxu0 %v3003
    %3023 = vmatprep.subr.mxu0 0.0
    %3024 = vmatpush1.msra.mxu0 0.0
    %3025 = vmatprep.subr.mxu0 0.0
    %3026 = vmatpush1.msra.mxu0 0.0
    %3027 = vmatprep.subr.mxu0 0.0
    %3028 = vmatpush1.msra.mxu0 0.0
    %3029 = vmatprep.subr.mxu0 0.0
    %3030 = vmatpush1.msra.mxu0 0.0
    %3031 = vmatprep.subr.mxu0 0.0
    %3032 = vmatpush1.msra.mxu0 0.0
    %3033 = vmatprep.subr.mxu0 0.0
    %3034 = vmatpush1.msra.mxu0 0.0
    %3035 = vmatprep.subr.mxu0 0.0
    %3036 = vmatpush1.msra.mxu0 0.0
    %3037 = vmatprep.subr.mxu0 0.0
    %3038 = vmatpush1.msra.mxu0 0.0
    %3039 = vmatprep.subr.mxu0 0.0
    %3040 = vmatpush1.msra.mxu0 0.0
    %3041 = vmatprep.subr.mxu0 0.0
    %3042 = vmatpush1.msra.mxu0 0.0
    %3043 = vmatprep.subr.mxu0 0.0
    %3044 = vmatpush1.msra.mxu0 0.0
    %3045 = vmatprep.subr.mxu0 0.0
    %3046 = vmatpush1.msra.mxu0 0.0
    %3047 = vmatprep.subr.mxu0 0.0
    %3048 = vmatpush1.msra.mxu0 0.0
    %3049 = vmatprep.subr.mxu0 0.0
    %3050 = vmatpush1.msra.mxu0 0.0
    %3051 = vmatprep.subr.mxu0 0.0
    %3052 = vmatpush1.msra.mxu0 0.0
    %3053 = vmatprep.subr.mxu0 0.0
    %3054 = vmatpush1.msra.mxu0 0.0
    %3055 = vmatprep.subr.mxu0 0.0
    %3056 = vmatpush1.msra.mxu0 0.0
    %3057 = vmatprep.subr.mxu0 0.0
    %3058 = vmatpush1.msra.mxu0 0.0
    %3059 = vmatprep.subr.mxu0 0.0
    %3060 = vmatpush1.msra.mxu0 0.0
    %3061 = vmatprep.subr.mxu0 0.0
    %3062 = vmatpush1.msra.mxu0 0.0
    %3063 = vmatprep.subr.mxu0 0.0
    %3064 = vmatpush1.msra.mxu0 0.0
    %3065 = vmatprep.subr.mxu0 0.0
    %3066 = vmatpush1.msra.mxu0 0.0
    %3067 = vmatprep.subr.mxu0 0.0
    %3068 = vmatpush1.msra.mxu0 0.0
    %3069 = vmatprep.subr.mxu0 0.0
    %3070 = vmatpush1.msra.mxu0 0.0
    %3071 = vmatprep.subr.mxu0 0.0
    %3072 = vmatpush1.msra.mxu0 0.0
    %3073 = vmatprep.subr.mxu0 0.0
    %3074 = vmatpush1.msra.mxu0 0.0
    %3075 = vmatprep.subr.mxu0 0.0
    %3076 = vmatpush1.msra.mxu0 0.0
    %3077 = vmatprep.subr.mxu0 0.0
    %3078 = vmatpush1.msra.mxu0 0.0
    %3079 = vmatprep.subr.mxu0 0.0
    %3080 = vmatpush1.msra.mxu0 0.0
    %3081 = vmatprep.subr.mxu0 0.0
    %3082 = vmatpush1.msra.mxu0 0.0
    %3083 = vmatprep.subr.mxu0 0.0
    %3084 = vmatpush1.msra.mxu0 0.0
    %3085 = vmatprep.mubr.f32.mxu0 0.0
    %3086 = vmatmul.mubr.f32.gmra.mrb[0].mxu0 %v3013
    %v3087 = vpop.f32.mrb[0].mxu0
    %v3088 = vadd.f32 %v3009, %v3087
    %v3089 = vpop.f32.mrb[0].mxu0
    %3090 = vmatprep.mubr.f32.mxu0 0.0
    %3091 = vmatmul.mubr.f32.gmra.mrb[0].mxu0 %v3016
    %v3092 = vpop.f32.mrb[0].mxu0
    %v3093 = vadd.f32 %v3009, %v3092
    %v3094 = vpop.f32.mrb[0].mxu0
    %3095 = vmatprep.mubr.f32.mxu0 0.0
    %3096 = vmatmul.mubr.f32.gmra.mrb[0].mxu0 %v3019
    %v3097 = vpop.f32.mrb[0].mxu0
    %v3098 = vadd.f32 %v3009, %v3097
    %v3099 = vpop.f32.mrb[0].mxu0
    %3100 = vdwg.mxu0
    %vm3101 = vcmask 56320
    %3102 = vst.msk [vmem:[%s10] sm:$0xff] %vm3101, %v3088
    %3103 = vst.msk [vmem:[%s10 + $0x8] sm:$0xff] %vm3101, %v3093
    %vm3104 = vcmask 50176
    %3105 = vst.msk [vmem:[%s10 + $0x10] sm:$0x3] %vm3104, %v3098
    // Predicated region
    $region50: #{refine_gru_forward.1} parent=1 // pred_check
      _
    $region51: #{refine_gru_forward.1} parent=1 // pred_check_branch
      %3107 = sbr.rel (0) target = $region53
    $region52: #{refine_gru_forward.1} parent=1 // pred_region
      _
    $region53: #{refine_gru_forward.1} parent=1 // pred_fallthru
      _
    // Predicated region
    $region54: #{refine_gru_forward.1} parent=1 // pred_check
      _
    $region55: #{refine_gru_forward.1} parent=1 // pred_check_branch
      %3109 = sbr.rel (0) target = $region57
    $region56: #{refine_gru_forward.1} parent=1 // pred_region
      _
    $region57: #{refine_gru_forward.1} parent=1 // pred_fallthru
      _
    %3110 = vsyncpa [#allocation5], 1
    %3111 = vsyncpa [#allocation7], 1

</llo_original>
